<compile_context>
chip_gen: v7x
topology: tpu7x:2x2x1
jax: 0.10.0
libtpu: 0.0.40
codegen_flags: <defaults>
</compile_context>

<pallas_src>
import functools

import jax
import jax.numpy as jnp
from jax import lax
from jax.experimental import pallas as pl
from jax.experimental.pallas import tpu as pltpu

EPS = 1e-5
_VMEM_LIMIT_BYTES = 32 * 1024 * 1024  # valid on v5e/v6e/v7x, well under 64 MiB


def _compiler_params(n_grid_axes):
    return pltpu.CompilerParams(
        dimension_semantics=("parallel",) * n_grid_axes,
        vmem_limit_bytes=_VMEM_LIMIT_BYTES,
    )


def _conv2_rows(H, W):
    """Row-padded flat buffer geometry for the 3x3 conv.

    `base` (first interior row) is 16-aligned so bf16 interior stores are
    packed-tile aligned; `W` halo rows above (read by dy=0 taps) and `W` halo
    rows below (read by dy=2 taps) are kept zero."""
    base = max(16, ((W + 15) // 16) * 16)
    return base, base + H * W + W


def _col_sums(h):
    """Per-channel [sum | sum_of_squares] of an (R, C) f32 tile as (1, 2C).

    Done as (1,R)@(R,C) matmuls so the BN reduction rides the MXU instead of
    the VPU/XLU; variance is finalized as E[x^2]-E[x]^2 in the wrapper."""
    ones = jnp.ones((1, h.shape[0]), jnp.float32)
    ssum = jnp.dot(ones, h, preferred_element_type=jnp.float32)
    ssq = jnp.dot(ones, h * h, preferred_element_type=jnp.float32)
    return jnp.concatenate([ssum, ssq], axis=1)


# ---------------------------------------------------------------------------
# Kernels
# ---------------------------------------------------------------------------
def _conv1_kernel(x_ref, w1_ref, h1_ref, st_ref):
    # conv1 (1x1) as a matmul; MXU-dtype inputs, f32 accumulation.
    x = x_ref[...].astype(w1_ref.dtype)
    h = jnp.dot(x, w1_ref[...], preferred_element_type=jnp.float32)
    st_ref[...] = _col_sums(h).reshape(1, 1, 2 * h.shape[1])   # stats from f32
    h1_ref[...] = h.astype(h1_ref.dtype)                       # then downcast


def _conv2_kernel(h1_ref, s1_ref, t1_ref, w2_ref, h2_ref, st_ref, buf_ref, *, H, W):
    # BN1 (precomputed affine) + ReLU + conv2 (3x3, stride 1, pad 1) per image.
    HW, P = h1_ref.shape
    base, R = _conv2_rows(H, W)
    cdt = w2_ref.dtype

    # BN + ReLU in f32 (VPU); only the matmul inputs drop to the MXU dtype.
    y = jnp.maximum(h1_ref[...].astype(jnp.float32) * s1_ref[...] + t1_ref[...], 0.0)

    # Column (W) padding is realized by pre-masked copies per dx:
    #   dx=0 taps must never see column W-1 of the previous image row,
    #   dx=2 taps must never see column 0 of the next image row.
    col = lax.broadcasted_iota(jnp.int32, (HW, 1), 0) % W
    v0 = jnp.where(col == W - 1, 0.0, y)      # dx = 0 (left) taps
    v2 = jnp.where(col == 0, 0.0, y)          # dx = 2 (right) taps

    # K-packing: channel group g of the buffer holds variant_g shifted by
    # (g-1) flat rows, so a single contiguous (HW, 3P) slice per dy feeds one
    # (HW,3P)@(3P,P) matmul.  The shift is baked into the *values* so every
    # store stays 16-row aligned.
    zrow = jnp.zeros((1, P), jnp.float32)
    s0 = jnp.concatenate([zrow, v0[:HW - 1, :]], axis=0)   # s0[q] = v0[q-1]
    s2 = jnp.concatenate([v2[1:, :], zrow], axis=0)        # s2[q] = v2[q+1]

    # Zero only the halo rows, write each interior group exactly once.
    buf_ref[0:base, :] = jnp.zeros((base, 3 * P), cdt)
    buf_ref[base + HW:R, :] = jnp.zeros((R - base - HW, 3 * P), cdt)
    buf_ref[base:base + HW, 0:P] = s0.astype(cdt)
    buf_ref[base:base + HW, P:2 * P] = y.astype(cdt)
    buf_ref[base:base + HW, 2 * P:3 * P] = s2.astype(cdt)

    # 3 MXU matmuls with K = 3P, accumulated as an f32 value (no ref RMW).
    acc = None
    for dy in range(3):
        start = base + (dy - 1) * W
        contrib = jnp.dot(buf_ref[start:start + HW, :], w2_ref[dy],
                          preferred_element_type=jnp.float32)
        acc = contrib if acc is None else acc + contrib

    st_ref[...] = _col_sums(acc).reshape(1, 1, 2 * P)   # stats from f32 acc
    h2_ref[...] = acc.astype(h2_ref.dtype)              # then downcast


def _conv3_stats_kernel(h2_ref, s2_ref, t2_ref, w3_ref, st_ref, *,
                        row_tile, rtot_valid, need_mask):
    # Stats-only pass: BN2 affine + ReLU, conv3 (1x1), emit BN3 partial sums.
    # h3 itself is NOT written to HBM (recomputed fused into the final pass).
    y = jnp.maximum(h2_ref[...].astype(jnp.float32) * s2_ref[...] + t2_ref[...], 0.0)
    if need_mask:
        # Padding rows of h2 are unwritten garbage; zero them before the
        # matmul so they contribute nothing to the BN3 statistics.
        row = (pl.program_id(0) * row_tile
               + lax.broadcasted_iota(jnp.int32, (row_tile, 1), 0))
        y = jnp.where(row < rtot_valid, y, 0.0)
    h = jnp.dot(y.astype(w3_ref.dtype), w3_ref[...],
                preferred_element_type=jnp.float32)
    st_ref[...] = _col_sums(h).reshape(1, 1, 2 * h.shape[1])


def _conv3_residual_kernel(h2_ref, s2_ref, t2_ref, w3_ref, s3_ref, t3_ref,
                           x_ref, o_ref):
    # Fused: BN2 affine + ReLU -> conv3 (1x1) -> BN3 affine + residual + ReLU.
    y = jnp.maximum(h2_ref[...].astype(jnp.float32) * s2_ref[...] + t2_ref[...], 0.0)
    h = jnp.dot(y.astype(w3_ref.dtype), w3_ref[...],
                preferred_element_type=jnp.float32)
    o_ref[...] = jnp.maximum(h * s3_ref[...] + t3_ref[...] + x_ref[...], 0.0)


# ---------------------------------------------------------------------------
# Wrapper
# ---------------------------------------------------------------------------
def _finalize_affine(partial_stats, count, gamma, beta):
    """(blocks, 1, 2C) partial [sum|sum_sq] -> per-channel BN scale/shift."""
    C = partial_stats.shape[-1] // 2
    s = jnp.sum(partial_stats[:, 0, :C], axis=0)
    sq = jnp.sum(partial_stats[:, 0, C:], axis=0)
    mean = s / count
    # Single-pass E[x^2]-E[x]^2; clamped at 0 (documented bf16-level concern).
    var = jnp.maximum(sq / count - mean * mean, 0.0)
    scale = gamma.reshape(1, -1) * lax.rsqrt(var + EPS)[None, :]
    shift = beta.reshape(1, -1) - mean[None, :] * scale
    return scale, shift


@functools.partial(jax.jit, static_argnames=("mxu_dtype", "row_tile"))
def bottleneck_forward(x, params, *, mxu_dtype=jnp.bfloat16, row_tile=None):
    """NHWC Bottleneck forward (stride=1, downsample=None), training-mode BN."""
    N, H, W, Cin = x.shape
    P = params["w1"].shape[1]
    assert Cin == 4 * P, "no downsample: inplanes must equal planes*expansion"
    assert W >= 2, "degenerate spatial width"
    HW = H * W
    act_dtype = jnp.dtype(mxu_dtype)
    sub = 16 if act_dtype == jnp.dtype(jnp.bfloat16) else 8
    assert HW % sub == 0, "H*W must be sublane-pack aligned for the act dtype"

    RTOT = N * HW
    if row_tile is None:
        row_tile = min(1024, ((RTOT + 15) // 16) * 16)
    assert row_tile % 16 == 0, "row_tile must be a multiple of 16"
    nb = -(-RTOT // row_tile)                 # cdiv; no exact-divisor needed
    RTOT_PAD = nb * row_tile
    pad_rows = RTOT_PAD - RTOT

    f32 = jnp.float32
    xf = x.reshape(RTOT, Cin)
    if xf.dtype != f32:
        xf = xf.astype(f32)
    if pad_rows:
        xf = jnp.pad(xf, ((0, pad_rows), (0, 0)))   # zero rows: inert in BN1

    w1 = params["w1"].astype(mxu_dtype)
    # (9, P, P) [ky*3+kx, ci, co] -> (3, 3P, P) [ky, kx*P+ci, co] for K-packing.
    w2 = params["w2"].reshape(3, 3, P, P).reshape(3, 3 * P, P).astype(mxu_dtype)
    w3 = params["w3"].astype(mxu_dtype)
    itm = jnp.dtype(mxu_dtype).itemsize

    # ---- pass 1: conv1 (1x1) + BN1 partial stats --------------------------
    h1, st1 = pl.pallas_call(
        _conv1_kernel,
        grid=(nb,),
        in_specs=[pl.BlockSpec((row_tile, Cin), lambda i: (i, 0)),
                  pl.BlockSpec((Cin, P), lambda i: (0, 0))],
        out_specs=[pl.BlockSpec((row_tile, P), lambda i: (i, 0)),
                   pl.BlockSpec((1, 1, 2 * P), lambda i: (i, 0, 0))],
        out_shape=[jax.ShapeDtypeStruct((RTOT_PAD, P), act_dtype),
                   jax.ShapeDtypeStruct((nb, 1, 2 * P), f32)],
        compiler_params=_compiler_params(1),
        cost_estimate=pl.CostEstimate(
            flops=2 * RTOT_PAD * Cin * P + 6 * RTOT_PAD * P,
            transcendentals=0,
            bytes_accessed=4 * RTOT_PAD * Cin + itm * Cin * P
            + itm * RTOT_PAD * P + 4 * nb * 2 * P),
    )(xf, w1)
    scale1, shift1 = _finalize_affine(st1, RTOT, params["g1"], params["b1"])

    # ---- pass 2: BN1 + ReLU -> conv2 (3x3, K-packed) + BN2 partial stats ---
    base, R = _conv2_rows(H, W)
    h2, st2 = pl.pallas_call(
        functools.partial(_conv2_kernel, H=H, W=W),
        grid=(N,),
        in_specs=[pl.BlockSpec((HW, P), lambda n: (n, 0)),
                  pl.BlockSpec((1, P), lambda n: (0, 0)),
                  pl.BlockSpec((1, P), lambda n: (0, 0)),
                  pl.BlockSpec((3, 3 * P, P), lambda n: (0, 0, 0))],
        out_specs=[pl.BlockSpec((HW, P), lambda n: (n, 0)),
                   pl.BlockSpec((1, 1, 2 * P), lambda n: (n, 0, 0))],
        out_shape=[jax.ShapeDtypeStruct((RTOT_PAD, P), act_dtype),
                   jax.ShapeDtypeStruct((N, 1, 2 * P), f32)],
        scratch_shapes=[pltpu.VMEM((R, 3 * P), act_dtype)],
        compiler_params=_compiler_params(1),
        cost_estimate=pl.CostEstimate(
            flops=18 * RTOT * P * P + 12 * RTOT * P,
            transcendentals=0,
            bytes_accessed=2 * itm * RTOT * P + itm * 9 * P * P + 4 * N * 2 * P),
    )(h1, scale1, shift1, w2)
    scale2, shift2 = _finalize_affine(st2, RTOT, params["g2"], params["b2"])

    # ---- pass 3: stats-only (BN2 + ReLU -> conv3 -> BN3 partial sums) ------
    st3 = pl.pallas_call(
        functools.partial(_conv3_stats_kernel, row_tile=row_tile,
                          rtot_valid=RTOT, need_mask=(pad_rows > 0)),
        grid=(nb,),
        in_specs=[pl.BlockSpec((row_tile, P), lambda i: (i, 0)),
                  pl.BlockSpec((1, P), lambda i: (0, 0)),
                  pl.BlockSpec((1, P), lambda i: (0, 0)),
                  pl.BlockSpec((P, Cin), lambda i: (0, 0))],
        out_specs=pl.BlockSpec((1, 1, 2 * Cin), lambda i: (i, 0, 0)),
        out_shape=jax.ShapeDtypeStruct((nb, 1, 2 * Cin), f32),
        compiler_params=_compiler_params(1),
        cost_estimate=pl.CostEstimate(
            flops=2 * RTOT_PAD * P * Cin + 8 * RTOT_PAD * Cin,
            transcendentals=0,
            bytes_accessed=itm * RTOT_PAD * P + itm * P * Cin + 4 * nb * 2 * Cin),
    )(h2, scale2, shift2, w3)
    scale3, shift3 = _finalize_affine(st3, RTOT, params["g3"], params["b3"])

    # ---- pass 4: fused conv3 recompute + BN3 + residual add + ReLU ---------
    out = pl.pallas_call(
        _conv3_residual_kernel,
        grid=(nb,),
        in_specs=[pl.BlockSpec((row_tile, P), lambda i: (i, 0)),
                  pl.BlockSpec((1, P), lambda i: (0, 0)),
                  pl.BlockSpec((1, P), lambda i: (0, 0)),
                  pl.BlockSpec((P, Cin), lambda i: (0, 0)),
                  pl.BlockSpec((1, Cin), lambda i: (0, 0)),
                  pl.BlockSpec((1, Cin), lambda i: (0, 0)),
                  pl.BlockSpec((row_tile, Cin), lambda i: (i, 0))],
        out_specs=pl.BlockSpec((row_tile, Cin), lambda i: (i, 0)),
        out_shape=jax.ShapeDtypeStruct((RTOT_PAD, Cin), f32),
        compiler_params=_compiler_params(1),
        cost_estimate=pl.CostEstimate(
            flops=2 * RTOT_PAD * P * Cin + 8 * RTOT_PAD * Cin,
            transcendentals=0,
            bytes_accessed=itm * RTOT_PAD * P + itm * P * Cin
            + 8 * RTOT_PAD * Cin),
    )(h2, scale2, shift2, w3, scale3, shift3, xf)

    return out[:RTOT].reshape(N, H, W, Cin)


# ---------------------------------------------------------------------------
# Pure-JAX reference (NHWC convs, training-mode BN) for correctness checking.
# ---------------------------------------------------------------------------
def _bn_ref(h, gamma, beta):
    mu = jnp.mean(h, axis=(0, 1, 2), keepdims=True)
    var = jnp.mean((h - mu) ** 2, axis=(0, 1, 2), keepdims=True)
    return (h - mu) * lax.rsqrt(var + EPS) * gamma.reshape(1, 1, 1, -1) \
        + beta.reshape(1, 1, 1, -1)


def bottleneck_reference(x, params):
    Cin = x.shape[-1]
    P = params["w1"].shape[1]
    dn = ("NHWC", "HWIO", "NHWC")
    w1 = params["w1"].reshape(1, 1, Cin, P)
    w2 = params["w2"].reshape(3, 3, P, P)
    w3 = params["w3"].reshape(1, 1, P, 4 * P)

    h = lax.conv_general_dilated(x, w1, (1, 1), "VALID", dimension_numbers=dn)
    h = jnp.maximum(_bn_ref(h, params["g1"], params["b1"]), 0.0)
    h = lax.conv_general_dilated(h, w2, (1, 1), ((1, 1), (1, 1)),
                                 dimension_numbers=dn)
    h = jnp.maximum(_bn_ref(h, params["g2"], params["b2"]), 0.0)
    h = lax.conv_general_dilated(h, w3, (1, 1), "VALID", dimension_numbers=dn)
    h = _bn_ref(h, params["g3"], params["b3"])
    return jnp.maximum(h + x, 0.0)


if __name__ == "__main__":
    # Small but MXU-friendly shapes: planes=32 -> Cin = 4*planes = 128 (lane
    # dense on the 1x1 convs), batch=2, spatial 8x8.  row_tile=64 gives two
    # row blocks so the cross-block BN-stat path is exercised; row_tile=48
    # exercises the non-divisor / zero-padded row path.
    N, H, W = 2, 8, 8
    P = 32
    Cin = 4 * P

    key = jax.random.PRNGKey(0)
    keys = jax.random.split(key, 10)

    x = jax.random.normal(keys[0], (N, H, W, Cin), dtype=jnp.float32)
    params = {
        "w1": 0.1 * jax.random.normal(keys[1], (Cin, P), jnp.float32),
        "g1": 1.0 + 0.1 * jax.random.normal(keys[2], (1, P), jnp.float32),
        "b1": 0.1 * jax.random.normal(keys[3], (1, P), jnp.float32),
        "w2": 0.1 * jax.random.normal(keys[4], (9, P, P), jnp.float32),
        "g2": 1.0 + 0.1 * jax.random.normal(keys[5], (1, P), jnp.float32),
        "b2": 0.1 * jax.random.normal(keys[6], (1, P), jnp.float32),
        "w3": 0.1 * jax.random.normal(keys[7], (P, 4 * P), jnp.float32),
        "g3": 1.0 + 0.1 * jax.random.normal(keys[8], (1, 4 * P), jnp.float32),
        "b3": 0.1 * jax.random.normal(keys[9], (1, 4 * P), jnp.float32),
    }

    ref = jax.block_until_ready(bottleneck_reference(x, params))

    # 1) f32-at-MXU run: validates the tiled/split/fused structure exactly.
    out_f32 = jax.block_until_ready(
        bottleneck_forward(x, params, mxu_dtype=jnp.float32, row_tile=64))
    assert out_f32.shape == (N, H, W, Cin), out_f32.shape
    if not jnp.allclose(out_f32, ref, atol=1e-3, rtol=1e-3):
        max_err = float(jnp.max(jnp.abs(out_f32 - ref)))
        raise AssertionError(f"f32 mismatch vs reference, max abs err = {max_err}")

    # 2) f32 run with a non-divisor row tile (exercises the padding + masked
    #    BN3-stats path).
    out_pad = jax.block_until_ready(
        bottleneck_forward(x, params, mxu_dtype=jnp.float32, row_tile=48))
    if not jnp.allclose(out_pad, ref, atol=1e-3, rtol=1e-3):
        max_err = float(jnp.max(jnp.abs(out_pad - ref)))
        raise AssertionError(f"padded-tile mismatch vs reference, max abs err = {max_err}")

    # 3) bf16-at-MXU run (production config): looser tolerance reflects the
    #    deliberate bf16-activation / f32-accumulate precision trade-off.
    out_bf16 = jax.block_until_ready(
        bottleneck_forward(x, params, mxu_dtype=jnp.bfloat16, row_tile=64))
    if not jnp.allclose(out_bf16, ref, atol=1e-1, rtol=1e-1):
        max_err = float(jnp.max(jnp.abs(out_bf16 - ref)))
        raise AssertionError(f"bf16 mismatch vs reference, max abs err = {max_err}")

    print("KERNEL_OK")
</pallas_src>

<mosaic_0001>
module attributes {stable_mosaic.version = 11 : i64} {
  func.func @_conv1_kernel(%arg0: i32, %arg1: memref<64x128xf32, #tpu.memory_space<vmem>>, %arg2: memref<128x32xf32, #tpu.memory_space<vmem>>, %arg3: memref<64x32xf32, #tpu.memory_space<vmem>>, %arg4: memref<1x1x64xf32, #tpu.memory_space<vmem>>) attributes {dimension_semantics = [#tpu.dimension_semantics<parallel>], iteration_bounds = array<i64: 2>, scalar_prefetch = 0 : i64, scratch_operands = 0 : i64, tpu.core_type = #tpu.core_type<tc>, window_params = [{transform_indices = @transform_0, window_bounds = array<i64: 64, 128>}, {pipeline_mode = #tpu.pipeline_mode<synchronous>, transform_indices = @transform_1, window_bounds = array<i64: 128, 32>}, {transform_indices = @transform_2, window_bounds = array<i64: 64, 32>}, {transform_indices = @transform_3, window_bounds = array<i64: 1, 1, 64>}]} {
    %c0 = arith.constant 0 : index
    %c0_0 = arith.constant 0 : index
    %0 = vector.load %arg1[%c0, %c0_0] : memref<64x128xf32, #tpu.memory_space<vmem>>, vector<64x128xf32>
    %c0_1 = arith.constant 0 : index
    %c0_2 = arith.constant 0 : index
    %1 = vector.load %arg2[%c0_1, %c0_2] : memref<128x32xf32, #tpu.memory_space<vmem>>, vector<128x32xf32>
    %cst = arith.constant dense<0.000000e+00> : vector<64x32xf32>
    %2 = tpu.matmul %0, %1, %cst {dimension_numbers = #tpu.dot_dimension_numbers<[1], [0], [0], [1], [0, 0, 1, 1], [], []>} : vector<64x128xf32>, vector<128x32xf32>, vector<64x32xf32> -> vector<64x32xf32>
    %cst_3 = arith.constant 1.000000e+00 : f32
    %3 = vector.broadcast %cst_3 : f32 to vector<1x64xf32>
    %cst_4 = arith.constant dense<0.000000e+00> : vector<1x32xf32>
    %4 = tpu.matmul %3, %2, %cst_4 {dimension_numbers = #tpu.dot_dimension_numbers<[1], [0], [0], [1], [0, 0, 1, 1], [], []>} : vector<1x64xf32>, vector<64x32xf32>, vector<1x32xf32> -> vector<1x32xf32>
    %5 = arith.mulf %2, %2 : vector<64x32xf32>
    %cst_5 = arith.constant dense<0.000000e+00> : vector<1x32xf32>
    %6 = tpu.matmul %3, %5, %cst_5 {dimension_numbers = #tpu.dot_dimension_numbers<[1], [0], [0], [1], [0, 0, 1, 1], [], []>} : vector<1x64xf32>, vector<64x32xf32>, vector<1x32xf32> -> vector<1x32xf32>
    %7 = tpu.concatenate %4, %6 in 1 : vector<1x32xf32>, vector<1x32xf32> -> vector<1x64xf32>
    %8 = vector.shape_cast %7 : vector<1x64xf32> to vector<1x1x64xf32>
    %c0_6 = arith.constant 0 : index
    %c0_7 = arith.constant 0 : index
    %c0_8 = arith.constant 0 : index
    %9 = vector.load %arg4[%c0_6, %c0_7, %c0_8] : memref<1x1x64xf32, #tpu.memory_space<vmem>>, vector<1x1x64xf32>
    tpu.vector_store %arg4[%c0_6, %c0_7, %c0_8], %8 {strides = array<i32>} : memref<1x1x64xf32, #tpu.memory_space<vmem>>, vector<1x1x64xf32>,
    %c0_9 = arith.constant 0 : index
    %c0_10 = arith.constant 0 : index
    %10 = vector.load %arg3[%c0_9, %c0_10] : memref<64x32xf32, #tpu.memory_space<vmem>>, vector<64x32xf32>
    tpu.vector_store %arg3[%c0_9, %c0_10], %2 {strides = array<i32>} : memref<64x32xf32, #tpu.memory_space<vmem>>, vector<64x32xf32>,
    return
  }
  func.func @transform_0(%arg0: i32) -> (i32, i32) {
    %c0_i32 = arith.constant 0 : i32
    %c0_i32_0 = arith.constant 0 : i32
    return %arg0, %c0_i32 : i32, i32
  }
  func.func @transform_1(%arg0: i32) -> (i32, i32) {
    %c0_i32 = arith.constant 0 : i32
    %c0_i32_0 = arith.constant 0 : i32
    %c0_i32_1 = arith.constant 0 : i32
    return %c0_i32, %c0_i32_0 : i32, i32
  }
  func.func @transform_2(%arg0: i32) -> (i32, i32) {
    %c0_i32 = arith.constant 0 : i32
    %c0_i32_0 = arith.constant 0 : i32
    return %arg0, %c0_i32 : i32, i32
  }
  func.func @transform_3(%arg0: i32) -> (i32, i32, i32) {
    %c0_i32 = arith.constant 0 : i32
    %c0_i32_0 = arith.constant 0 : i32
    %c0_i32_1 = arith.constant 0 : i32
    return %arg0, %c0_i32, %c0_i32_0 : i32, i32, i32
  }
}

module attributes {stable_mosaic.version = 11 : i64} {
  func.func @_conv3_stats_kernel(%arg0: i32, %arg1: memref<64x32xf32, #tpu.memory_space<vmem>>, %arg2: memref<1x32xf32, #tpu.memory_space<vmem>>, %arg3: memref<1x32xf32, #tpu.memory_space<vmem>>, %arg4: memref<32x128xf32, #tpu.memory_space<vmem>>, %arg5: memref<1x1x256xf32, #tpu.memory_space<vmem>>) attributes {dimension_semantics = [#tpu.dimension_semantics<parallel>], iteration_bounds = array<i64: 2>, scalar_prefetch = 0 : i64, scratch_operands = 0 : i64, tpu.core_type = #tpu.core_type<tc>, window_params = [{transform_indices = @transform_0, window_bounds = array<i64: 64, 32>}, {pipeline_mode = #tpu.pipeline_mode<synchronous>, transform_indices = @transform_1, window_bounds = array<i64: 1, 32>}, {pipeline_mode = #tpu.pipeline_mode<synchronous>, transform_indices = @transform_2, window_bounds = array<i64: 1, 32>}, {pipeline_mode = #tpu.pipeline_mode<synchronous>, transform_indices = @transform_3, window_bounds = array<i64: 32, 128>}, {transform_indices = @transform_4, window_bounds = array<i64: 1, 1, 256>}]} {
    %c0 = arith.constant 0 : index
    %c0_0 = arith.constant 0 : index
    %0 = vector.load %arg1[%c0, %c0_0] : memref<64x32xf32, #tpu.memory_space<vmem>>, vector<64x32xf32>
    %c0_1 = arith.constant 0 : index
    %c0_2 = arith.constant 0 : index
    %1 = vector.load %arg2[%c0_1, %c0_2] : memref<1x32xf32, #tpu.memory_space<vmem>>, vector<1x32xf32>
    %2 = vector.broadcast %1 : vector<1x32xf32> to vector<64x32xf32>
    %3 = arith.mulf %0, %2 : vector<64x32xf32>
    %c0_3 = arith.constant 0 : index
    %c0_4 = arith.constant 0 : index
    %4 = vector.load %arg3[%c0_3, %c0_4] : memref<1x32xf32, #tpu.memory_space<vmem>>, vector<1x32xf32>
    %5 = vector.broadcast %4 : vector<1x32xf32> to vector<64x32xf32>
    %6 = arith.addf %3, %5 : vector<64x32xf32>
    %cst = arith.constant 0.000000e+00 : f32
    %7 = vector.broadcast %cst : f32 to vector<64x32xf32>
    %8 = arith.maximumf %6, %7 : vector<64x32xf32>
    %c0_5 = arith.constant 0 : index
    %c0_6 = arith.constant 0 : index
    %9 = vector.load %arg4[%c0_5, %c0_6] : memref<32x128xf32, #tpu.memory_space<vmem>>, vector<32x128xf32>
    %cst_7 = arith.constant dense<0.000000e+00> : vector<64x128xf32>
    %10 = tpu.matmul %8, %9, %cst_7 {dimension_numbers = #tpu.dot_dimension_numbers<[1], [0], [0], [1], [0, 0, 1, 1], [], []>} : vector<64x32xf32>, vector<32x128xf32>, vector<64x128xf32> -> vector<64x128xf32>
    %cst_8 = arith.constant 1.000000e+00 : f32
    %11 = vector.broadcast %cst_8 : f32 to vector<1x64xf32>
    %cst_9 = arith.constant dense<0.000000e+00> : vector<1x128xf32>
    %12 = tpu.matmul %11, %10, %cst_9 {dimension_numbers = #tpu.dot_dimension_numbers<[1], [0], [0], [1], [0, 0, 1, 1], [], []>} : vector<1x64xf32>, vector<64x128xf32>, vector<1x128xf32> -> vector<1x128xf32>
    %13 = arith.mulf %10, %10 : vector<64x128xf32>
    %cst_10 = arith.constant dense<0.000000e+00> : vector<1x128xf32>
    %14 = tpu.matmul %11, %13, %cst_10 {dimension_numbers = #tpu.dot_dimension_numbers<[1], [0], [0], [1], [0, 0, 1, 1], [], []>} : vector<1x64xf32>, vector<64x128xf32>, vector<1x128xf32> -> vector<1x128xf32>
    %15 = tpu.concatenate %12, %14 in 1 : vector<1x128xf32>, vector<1x128xf32> -> vector<1x256xf32>
    %16 = vector.shape_cast %15 : vector<1x256xf32> to vector<1x1x256xf32>
    %c0_11 = arith.constant 0 : index
    %c0_12 = arith.constant 0 : index
    %c0_13 = arith.constant 0 : index
    %17 = vector.load %arg5[%c0_11, %c0_12, %c0_13] : memref<1x1x256xf32, #tpu.memory_space<vmem>>, vector<1x1x256xf32>
    tpu.vector_store %arg5[%c0_11, %c0_12, %c0_13], %16 {strides = array<i32>} : memref<1x1x256xf32, #tpu.memory_space<vmem>>, vector<1x1x256xf32>,
    return
  }
  func.func @transform_0(%arg0: i32) -> (i32, i32) {
    %c0_i32 = arith.constant 0 : i32
    %c0_i32_0 = arith.constant 0 : i32
    return %arg0, %c0_i32 : i32, i32
  }
  func.func @transform_1(%arg0: i32) -> (i32, i32) {
    %c0_i32 = arith.constant 0 : i32
    %c0_i32_0 = arith.constant 0 : i32
    %c0_i32_1 = arith.constant 0 : i32
    return %c0_i32, %c0_i32_0 : i32, i32
  }
  func.func @transform_2(%arg0: i32) -> (i32, i32) {
    %c0_i32 = arith.constant 0 : i32
    %c0_i32_0 = arith.constant 0 : i32
    %c0_i32_1 = arith.constant 0 : i32
    return %c0_i32, %c0_i32_0 : i32, i32
  }
  func.func @transform_3(%arg0: i32) -> (i32, i32) {
    %c0_i32 = arith.constant 0 : i32
    %c0_i32_0 = arith.constant 0 : i32
    %c0_i32_1 = arith.constant 0 : i32
    return %c0_i32, %c0_i32_0 : i32, i32
  }
  func.func @transform_4(%arg0: i32) -> (i32, i32, i32) {
    %c0_i32 = arith.constant 0 : i32
    %c0_i32_0 = arith.constant 0 : i32
    %c0_i32_1 = arith.constant 0 : i32
    return %arg0, %c0_i32, %c0_i32_0 : i32, i32, i32
  }
}

module attributes {stable_mosaic.version = 11 : i64} {
  func.func @_conv2_kernel(%arg0: i32, %arg1: memref<64x32xf32, #tpu.memory_space<vmem>>, %arg2: memref<1x32xf32, #tpu.memory_space<vmem>>, %arg3: memref<1x32xf32, #tpu.memory_space<vmem>>, %arg4: memref<3x96x32xf32, #tpu.memory_space<vmem>>, %arg5: memref<64x32xf32, #tpu.memory_space<vmem>>, %arg6: memref<1x1x64xf32, #tpu.memory_space<vmem>>, %arg7: memref<88x96xf32, #tpu.memory_space<vmem>>) attributes {dimension_semantics = [#tpu.dimension_semantics<parallel>], iteration_bounds = array<i64: 2>, scalar_prefetch = 0 : i64, scratch_operands = 1 : i64, tpu.core_type = #tpu.core_type<tc>, window_params = [{transform_indices = @transform_0, window_bounds = array<i64: 64, 32>}, {pipeline_mode = #tpu.pipeline_mode<synchronous>, transform_indices = @transform_1, window_bounds = array<i64: 1, 32>}, {pipeline_mode = #tpu.pipeline_mode<synchronous>, transform_indices = @transform_2, window_bounds = array<i64: 1, 32>}, {pipeline_mode = #tpu.pipeline_mode<synchronous>, transform_indices = @transform_3, window_bounds = array<i64: 3, 96, 32>}, {transform_indices = @transform_4, window_bounds = array<i64: 64, 32>}, {transform_indices = @transform_5, window_bounds = array<i64: 1, 1, 64>}]} {
    %c0 = arith.constant 0 : index
    %c0_0 = arith.constant 0 : index
    %0 = vector.load %arg1[%c0, %c0_0] : memref<64x32xf32, #tpu.memory_space<vmem>>, vector<64x32xf32>
    %c0_1 = arith.constant 0 : index
    %c0_2 = arith.constant 0 : index
    %1 = vector.load %arg2[%c0_1, %c0_2] : memref<1x32xf32, #tpu.memory_space<vmem>>, vector<1x32xf32>
    %2 = vector.broadcast %1 : vector<1x32xf32> to vector<64x32xf32>
    %3 = arith.mulf %0, %2 : vector<64x32xf32>
    %c0_3 = arith.constant 0 : index
    %c0_4 = arith.constant 0 : index
    %4 = vector.load %arg3[%c0_3, %c0_4] : memref<1x32xf32, #tpu.memory_space<vmem>>, vector<1x32xf32>
    %5 = vector.broadcast %4 : vector<1x32xf32> to vector<64x32xf32>
    %6 = arith.addf %3, %5 : vector<64x32xf32>
    %cst = arith.constant 0.000000e+00 : f32
    %7 = vector.broadcast %cst : f32 to vector<64x32xf32>
    %8 = arith.maximumf %6, %7 : vector<64x32xf32>
    %9 = tpu.iota {dimensions = array<i32: 0>} : vector<64x1xi32>
    %c8_i32 = arith.constant 8 : i32
    %c0_i32 = arith.constant 0 : i32
    %10 = arith.cmpi eq, %c8_i32, %c0_i32 : i32
    %c1_i32 = arith.constant 1 : i32
    %11 = arith.select %10, %c1_i32, %c8_i32 : i32
    %12 = vector.broadcast %11 : i32 to vector<64x1xi32>
    %13 = arith.remsi %9, %12 : vector<64x1xi32>
    %c0_i32_5 = arith.constant 0 : i32
    %14 = vector.broadcast %c0_i32_5 : i32 to vector<64x1xi32>
    %15 = arith.cmpi ne, %13, %14 : vector<64x1xi32>
    %c0_i32_6 = arith.constant 0 : i32
    %16 = vector.broadcast %c0_i32_6 : i32 to vector<64x1xi32>
    %17 = arith.cmpi slt, %13, %16 : vector<64x1xi32>
    %c0_i32_7 = arith.constant 0 : i32
    %18 = arith.cmpi slt, %11, %c0_i32_7 : i32
    %19 = vector.broadcast %18 : i1 to vector<64x1xi1>
    %20 = vector.broadcast %19 : vector<64x1xi1> to vector<64x1xi1>
    %21 = arith.xori %17, %20 : vector<64x1xi1>
    %22 = arith.andi %21, %15 : vector<64x1xi1>
    %23 = vector.broadcast %11 : i32 to vector<64x1xi32>
    %24 = arith.addi %13, %23 : vector<64x1xi32>
    %25 = arith.select %22, %24, %13 : vector<64x1xi1>, vector<64x1xi32>
    %c7_i32 = arith.constant 7 : i32
    %26 = vector.broadcast %c7_i32 : i32 to vector<64x1xi32>
    %27 = arith.cmpi eq, %25, %26 : vector<64x1xi32>
    %cst_8 = arith.constant 0.000000e+00 : f32
    %28 = vector.shape_cast %27 : vector<64x1xi1> to vector<64x1xi1>
    %29 = vector.broadcast %28 : vector<64x1xi1> to vector<64x32xi1>
    %30 = vector.broadcast %cst_8 : f32 to vector<64x32xf32>
    %31 = arith.select %29, %30, %8 : vector<64x32xi1>, vector<64x32xf32>
    %c0_i32_9 = arith.constant 0 : i32
    %32 = vector.broadcast %c0_i32_9 : i32 to vector<64x1xi32>
    %33 = arith.cmpi eq, %25, %32 : vector<64x1xi32>
    %cst_10 = arith.constant 0.000000e+00 : f32
    %34 = vector.shape_cast %33 : vector<64x1xi1> to vector<64x1xi1>
    %35 = vector.broadcast %34 : vector<64x1xi1> to vector<64x32xi1>
    %36 = vector.broadcast %cst_10 : f32 to vector<64x32xf32>
    %37 = arith.select %35, %36, %8 : vector<64x32xi1>, vector<64x32xf32>
    %cst_11 = arith.constant 0.000000e+00 : f32
    %38 = vector.broadcast %cst_11 : f32 to vector<1x32xf32>
    %39 = vector.extract_strided_slice %31 {offsets = [0, 0], sizes = [63, 32], strides = [1, 1]} : vector<64x32xf32> to vector<63x32xf32>
    %40 = tpu.concatenate %38, %39 in 0 : vector<1x32xf32>, vector<63x32xf32> -> vector<64x32xf32>
    %41 = vector.extract_strided_slice %37 {offsets = [1, 0], sizes = [63, 32], strides = [1, 1]} : vector<64x32xf32> to vector<63x32xf32>
    %42 = tpu.concatenate %41, %38 in 0 : vector<63x32xf32>, vector<1x32xf32> -> vector<64x32xf32>
    %cst_12 = arith.constant 0.000000e+00 : f32
    %43 = vector.broadcast %cst_12 : f32 to vector<16x96xf32>
    %c0_13 = arith.constant 0 : index
    %c0_14 = arith.constant 0 : index
    %44 = vector.load %arg7[%c0_13, %c0_14] : memref<88x96xf32, #tpu.memory_space<vmem>>, vector<16x96xf32>
    tpu.vector_store %arg7[%c0_13, %c0_14], %43 {strides = array<i32>} : memref<88x96xf32, #tpu.memory_space<vmem>>, vector<16x96xf32>,
    %cst_15 = arith.constant 0.000000e+00 : f32
    %45 = vector.broadcast %cst_15 : f32 to vector<8x96xf32>
    %c80 = arith.constant 80 : index
    %c0_16 = arith.constant 0 : index
    %46 = vector.load %arg7[%c80, %c0_16] : memref<88x96xf32, #tpu.memory_space<vmem>>, vector<8x96xf32>
    tpu.vector_store %arg7[%c80, %c0_16], %45 {strides = array<i32>} : memref<88x96xf32, #tpu.memory_space<vmem>>, vector<8x96xf32>,
    %c16 = arith.constant 16 : index
    %c0_17 = arith.constant 0 : index
    %47 = vector.load %arg7[%c16, %c0_17] : memref<88x96xf32, #tpu.memory_space<vmem>>, vector<64x32xf32>
    tpu.vector_store %arg7[%c16, %c0_17], %40 {strides = array<i32>} : memref<88x96xf32, #tpu.memory_space<vmem>>, vector<64x32xf32>,
    %c16_18 = arith.constant 16 : index
    %c32 = arith.constant 32 : index
    %48 = vector.load %arg7[%c16_18, %c32] : memref<88x96xf32, #tpu.memory_space<vmem>>, vector<64x32xf32>
    tpu.vector_store %arg7[%c16_18, %c32], %8 {strides = array<i32>} : memref<88x96xf32, #tpu.memory_space<vmem>>, vector<64x32xf32>,
    %c16_19 = arith.constant 16 : index
    %c64 = arith.constant 64 : index
    %49 = vector.load %arg7[%c16_19, %c64] : memref<88x96xf32, #tpu.memory_space<vmem>>, vector<64x32xf32>
    tpu.vector_store %arg7[%c16_19, %c64], %42 {strides = array<i32>} : memref<88x96xf32, #tpu.memory_space<vmem>>, vector<64x32xf32>,
    %c8 = arith.constant 8 : index
    %c0_20 = arith.constant 0 : index
    %50 = vector.load %arg7[%c8, %c0_20] : memref<88x96xf32, #tpu.memory_space<vmem>>, vector<64x96xf32>
    %c0_21 = arith.constant 0 : index
    %c0_22 = arith.constant 0 : index
    %c0_23 = arith.constant 0 : index
    %51 = vector.load %arg4[%c0_21, %c0_22, %c0_23] : memref<3x96x32xf32, #tpu.memory_space<vmem>>, vector<1x96x32xf32>
    %52 = vector.shape_cast %51 : vector<1x96x32xf32> to vector<96x32xf32>
    %cst_24 = arith.constant dense<0.000000e+00> : vector<64x32xf32>
    %53 = tpu.matmul %50, %52, %cst_24 {dimension_numbers = #tpu.dot_dimension_numbers<[1], [0], [0], [1], [0, 0, 1, 1], [], []>} : vector<64x96xf32>, vector<96x32xf32>, vector<64x32xf32> -> vector<64x32xf32>
    %c16_25 = arith.constant 16 : index
    %c0_26 = arith.constant 0 : index
    %54 = vector.load %arg7[%c16_25, %c0_26] : memref<88x96xf32, #tpu.memory_space<vmem>>, vector<64x96xf32>
    %c1 = arith.constant 1 : index
    %c0_27 = arith.constant 0 : index
    %c0_28 = arith.constant 0 : index
    %55 = vector.load %arg4[%c1, %c0_27, %c0_28] : memref<3x96x32xf32, #tpu.memory_space<vmem>>, vector<1x96x32xf32>
    %56 = vector.shape_cast %55 : vector<1x96x32xf32> to vector<96x32xf32>
    %cst_29 = arith.constant dense<0.000000e+00> : vector<64x32xf32>
    %57 = tpu.matmul %54, %56, %cst_29 {dimension_numbers = #tpu.dot_dimension_numbers<[1], [0], [0], [1], [0, 0, 1, 1], [], []>} : vector<64x96xf32>, vector<96x32xf32>, vector<64x32xf32> -> vector<64x32xf32>
    %58 = arith.addf %53, %57 : vector<64x32xf32>
    %c24 = arith.constant 24 : index
    %c0_30 = arith.constant 0 : index
    %59 = vector.load %arg7[%c24, %c0_30] : memref<88x96xf32, #tpu.memory_space<vmem>>, vector<64x96xf32>
    %c2 = arith.constant 2 : index
    %c0_31 = arith.constant 0 : index
    %c0_32 = arith.constant 0 : index
    %60 = vector.load %arg4[%c2, %c0_31, %c0_32] : memref<3x96x32xf32, #tpu.memory_space<vmem>>, vector<1x96x32xf32>
    %61 = vector.shape_cast %60 : vector<1x96x32xf32> to vector<96x32xf32>
    %cst_33 = arith.constant dense<0.000000e+00> : vector<64x32xf32>
    %62 = tpu.matmul %59, %61, %cst_33 {dimension_numbers = #tpu.dot_dimension_numbers<[1], [0], [0], [1], [0, 0, 1, 1], [], []>} : vector<64x96xf32>, vector<96x32xf32>, vector<64x32xf32> -> vector<64x32xf32>
    %63 = arith.addf %58, %62 : vector<64x32xf32>
    %cst_34 = arith.constant 1.000000e+00 : f32
    %64 = vector.broadcast %cst_34 : f32 to vector<1x64xf32>
    %cst_35 = arith.constant dense<0.000000e+00> : vector<1x32xf32>
    %65 = tpu.matmul %64, %63, %cst_35 {dimension_numbers = #tpu.dot_dimension_numbers<[1], [0], [0], [1], [0, 0, 1, 1], [], []>} : vector<1x64xf32>, vector<64x32xf32>, vector<1x32xf32> -> vector<1x32xf32>
    %66 = arith.mulf %63, %63 : vector<64x32xf32>
    %cst_36 = arith.constant dense<0.000000e+00> : vector<1x32xf32>
    %67 = tpu.matmul %64, %66, %cst_36 {dimension_numbers = #tpu.dot_dimension_numbers<[1], [0], [0], [1], [0, 0, 1, 1], [], []>} : vector<1x64xf32>, vector<64x32xf32>, vector<1x32xf32> -> vector<1x32xf32>
    %68 = tpu.concatenate %65, %67 in 1 : vector<1x32xf32>, vector<1x32xf32> -> vector<1x64xf32>
    %69 = vector.shape_cast %68 : vector<1x64xf32> to vector<1x1x64xf32>
    %c0_37 = arith.constant 0 : index
    %c0_38 = arith.constant 0 : index
    %c0_39 = arith.constant 0 : index
    %70 = vector.load %arg6[%c0_37, %c0_38, %c0_39] : memref<1x1x64xf32, #tpu.memory_space<vmem>>, vector<1x1x64xf32>
    tpu.vector_store %arg6[%c0_37, %c0_38, %c0_39], %69 {strides = array<i32>} : memref<1x1x64xf32, #tpu.memory_space<vmem>>, vector<1x1x64xf32>,
    %c0_40 = arith.constant 0 : index
    %c0_41 = arith.constant 0 : index
    %71 = vector.load %arg5[%c0_40, %c0_41] : memref<64x32xf32, #tpu.memory_space<vmem>>, vector<64x32xf32>
    tpu.vector_store %arg5[%c0_40, %c0_41], %63 {strides = array<i32>} : memref<64x32xf32, #tpu.memory_space<vmem>>, vector<64x32xf32>,
    return
  }
  func.func @transform_0(%arg0: i32) -> (i32, i32) {
    %c0_i32 = arith.constant 0 : i32
    %c0_i32_0 = arith.constant 0 : i32
    return %arg0, %c0_i32 : i32, i32
  }
  func.func @transform_1(%arg0: i32) -> (i32, i32) {
    %c0_i32 = arith.constant 0 : i32
    %c0_i32_0 = arith.constant 0 : i32
    %c0_i32_1 = arith.constant 0 : i32
    return %c0_i32, %c0_i32_0 : i32, i32
  }
  func.func @transform_2(%arg0: i32) -> (i32, i32) {
    %c0_i32 = arith.constant 0 : i32
    %c0_i32_0 = arith.constant 0 : i32
    %c0_i32_1 = arith.constant 0 : i32
    return %c0_i32, %c0_i32_0 : i32, i32
  }
  func.func @transform_3(%arg0: i32) -> (i32, i32, i32) {
    %c0_i32 = arith.constant 0 : i32
    %c0_i32_0 = arith.constant 0 : i32
    %c0_i32_1 = arith.constant 0 : i32
    %c0_i32_2 = arith.constant 0 : i32
    return %c0_i32, %c0_i32_0, %c0_i32_1 : i32, i32, i32
  }
  func.func @transform_4(%arg0: i32) -> (i32, i32) {
    %c0_i32 = arith.constant 0 : i32
    %c0_i32_0 = arith.constant 0 : i32
    return %arg0, %c0_i32 : i32, i32
  }
  func.func @transform_5(%arg0: i32) -> (i32, i32, i32) {
    %c0_i32 = arith.constant 0 : i32
    %c0_i32_0 = arith.constant 0 : i32
    %c0_i32_1 = arith.constant 0 : i32
    return %arg0, %c0_i32, %c0_i32_0 : i32, i32, i32
  }
}

module attributes {stable_mosaic.version = 11 : i64} {
  func.func @_conv3_residual_kernel(%arg0: i32, %arg1: memref<64x32xf32, #tpu.memory_space<vmem>>, %arg2: memref<1x32xf32, #tpu.memory_space<vmem>>, %arg3: memref<1x32xf32, #tpu.memory_space<vmem>>, %arg4: memref<32x128xf32, #tpu.memory_space<vmem>>, %arg5: memref<1x128xf32, #tpu.memory_space<vmem>>, %arg6: memref<1x128xf32, #tpu.memory_space<vmem>>, %arg7: memref<64x128xf32, #tpu.memory_space<vmem>>, %arg8: memref<64x128xf32, #tpu.memory_space<vmem>>) attributes {dimension_semantics = [#tpu.dimension_semantics<parallel>], iteration_bounds = array<i64: 2>, scalar_prefetch = 0 : i64, scratch_operands = 0 : i64, tpu.core_type = #tpu.core_type<tc>, window_params = [{transform_indices = @transform_0, window_bounds = array<i64: 64, 32>}, {pipeline_mode = #tpu.pipeline_mode<synchronous>, transform_indices = @transform_1, window_bounds = array<i64: 1, 32>}, {pipeline_mode = #tpu.pipeline_mode<synchronous>, transform_indices = @transform_2, window_bounds = array<i64: 1, 32>}, {pipeline_mode = #tpu.pipeline_mode<synchronous>, transform_indices = @transform_3, window_bounds = array<i64: 32, 128>}, {pipeline_mode = #tpu.pipeline_mode<synchronous>, transform_indices = @transform_4, window_bounds = array<i64: 1, 128>}, {pipeline_mode = #tpu.pipeline_mode<synchronous>, transform_indices = @transform_5, window_bounds = array<i64: 1, 128>}, {transform_indices = @transform_6, window_bounds = array<i64: 64, 128>}, {transform_indices = @transform_7, window_bounds = array<i64: 64, 128>}]} {
    %c0 = arith.constant 0 : index
    %c0_0 = arith.constant 0 : index
    %0 = vector.load %arg1[%c0, %c0_0] : memref<64x32xf32, #tpu.memory_space<vmem>>, vector<64x32xf32>
    %c0_1 = arith.constant 0 : index
    %c0_2 = arith.constant 0 : index
    %1 = vector.load %arg2[%c0_1, %c0_2] : memref<1x32xf32, #tpu.memory_space<vmem>>, vector<1x32xf32>
    %2 = vector.broadcast %1 : vector<1x32xf32> to vector<64x32xf32>
    %3 = arith.mulf %0, %2 : vector<64x32xf32>
    %c0_3 = arith.constant 0 : index
    %c0_4 = arith.constant 0 : index
    %4 = vector.load %arg3[%c0_3, %c0_4] : memref<1x32xf32, #tpu.memory_space<vmem>>, vector<1x32xf32>
    %5 = vector.broadcast %4 : vector<1x32xf32> to vector<64x32xf32>
    %6 = arith.addf %3, %5 : vector<64x32xf32>
    %cst = arith.constant 0.000000e+00 : f32
    %7 = vector.broadcast %cst : f32 to vector<64x32xf32>
    %8 = arith.maximumf %6, %7 : vector<64x32xf32>
    %c0_5 = arith.constant 0 : index
    %c0_6 = arith.constant 0 : index
    %9 = vector.load %arg4[%c0_5, %c0_6] : memref<32x128xf32, #tpu.memory_space<vmem>>, vector<32x128xf32>
    %cst_7 = arith.constant dense<0.000000e+00> : vector<64x128xf32>
    %10 = tpu.matmul %8, %9, %cst_7 {dimension_numbers = #tpu.dot_dimension_numbers<[1], [0], [0], [1], [0, 0, 1, 1], [], []>} : vector<64x32xf32>, vector<32x128xf32>, vector<64x128xf32> -> vector<64x128xf32>
    %c0_8 = arith.constant 0 : index
    %c0_9 = arith.constant 0 : index
    %11 = vector.load %arg5[%c0_8, %c0_9] : memref<1x128xf32, #tpu.memory_space<vmem>>, vector<1x128xf32>
    %12 = vector.broadcast %11 : vector<1x128xf32> to vector<64x128xf32>
    %13 = arith.mulf %10, %12 : vector<64x128xf32>
    %c0_10 = arith.constant 0 : index
    %c0_11 = arith.constant 0 : index
    %14 = vector.load %arg6[%c0_10, %c0_11] : memref<1x128xf32, #tpu.memory_space<vmem>>, vector<1x128xf32>
    %15 = vector.broadcast %14 : vector<1x128xf32> to vector<64x128xf32>
    %16 = arith.addf %13, %15 : vector<64x128xf32>
    %c0_12 = arith.constant 0 : index
    %c0_13 = arith.constant 0 : index
    %17 = vector.load %arg7[%c0_12, %c0_13] : memref<64x128xf32, #tpu.memory_space<vmem>>, vector<64x128xf32>
    %18 = arith.addf %16, %17 : vector<64x128xf32>
    %cst_14 = arith.constant 0.000000e+00 : f32
    %19 = vector.broadcast %cst_14 : f32 to vector<64x128xf32>
    %20 = arith.maximumf %18, %19 : vector<64x128xf32>
    %c0_15 = arith.constant 0 : index
    %c0_16 = arith.constant 0 : index
    %21 = vector.load %arg8[%c0_15, %c0_16] : memref<64x128xf32, #tpu.memory_space<vmem>>, vector<64x128xf32>
    tpu.vector_store %arg8[%c0_15, %c0_16], %20 {strides = array<i32>} : memref<64x128xf32, #tpu.memory_space<vmem>>, vector<64x128xf32>,
    return
  }
  func.func @transform_0(%arg0: i32) -> (i32, i32) {
    %c0_i32 = arith.constant 0 : i32
    %c0_i32_0 = arith.constant 0 : i32
    return %arg0, %c0_i32 : i32, i32
  }
  func.func @transform_1(%arg0: i32) -> (i32, i32) {
    %c0_i32 = arith.constant 0 : i32
    %c0_i32_0 = arith.constant 0 : i32
    %c0_i32_1 = arith.constant 0 : i32
    return %c0_i32, %c0_i32_0 : i32, i32
  }
  func.func @transform_2(%arg0: i32) -> (i32, i32) {
    %c0_i32 = arith.constant 0 : i32
    %c0_i32_0 = arith.constant 0 : i32
    %c0_i32_1 = arith.constant 0 : i32
    return %c0_i32, %c0_i32_0 : i32, i32
  }
  func.func @transform_3(%arg0: i32) -> (i32, i32) {
    %c0_i32 = arith.constant 0 : i32
    %c0_i32_0 = arith.constant 0 : i32
    %c0_i32_1 = arith.constant 0 : i32
    return %c0_i32, %c0_i32_0 : i32, i32
  }
  func.func @transform_4(%arg0: i32) -> (i32, i32) {
    %c0_i32 = arith.constant 0 : i32
    %c0_i32_0 = arith.constant 0 : i32
    %c0_i32_1 = arith.constant 0 : i32
    return %c0_i32, %c0_i32_0 : i32, i32
  }
  func.func @transform_5(%arg0: i32) -> (i32, i32) {
    %c0_i32 = arith.constant 0 : i32
    %c0_i32_0 = arith.constant 0 : i32
    %c0_i32_1 = arith.constant 0 : i32
    return %c0_i32, %c0_i32_0 : i32, i32
  }
  func.func @transform_6(%arg0: i32) -> (i32, i32) {
    %c0_i32 = arith.constant 0 : i32
    %c0_i32_0 = arith.constant 0 : i32
    return %arg0, %c0_i32 : i32, i32
  }
  func.func @transform_7(%arg0: i32) -> (i32, i32) {
    %c0_i32 = arith.constant 0 : i32
    %c0_i32_0 = arith.constant 0 : i32
    return %arg0, %c0_i32 : i32, i32
  }
}

</mosaic_0001>

<llo_original>
// kernel: bottleneck_forward.4
$region0: #{bottleneck_forward.4}
  #allocation0 [shape = 'u32[]', space=smem, size = 0x4, offset = 0x4, fixed_abs, tag = 'smem constant byte address 0x4 - core index']
  #allocation1 [shape = 'u32[144,128]{1,0:T(1,128)}', space=vmem, size = 0x12000, scoped, tag = 'internal scratch']
  %s0 = inlined_call_operand.vmem [shape: f32[128,128], index: 0, kind: input, shape index: {}]
  %s1 = inlined_call_operand.vmem [shape: f32[128,32], index: 1, kind: input, shape index: {}]
  %s2 = inlined_call_operand.vmem [shape: f32[128,32], index: 2, kind: output, shape index: {0}]
  %s3 = inlined_call_operand.vmem [shape: f32[2,1,64], index: 3, kind: output, shape index: {1}]
  %4 = xla_tuple %s2, %s3
  %s5 = sld [smem:[#allocation0]]
  $region49: #{bottleneck_forward.4} parent=0
    _
  %s7 = ssub.s32 1, %s5
  %s8 = scalar_select 0, %s7, %s5
  loop: start=0, step=1, limit=4
  $region2: #{bottleneck_forward.4} parent=0 // loop_pre_header
    _
  $region3: #{bottleneck_forward.4} parent=0 // loop_header
    %s10 = sphi 0, %s14
    %p11 = scmp.ge.s32.totalorder %s10, 4
    %s20 = sphi 0, %s22
    %s23 = sphi 0, %s20
    %s24 = sphi 0, %s23
    %s40 = sphi 0, %s24
    %s44 = sphi 0, %s44
    %s46 = sphi 0, %s44
    %s47 = sphi 0, %s46
    %s61 = sphi 0, %s47
    %s67 = sphi 0, %s69
    %s70 = sphi 0, %s67
    %s71 = sphi 0, %s70
    %s87 = sphi 0, %s71
    %s93 = sphi 0, %s95
    %s96 = sphi 0, %s93
    %s97 = sphi 0, %s96
    %s113 = sphi 0, %s97
  $region4: #{bottleneck_forward.4} parent=0 // loop_header_branch
    %13 = sbr.rel (%p11) target = $region8
  $region5: #{bottleneck_forward.4} parent=0 // loop_body
    %s15 = ssub.s32 %s10, 1
    %s16 = ssub.s32 %s10, 2
    %s17 = sadd.s32 %s10, 1
    %s18 = ssub.s32 %s10, %s17
    %p19 = scmp.eq.s32.totalorder %s18, 0
    %s21 = sadd.s32 %s20, 1
    %s22 = scalar_select %p19, %s20, %s21
    %p25 = pneg %p19
    %p26 = scmp.eq.s32.totalorder %s10, 1
    %p27 = por %p25, %p26
    %p28 = scmp.ne.s32.totalorder %s20, %s23
    %p29 = scmp.eq.s32.totalorder %s10, 0
    %p30 = por %p28, %p29
    %p31 = scmp.ne.s32.totalorder %s20, %s23
    %p32 = scmp.eq.s32.totalorder %s15, 1
    %p33 = por %p31, %p32
    %p34 = scmp.ne.s32.totalorder %s23, %s24
    %p35 = scmp.eq.s32.totalorder %s15, 0
    %p36 = por %p34, %p35
    %p37 = scmp.ne.s32.totalorder %s23, %s24
    %p38 = scmp.eq.s32.totalorder %s16, 1
    %p39 = por %p37, %p38
    %p41 = scmp.ne.s32.totalorder %s24, %s40
    %p42 = scmp.eq.s32.totalorder %s16, 0
    %p43 = por %p41, %p42
    %s45 = sadd.s32 %s44, 1
    %p48 = scmp.eq.s32.totalorder %s10, 1
    %p49 = scmp.ne.s32.totalorder %s44, %s46
    %p50 = scmp.eq.s32.totalorder %s10, 0
    %p51 = por %p49, %p50
    %p52 = scmp.ne.s32.totalorder %s44, %s46
    %p53 = scmp.eq.s32.totalorder %s15, 1
    %p54 = por %p52, %p53
    %p55 = scmp.ne.s32.totalorder %s46, %s47
    %p56 = scmp.eq.s32.totalorder %s15, 0
    %p57 = por %p55, %p56
    %p58 = scmp.ne.s32.totalorder %s46, %s47
    %p59 = scmp.eq.s32.totalorder %s16, 1
    %p60 = por %p58, %p59
    %p62 = scmp.ne.s32.totalorder %s47, %s61
    %p63 = scmp.eq.s32.totalorder %s16, 0
    %p64 = por %p62, %p63
    %s65 = ssub.s32 %s10, %s17
    %p66 = scmp.eq.s32.totalorder %s65, 0
    %s68 = sadd.s32 %s67, 1
    %s69 = scalar_select %p66, %s67, %s68
    %p72 = pneg %p66
    %p73 = scmp.eq.s32.totalorder %s10, 1
    %p74 = por %p72, %p73
    %p75 = scmp.ne.s32.totalorder %s67, %s70
    %p76 = scmp.eq.s32.totalorder %s10, 0
    %p77 = por %p75, %p76
    %p78 = scmp.ne.s32.totalorder %s67, %s70
    %p79 = scmp.eq.s32.totalorder %s15, 1
    %p80 = por %p78, %p79
    %p81 = scmp.ne.s32.totalorder %s70, %s71
    %p82 = scmp.eq.s32.totalorder %s15, 0
    %p83 = por %p81, %p82
    %p84 = scmp.ne.s32.totalorder %s70, %s71
    %p85 = scmp.eq.s32.totalorder %s16, 1
    %p86 = por %p84, %p85
    %p88 = scmp.ne.s32.totalorder %s71, %s87
    %p89 = scmp.eq.s32.totalorder %s16, 0
    %p90 = por %p88, %p89
    %s91 = ssub.s32 %s10, %s17
    %p92 = scmp.eq.s32.totalorder %s91, 0
    %s94 = sadd.s32 %s93, 1
    %s95 = scalar_select %p92, %s93, %s94
    %p98 = pneg %p92
    %p99 = scmp.eq.s32.totalorder %s10, 1
    %p100 = por %p98, %p99
    %p101 = scmp.ne.s32.totalorder %s93, %s96
    %p102 = scmp.eq.s32.totalorder %s10, 0
    %p103 = por %p101, %p102
    %p104 = scmp.ne.s32.totalorder %s93, %s96
    %p105 = scmp.eq.s32.totalorder %s15, 1
    %p106 = por %p104, %p105
    %p107 = scmp.ne.s32.totalorder %s96, %s97
    %p108 = scmp.eq.s32.totalorder %s15, 0
    %p109 = por %p107, %p108
    %p110 = scmp.ne.s32.totalorder %s96, %s97
    %p111 = scmp.eq.s32.totalorder %s16, 1
    %p112 = por %p110, %p111
    %p114 = scmp.ne.s32.totalorder %s97, %s113
    %p115 = scmp.eq.s32.totalorder %s16, 0
    %p116 = por %p114, %p115
    %p117 = scmp.le.s32.totalorder 1, %s10
    %p118 = scmp.lt.s32.totalorder %s10, 3
    %p119 = pnand %p117, %p118
    %p120 = pneg %p119
    // Predicated region
    $region9: #{bottleneck_forward.4} parent=5 // pred_check
      _
    $region10: #{bottleneck_forward.4} parent=5 // pred_check_branch
      %122 = sbr.rel (%p119) target = $region12
    $region11: #{bottleneck_forward.4} parent=5 // pred_region
      %s123 = ssub.s32 %s10, 1
      // Predicated region
      $region13: #{bottleneck_forward.4} parent=11 // pred_check
        %p124 = pneg %p57
      $region14: #{bottleneck_forward.4} parent=11 // pred_check_branch
        %126 = sbr.rel (%p124) target = $region16
      $region15: #{bottleneck_forward.4} parent=11 // pred_region
        _
      $region16: #{bottleneck_forward.4} parent=11 // pred_fallthru
        _
    $region12: #{bottleneck_forward.4} parent=5 // pred_fallthru
      _
    %p127 = scmp.lt.s32.totalorder %s10, 2
    // Predicated region
    $region17: #{bottleneck_forward.4} parent=5 // pred_check
      %p128 = pneg %p127
    $region18: #{bottleneck_forward.4} parent=5 // pred_check_branch
      %130 = sbr.rel (%p128) target = $region20
    $region19: #{bottleneck_forward.4} parent=5 // pred_region
      // Predicated region
      $region21: #{bottleneck_forward.4} parent=19 // pred_check
        %p131 = pneg %p30
      $region22: #{bottleneck_forward.4} parent=19 // pred_check_branch
        %133 = sbr.rel (%p131) target = $region24
      $region23: #{bottleneck_forward.4} parent=19 // pred_region
        %s134 = smul.u32 8, %s10
        %p135 = scmp.lt.s32.totalorder %s134, 15
        %s136 = scalar_select %p135, %s134, 15
        %s137 = smul.addr %s136, 8
        %s138 = scalar_lea.vmem %s0, %s137
        %s139 = smul.u32 8, %s10
      $region24: #{bottleneck_forward.4} parent=19 // pred_fallthru
        _
    $region20: #{bottleneck_forward.4} parent=5 // pred_fallthru
      _
    %p140 = scmp.le.s32.totalorder 1, %s10
    %p141 = scmp.lt.s32.totalorder %s10, 3
    %p142 = pnand %p140, %p141
    %p143 = pneg %p142
    // Predicated region
    $region25: #{bottleneck_forward.4} parent=5 // pred_check
      _
    $region26: #{bottleneck_forward.4} parent=5 // pred_check_branch
      %145 = sbr.rel (%p142) target = $region28
    $region27: #{bottleneck_forward.4} parent=5 // pred_region
      %s146 = ssub.s32 %s10, 1
      %s147 = smul.u32 8, %s15
      %p148 = scmp.lt.s32.totalorder %s147, 15
      %s149 = scalar_select %p148, %s147, 15
      %s150 = smul.addr %s149, 8
      %s151 = scalar_lea.vmem %s0, %s150
      %p152 = pneg %p36
      %p153 = pneg %p33
      %p154 = pneg %p57
      %p155 = pneg %p54
      %p156 = pneg %p83
      %p157 = pneg %p80
      %s158 = smul.u32 8, %s15
      %p159 = scmp.lt.s32.totalorder %s158, 15
      %s160 = scalar_select %p159, %s158, 15
      %s161 = smul.addr %s160, 8
      %s162 = scalar_lea.vmem %s2, %s161
      %p163 = pneg %p109
      %p164 = pneg %p106
      %p165 = scmp.lt.s32.totalorder %s15, 1
      %s166 = scalar_select %p165, %s15, 1
      %s167 = scalar_lea.vmem %s3, %s166
      %s168 = smul.u32 8, %s15
      %p169 = scmp.lt.s32.totalorder %s168, 15
      %s170 = scalar_select %p169, %s168, 15
      %s171 = smul.addr %s170, 8
      %s172 = scalar_lea.vmem %s0, %s171
      %s173 = smul.u32 8, %s15
      %s174 = smul.u32 8, %s15
      %p175 = scmp.lt.s32.totalorder %s174, 15
      %s176 = scalar_select %p175, %s174, 15
      %s177 = smul.addr %s176, 8
      %s178 = scalar_lea.vmem %s2, %s177
      %s179 = smul.u32 8, %s15
      %p180 = scmp.lt.s32.totalorder %s15, 1
      %s181 = scalar_select %p180, %s15, 1
      %s182 = scalar_lea.vmem %s3, %s181
      %v183 = vld [vmem:[%s172] sm:$0xff]
      %v184 = vld [vmem:[%s172 + $0x8] sm:$0xff]
      %v185 = vld [vmem:[%s172 + $0x10] sm:$0xff]
      %v186 = vld [vmem:[%s172 + $0x18] sm:$0xff]
      %v187 = vld [vmem:[%s172 + $0x20] sm:$0xff]
      %v188 = vld [vmem:[%s172 + $0x28] sm:$0xff]
      %v189 = vld [vmem:[%s172 + $0x30] sm:$0xff]
      %v190 = vld [vmem:[%s172 + $0x38] sm:$0xff]
      %v191 = vld [vmem:[%s1] sm:$0xff]
      %v192 = vld [vmem:[%s1 + $0x8] sm:$0xff]
      %v193 = vld [vmem:[%s1 + $0x10] sm:$0xff]
      %v194 = vld [vmem:[%s1 + $0x18] sm:$0xff]
      %v195 = vld [vmem:[%s1 + $0x20] sm:$0xff]
      %v196 = vld [vmem:[%s1 + $0x28] sm:$0xff]
      %v197 = vld [vmem:[%s1 + $0x30] sm:$0xff]
      %v198 = vld [vmem:[%s1 + $0x38] sm:$0xff]
      %v199 = vld [vmem:[%s1 + $0x40] sm:$0xff]
      %v200 = vld [vmem:[%s1 + $0x48] sm:$0xff]
      %v201 = vld [vmem:[%s1 + $0x50] sm:$0xff]
      %v202 = vld [vmem:[%s1 + $0x58] sm:$0xff]
      %v203 = vld [vmem:[%s1 + $0x60] sm:$0xff]
      %v204 = vld [vmem:[%s1 + $0x68] sm:$0xff]
      %v205 = vld [vmem:[%s1 + $0x70] sm:$0xff]
      %v206 = vld [vmem:[%s1 + $0x78] sm:$0xff]
      %207 = vmatprep.subr.mxu0 0.0
      %208 = vmatpush1.msra.mxu0 %v191
      %209 = vmatprep.subr.mxu0 0.0
      %210 = vmatpush1.msra.mxu0 %v192
      %211 = vmatprep.subr.mxu0 0.0
      %212 = vmatpush1.msra.mxu0 %v193
      %213 = vmatprep.subr.mxu0 0.0
      %214 = vmatpush1.msra.mxu0 %v194
      %215 = vmatprep.subr.mxu0 0.0
      %216 = vmatpush1.msra.mxu0 %v195
      %217 = vmatprep.subr.mxu0 0.0
      %218 = vmatpush1.msra.mxu0 %v196
      %219 = vmatprep.subr.mxu0 0.0
      %220 = vmatpush1.msra.mxu0 %v197
      %221 = vmatprep.subr.mxu0 0.0
      %222 = vmatpush1.msra.mxu0 %v198
      %223 = vmatprep.subr.mxu0 0.0
      %224 = vmatpush1.msra.mxu0 %v199
      %225 = vmatprep.subr.mxu0 0.0
      %226 = vmatpush1.msra.mxu0 %v200
      %227 = vmatprep.subr.mxu0 0.0
      %228 = vmatpush1.msra.mxu0 %v201
      %229 = vmatprep.subr.mxu0 0.0
      %230 = vmatpush1.msra.mxu0 %v202
      %231 = vmatprep.subr.mxu0 0.0
      %232 = vmatpush1.msra.mxu0 %v203
      %233 = vmatprep.subr.mxu0 0.0
      %234 = vmatpush1.msra.mxu0 %v204
      %235 = vmatprep.subr.mxu0 0.0
      %236 = vmatpush1.msra.mxu0 %v205
      %237 = vmatprep.subr.mxu0 0.0
      %238 = vmatpush1.msra.mxu0 %v206
      %239 = vmatprep.subr.mxu0 0.0
      %240 = vmatpush1.msra.mxu0 0.0
      %241 = vmatprep.subr.mxu0 0.0
      %242 = vmatpush1.msra.mxu0 0.0
      %243 = vmatprep.subr.mxu0 0.0
      %244 = vmatpush1.msra.mxu0 0.0
      %245 = vmatprep.subr.mxu0 0.0
      %246 = vmatpush1.msra.mxu0 0.0
      %247 = vmatprep.subr.mxu0 0.0
      %248 = vmatpush1.msra.mxu0 0.0
      %249 = vmatprep.subr.mxu0 0.0
      %250 = vmatpush1.msra.mxu0 0.0
      %251 = vmatprep.subr.mxu0 0.0
      %252 = vmatpush1.msra.mxu0 0.0
      %253 = vmatprep.subr.mxu0 0.0
      %254 = vmatpush1.msra.mxu0 0.0
      %255 = vmatprep.subr.mxu0 0.0
      %256 = vmatpush1.msra.mxu0 0.0
      %257 = vmatprep.subr.mxu0 0.0
      %258 = vmatpush1.msra.mxu0 0.0
      %259 = vmatprep.subr.mxu0 0.0
      %260 = vmatpush1.msra.mxu0 0.0
      %261 = vmatprep.subr.mxu0 0.0
      %262 = vmatpush1.msra.mxu0 0.0
      %263 = vmatprep.subr.mxu0 0.0
      %264 = vmatpush1.msra.mxu0 0.0
      %265 = vmatprep.subr.mxu0 0.0
      %266 = vmatpush1.msra.mxu0 0.0
      %267 = vmatprep.subr.mxu0 0.0
      %268 = vmatpush1.msra.mxu0 0.0
      %269 = vmatprep.subr.mxu0 0.0
      %270 = vmatpush1.msra.mxu0 0.0
      %271 = vmatprep.mubr.f32.mxu0 0.0
      %272 = vmatmul.mubr.f32.gmra.mrb[0].mxu0 %v183
      %v273 = vpop.f32.mrb[0].mxu0
      %v274 = vadd.f32 0.0, %v273
      %v275 = vpop.f32.mrb[0].mxu0
      %276 = vmatprep.mubr.f32.mxu0 0.0
      %277 = vmatmul.mubr.f32.gmra.mrb[0].mxu0 %v184
      %v278 = vpop.f32.mrb[0].mxu0
      %v279 = vadd.f32 0.0, %v278
      %v280 = vpop.f32.mrb[0].mxu0
      %281 = vmatprep.mubr.f32.mxu0 0.0
      %282 = vmatmul.mubr.f32.gmra.mrb[0].mxu0 %v185
      %v283 = vpop.f32.mrb[0].mxu0
      %v284 = vadd.f32 0.0, %v283
      %v285 = vpop.f32.mrb[0].mxu0
      %286 = vmatprep.mubr.f32.mxu0 0.0
      %287 = vmatmul.mubr.f32.gmra.mrb[0].mxu0 %v186
      %v288 = vpop.f32.mrb[0].mxu0
      %v289 = vadd.f32 0.0, %v288
      %v290 = vpop.f32.mrb[0].mxu0
      %291 = vmatprep.mubr.f32.mxu0 0.0
      %292 = vmatmul.mubr.f32.gmra.mrb[0].mxu0 %v187
      %v293 = vpop.f32.mrb[0].mxu0
      %v294 = vadd.f32 0.0, %v293
      %v295 = vpop.f32.mrb[0].mxu0
      %296 = vmatprep.mubr.f32.mxu0 0.0
      %297 = vmatmul.mubr.f32.gmra.mrb[0].mxu0 %v188
      %v298 = vpop.f32.mrb[0].mxu0
      %v299 = vadd.f32 0.0, %v298
      %v300 = vpop.f32.mrb[0].mxu0
      %301 = vmatprep.mubr.f32.mxu0 0.0
      %302 = vmatmul.mubr.f32.gmra.mrb[0].mxu0 %v189
      %v303 = vpop.f32.mrb[0].mxu0
      %v304 = vadd.f32 0.0, %v303
      %v305 = vpop.f32.mrb[0].mxu0
      %306 = vmatprep.mubr.f32.mxu0 0.0
      %307 = vmatmul.mubr.f32.gmra.mrb[0].mxu0 %v190
      %v308 = vpop.f32.mrb[0].mxu0
      %v309 = vadd.f32 0.0, %v308
      %v310 = vpop.f32.mrb[0].mxu0
      %311 = vdwg.mxu0
      %vm312 = vcmask 523264
      %v314 = vsel %vm312, 1.0, 0
      %316 = vmatprep.subr.mxu0 0.0
      %317 = vmatpush1.msra.mxu0 %v274
      %318 = vmatprep.subr.mxu0 0.0
      %319 = vmatpush1.msra.mxu0 %v279
      %320 = vmatprep.subr.mxu0 0.0
      %321 = vmatpush1.msra.mxu0 %v284
      %322 = vmatprep.subr.mxu0 0.0
      %323 = vmatpush1.msra.mxu0 %v289
      %324 = vmatprep.subr.mxu0 0.0
      %325 = vmatpush1.msra.mxu0 %v294
      %326 = vmatprep.subr.mxu0 0.0
      %327 = vmatpush1.msra.mxu0 %v299
      %328 = vmatprep.subr.mxu0 0.0
      %329 = vmatpush1.msra.mxu0 %v304
      %330 = vmatprep.subr.mxu0 0.0
      %331 = vmatpush1.msra.mxu0 %v309
      %332 = vmatprep.subr.mxu0 0.0
      %333 = vmatpush1.msra.mxu0 0.0
      %334 = vmatprep.subr.mxu0 0.0
      %335 = vmatpush1.msra.mxu0 0.0
      %336 = vmatprep.subr.mxu0 0.0
      %337 = vmatpush1.msra.mxu0 0.0
      %338 = vmatprep.subr.mxu0 0.0
      %339 = vmatpush1.msra.mxu0 0.0
      %340 = vmatprep.subr.mxu0 0.0
      %341 = vmatpush1.msra.mxu0 0.0
      %342 = vmatprep.subr.mxu0 0.0
      %343 = vmatpush1.msra.mxu0 0.0
      %344 = vmatprep.subr.mxu0 0.0
      %345 = vmatpush1.msra.mxu0 0.0
      %346 = vmatprep.subr.mxu0 0.0
      %347 = vmatpush1.msra.mxu0 0.0
      %348 = vmatprep.subr.mxu0 0.0
      %349 = vmatpush1.msra.mxu0 0.0
      %350 = vmatprep.subr.mxu0 0.0
      %351 = vmatpush1.msra.mxu0 0.0
      %352 = vmatprep.subr.mxu0 0.0
      %353 = vmatpush1.msra.mxu0 0.0
      %354 = vmatprep.subr.mxu0 0.0
      %355 = vmatpush1.msra.mxu0 0.0
      %356 = vmatprep.subr.mxu0 0.0
      %357 = vmatpush1.msra.mxu0 0.0
      %358 = vmatprep.subr.mxu0 0.0
      %359 = vmatpush1.msra.mxu0 0.0
      %360 = vmatprep.subr.mxu0 0.0
      %361 = vmatpush1.msra.mxu0 0.0
      %362 = vmatprep.subr.mxu0 0.0
      %363 = vmatpush1.msra.mxu0 0.0
      %364 = vmatprep.subr.mxu0 0.0
      %365 = vmatpush1.msra.mxu0 0.0
      %366 = vmatprep.subr.mxu0 0.0
      %367 = vmatpush1.msra.mxu0 0.0
      %368 = vmatprep.subr.mxu0 0.0
      %369 = vmatpush1.msra.mxu0 0.0
      %370 = vmatprep.subr.mxu0 0.0
      %371 = vmatpush1.msra.mxu0 0.0
      %372 = vmatprep.subr.mxu0 0.0
      %373 = vmatpush1.msra.mxu0 0.0
      %374 = vmatprep.subr.mxu0 0.0
      %375 = vmatpush1.msra.mxu0 0.0
      %376 = vmatprep.subr.mxu0 0.0
      %377 = vmatpush1.msra.mxu0 0.0
      %378 = vmatprep.subr.mxu0 0.0
      %379 = vmatpush1.msra.mxu0 0.0
      %380 = vmatprep.mubr.f32.mxu0 0.0
      %381 = vmatmul.mubr.f32.gmra.mrb[0].mxu0 %v314
      %v382 = vpop.f32.mrb[0].mxu0
      %v383 = vadd.f32 0.0, %v382
      %v384 = vpop.f32.mrb[0].mxu0
      %385 = vdwg.mxu0
      %v386 = vmul.f32 %v274, %v274
      %v387 = vmul.f32 %v279, %v279
      %v388 = vmul.f32 %v284, %v284
      %v389 = vmul.f32 %v289, %v289
      %v390 = vmul.f32 %v294, %v294
      %v391 = vmul.f32 %v299, %v299
      %v392 = vmul.f32 %v304, %v304
      %v393 = vmul.f32 %v309, %v309
      %394 = vmatprep.subr.mxu0 0.0
      %395 = vmatpush1.msra.mxu0 %v386
      %396 = vmatprep.subr.mxu0 0.0
      %397 = vmatpush1.msra.mxu0 %v387
      %398 = vmatprep.subr.mxu0 0.0
      %399 = vmatpush1.msra.mxu0 %v388
      %400 = vmatprep.subr.mxu0 0.0
      %401 = vmatpush1.msra.mxu0 %v389
      %402 = vmatprep.subr.mxu0 0.0
      %403 = vmatpush1.msra.mxu0 %v390
      %404 = vmatprep.subr.mxu0 0.0
      %405 = vmatpush1.msra.mxu0 %v391
      %406 = vmatprep.subr.mxu0 0.0
      %407 = vmatpush1.msra.mxu0 %v392
      %408 = vmatprep.subr.mxu0 0.0
      %409 = vmatpush1.msra.mxu0 %v393
      %410 = vmatprep.subr.mxu0 0.0
      %411 = vmatpush1.msra.mxu0 0.0
      %412 = vmatprep.subr.mxu0 0.0
      %413 = vmatpush1.msra.mxu0 0.0
      %414 = vmatprep.subr.mxu0 0.0
      %415 = vmatpush1.msra.mxu0 0.0
      %416 = vmatprep.subr.mxu0 0.0
      %417 = vmatpush1.msra.mxu0 0.0
      %418 = vmatprep.subr.mxu0 0.0
      %419 = vmatpush1.msra.mxu0 0.0
      %420 = vmatprep.subr.mxu0 0.0
      %421 = vmatpush1.msra.mxu0 0.0
      %422 = vmatprep.subr.mxu0 0.0
      %423 = vmatpush1.msra.mxu0 0.0
      %424 = vmatprep.subr.mxu0 0.0
      %425 = vmatpush1.msra.mxu0 0.0
      %426 = vmatprep.subr.mxu0 0.0
      %427 = vmatpush1.msra.mxu0 0.0
      %428 = vmatprep.subr.mxu0 0.0
      %429 = vmatpush1.msra.mxu0 0.0
      %430 = vmatprep.subr.mxu0 0.0
      %431 = vmatpush1.msra.mxu0 0.0
      %432 = vmatprep.subr.mxu0 0.0
      %433 = vmatpush1.msra.mxu0 0.0
      %434 = vmatprep.subr.mxu0 0.0
      %435 = vmatpush1.msra.mxu0 0.0
      %436 = vmatprep.subr.mxu0 0.0
      %437 = vmatpush1.msra.mxu0 0.0
      %438 = vmatprep.subr.mxu0 0.0
      %439 = vmatpush1.msra.mxu0 0.0
      %440 = vmatprep.subr.mxu0 0.0
      %441 = vmatpush1.msra.mxu0 0.0
      %442 = vmatprep.subr.mxu0 0.0
      %443 = vmatpush1.msra.mxu0 0.0
      %444 = vmatprep.subr.mxu0 0.0
      %445 = vmatpush1.msra.mxu0 0.0
      %446 = vmatprep.subr.mxu0 0.0
      %447 = vmatpush1.msra.mxu0 0.0
      %448 = vmatprep.subr.mxu0 0.0
      %449 = vmatpush1.msra.mxu0 0.0
      %450 = vmatprep.subr.mxu0 0.0
      %451 = vmatpush1.msra.mxu0 0.0
      %452 = vmatprep.subr.mxu0 0.0
      %453 = vmatpush1.msra.mxu0 0.0
      %454 = vmatprep.subr.mxu0 0.0
      %455 = vmatpush1.msra.mxu0 0.0
      %456 = vmatprep.subr.mxu0 0.0
      %457 = vmatpush1.msra.mxu0 0.0
      %458 = vmatprep.mubr.f32.mxu0 0.0
      %459 = vmatmul.mubr.f32.gmra.mrb[0].mxu0 %v314
      %v460 = vpop.f32.mrb[0].mxu0
      %v461 = vadd.f32 0.0, %v460
      %v462 = vpop.f32.mrb[0].mxu0
      %463 = vdwg.mxu0
      %465 = vrot.lane.b32.xlu0 %v461, 32
      %v466 = vpop.permute.xlu0 %465
      %vm468 = vcmask 261120
      %v469 = vsel %vm468, %v383, %v466
      %vm470 = vcmask 516096
      %471 = vst.msk [vmem:[%s182] sm:$0x1] %vm470, %v469
      %472 = vst.msk [vmem:[%s178] sm:$0xff] %vm468, %v274
      %473 = vst.msk [vmem:[%s178 + $0x8] sm:$0xff] %vm468, %v279
      %474 = vst.msk [vmem:[%s178 + $0x10] sm:$0xff] %vm468, %v284
      %475 = vst.msk [vmem:[%s178 + $0x18] sm:$0xff] %vm468, %v289
      %476 = vst.msk [vmem:[%s178 + $0x20] sm:$0xff] %vm468, %v294
      %477 = vst.msk [vmem:[%s178 + $0x28] sm:$0xff] %vm468, %v299
      %478 = vst.msk [vmem:[%s178 + $0x30] sm:$0xff] %vm468, %v304
      %479 = vst.msk [vmem:[%s178 + $0x38] sm:$0xff] %vm468, %v309
      %s480 = smul.u32 8, %s15
      %p481 = scmp.lt.s32.totalorder %s480, 15
      %s482 = scalar_select %p481, %s480, 15
      %s483 = smul.addr %s482, 8
      %s484 = scalar_lea.vmem %s2, %s483
      %p485 = scmp.lt.s32.totalorder %s15, 1
      %s486 = scalar_select %p485, %s15, 1
      %s487 = scalar_lea.vmem %s3, %s486
      // Predicated region
      $region29: #{bottleneck_forward.4} parent=27 // pred_check
        %p488 = pneg %p80
      $region30: #{bottleneck_forward.4} parent=27 // pred_check_branch
        %490 = sbr.rel (%p488) target = $region32
      $region31: #{bottleneck_forward.4} parent=27 // pred_region
        %s491 = smul.u32 8, %s15
      $region32: #{bottleneck_forward.4} parent=27 // pred_fallthru
        _
      // Predicated region
      $region33: #{bottleneck_forward.4} parent=27 // pred_check
        %p492 = pneg %p106
      $region34: #{bottleneck_forward.4} parent=27 // pred_check_branch
        %494 = sbr.rel (%p492) target = $region36
      $region35: #{bottleneck_forward.4} parent=27 // pred_region
        _
      $region36: #{bottleneck_forward.4} parent=27 // pred_fallthru
        _
    $region28: #{bottleneck_forward.4} parent=5 // pred_fallthru
      _
    %p495 = scmp.le.s32.totalorder 2, %s10
    // Predicated region
    $region37: #{bottleneck_forward.4} parent=5 // pred_check
      %p496 = pneg %p495
    $region38: #{bottleneck_forward.4} parent=5 // pred_check_branch
      %498 = sbr.rel (%p496) target = $region40
    $region39: #{bottleneck_forward.4} parent=5 // pred_region
      %s499 = ssub.s32 %s10, 2
      // Predicated region
      $region41: #{bottleneck_forward.4} parent=39 // pred_check
        %p500 = pneg %p86
      $region42: #{bottleneck_forward.4} parent=39 // pred_check_branch
        %502 = sbr.rel (%p500) target = $region44
      $region43: #{bottleneck_forward.4} parent=39 // pred_region
        %s503 = smul.u32 8, %s16
        %p504 = scmp.lt.s32.totalorder %s503, 15
        %s505 = scalar_select %p504, %s503, 15
        %s506 = smul.addr %s505, 8
        %s507 = scalar_lea.vmem %s2, %s506
      $region44: #{bottleneck_forward.4} parent=39 // pred_fallthru
        _
      // Predicated region
      $region45: #{bottleneck_forward.4} parent=39 // pred_check
        %p508 = pneg %p112
      $region46: #{bottleneck_forward.4} parent=39 // pred_check_branch
        %510 = sbr.rel (%p508) target = $region48
      $region47: #{bottleneck_forward.4} parent=39 // pred_region
        %p511 = scmp.lt.s32.totalorder %s16, 1
        %s512 = scalar_select %p511, %s16, 1
        %s513 = scalar_lea.vmem %s3, %s512
      $region48: #{bottleneck_forward.4} parent=39 // pred_fallthru
        _
    $region40: #{bottleneck_forward.4} parent=5 // pred_fallthru
      _
  $region6: #{bottleneck_forward.4} parent=0 // loop_footer
    %s14 = sadd.s32 1, %s10
  $region7: #{bottleneck_forward.4} parent=0 // loop_footer_branch
    %9 = sbr.rel target = $region3
  $region8: #{bottleneck_forward.4} parent=0 // loop_exit
    _

// kernel: bottleneck_forward.6
$region0: #{bottleneck_forward.6}
  #allocation0 [shape = 'u32[]', space=smem, size = 0x4, offset = 0x4, fixed_abs, tag = 'smem constant byte address 0x4 - core index']
  #allocation1 [shape = 'u32[144,128]{1,0:T(1,128)}', space=vmem, size = 0x12000, scoped, tag = 'internal scratch']
  %s0 = inlined_call_operand.vmem [shape: f32[128,32], index: 0, kind: input, shape index: {}]
  %s1 = inlined_call_operand.vmem [shape: f32[1,32], index: 1, kind: input, shape index: {}]
  %s2 = inlined_call_operand.vmem [shape: f32[1,32], index: 2, kind: input, shape index: {}]
  %s3 = inlined_call_operand.vmem [shape: f32[32,128], index: 3, kind: input, shape index: {}]
  %s4 = inlined_call_operand.vmem [shape: f32[2,1,256], index: 4, kind: output, shape index: {}]
  %s5 = sld [smem:[#allocation0]]
  $region49: #{bottleneck_forward.6} parent=0
    _
  %s7 = ssub.s32 1, %s5
  %s8 = scalar_select 0, %s7, %s5
  loop: start=0, step=1, limit=4
  $region2: #{bottleneck_forward.6} parent=0 // loop_pre_header
    _
  $region3: #{bottleneck_forward.6} parent=0 // loop_header
    %s10 = sphi 0, %s14
    %p11 = scmp.ge.s32.totalorder %s10, 4
    %s20 = sphi 0, %s22
    %s23 = sphi 0, %s20
    %s24 = sphi 0, %s23
    %s40 = sphi 0, %s24
    %s44 = sphi 0, %s44
    %s46 = sphi 0, %s44
    %s47 = sphi 0, %s46
    %s61 = sphi 0, %s47
    %s65 = sphi 0, %s65
    %s67 = sphi 0, %s65
    %s68 = sphi 0, %s67
    %s82 = sphi 0, %s68
    %s86 = sphi 0, %s86
    %s88 = sphi 0, %s86
    %s89 = sphi 0, %s88
    %s103 = sphi 0, %s89
    %s109 = sphi 0, %s111
    %s112 = sphi 0, %s109
    %s113 = sphi 0, %s112
    %s129 = sphi 0, %s113
  $region4: #{bottleneck_forward.6} parent=0 // loop_header_branch
    %13 = sbr.rel (%p11) target = $region8
  $region5: #{bottleneck_forward.6} parent=0 // loop_body
    %s15 = ssub.s32 %s10, 1
    %s16 = ssub.s32 %s10, 2
    %s17 = sadd.s32 %s10, 1
    %s18 = ssub.s32 %s10, %s17
    %p19 = scmp.eq.s32.totalorder %s18, 0
    %s21 = sadd.s32 %s20, 1
    %s22 = scalar_select %p19, %s20, %s21
    %p25 = pneg %p19
    %p26 = scmp.eq.s32.totalorder %s10, 1
    %p27 = por %p25, %p26
    %p28 = scmp.ne.s32.totalorder %s20, %s23
    %p29 = scmp.eq.s32.totalorder %s10, 0
    %p30 = por %p28, %p29
    %p31 = scmp.ne.s32.totalorder %s20, %s23
    %p32 = scmp.eq.s32.totalorder %s15, 1
    %p33 = por %p31, %p32
    %p34 = scmp.ne.s32.totalorder %s23, %s24
    %p35 = scmp.eq.s32.totalorder %s15, 0
    %p36 = por %p34, %p35
    %p37 = scmp.ne.s32.totalorder %s23, %s24
    %p38 = scmp.eq.s32.totalorder %s16, 1
    %p39 = por %p37, %p38
    %p41 = scmp.ne.s32.totalorder %s24, %s40
    %p42 = scmp.eq.s32.totalorder %s16, 0
    %p43 = por %p41, %p42
    %s45 = sadd.s32 %s44, 1
    %p48 = scmp.eq.s32.totalorder %s10, 1
    %p49 = scmp.ne.s32.totalorder %s44, %s46
    %p50 = scmp.eq.s32.totalorder %s10, 0
    %p51 = por %p49, %p50
    %p52 = scmp.ne.s32.totalorder %s44, %s46
    %p53 = scmp.eq.s32.totalorder %s15, 1
    %p54 = por %p52, %p53
    %p55 = scmp.ne.s32.totalorder %s46, %s47
    %p56 = scmp.eq.s32.totalorder %s15, 0
    %p57 = por %p55, %p56
    %p58 = scmp.ne.s32.totalorder %s46, %s47
    %p59 = scmp.eq.s32.totalorder %s16, 1
    %p60 = por %p58, %p59
    %p62 = scmp.ne.s32.totalorder %s47, %s61
    %p63 = scmp.eq.s32.totalorder %s16, 0
    %p64 = por %p62, %p63
    %s66 = sadd.s32 %s65, 1
    %p69 = scmp.eq.s32.totalorder %s10, 1
    %p70 = scmp.ne.s32.totalorder %s65, %s67
    %p71 = scmp.eq.s32.totalorder %s10, 0
    %p72 = por %p70, %p71
    %p73 = scmp.ne.s32.totalorder %s65, %s67
    %p74 = scmp.eq.s32.totalorder %s15, 1
    %p75 = por %p73, %p74
    %p76 = scmp.ne.s32.totalorder %s67, %s68
    %p77 = scmp.eq.s32.totalorder %s15, 0
    %p78 = por %p76, %p77
    %p79 = scmp.ne.s32.totalorder %s67, %s68
    %p80 = scmp.eq.s32.totalorder %s16, 1
    %p81 = por %p79, %p80
    %p83 = scmp.ne.s32.totalorder %s68, %s82
    %p84 = scmp.eq.s32.totalorder %s16, 0
    %p85 = por %p83, %p84
    %s87 = sadd.s32 %s86, 1
    %p90 = scmp.eq.s32.totalorder %s10, 1
    %p91 = scmp.ne.s32.totalorder %s86, %s88
    %p92 = scmp.eq.s32.totalorder %s10, 0
    %p93 = por %p91, %p92
    %p94 = scmp.ne.s32.totalorder %s86, %s88
    %p95 = scmp.eq.s32.totalorder %s15, 1
    %p96 = por %p94, %p95
    %p97 = scmp.ne.s32.totalorder %s88, %s89
    %p98 = scmp.eq.s32.totalorder %s15, 0
    %p99 = por %p97, %p98
    %p100 = scmp.ne.s32.totalorder %s88, %s89
    %p101 = scmp.eq.s32.totalorder %s16, 1
    %p102 = por %p100, %p101
    %p104 = scmp.ne.s32.totalorder %s89, %s103
    %p105 = scmp.eq.s32.totalorder %s16, 0
    %p106 = por %p104, %p105
    %s107 = ssub.s32 %s10, %s17
    %p108 = scmp.eq.s32.totalorder %s107, 0
    %s110 = sadd.s32 %s109, 1
    %s111 = scalar_select %p108, %s109, %s110
    %p114 = pneg %p108
    %p115 = scmp.eq.s32.totalorder %s10, 1
    %p116 = por %p114, %p115
    %p117 = scmp.ne.s32.totalorder %s109, %s112
    %p118 = scmp.eq.s32.totalorder %s10, 0
    %p119 = por %p117, %p118
    %p120 = scmp.ne.s32.totalorder %s109, %s112
    %p121 = scmp.eq.s32.totalorder %s15, 1
    %p122 = por %p120, %p121
    %p123 = scmp.ne.s32.totalorder %s112, %s113
    %p124 = scmp.eq.s32.totalorder %s15, 0
    %p125 = por %p123, %p124
    %p126 = scmp.ne.s32.totalorder %s112, %s113
    %p127 = scmp.eq.s32.totalorder %s16, 1
    %p128 = por %p126, %p127
    %p130 = scmp.ne.s32.totalorder %s113, %s129
    %p131 = scmp.eq.s32.totalorder %s16, 0
    %p132 = por %p130, %p131
    %p133 = scmp.le.s32.totalorder 1, %s10
    %p134 = scmp.lt.s32.totalorder %s10, 3
    %p135 = pnand %p133, %p134
    %p136 = pneg %p135
    // Predicated region
    $region9: #{bottleneck_forward.6} parent=5 // pred_check
      _
    $region10: #{bottleneck_forward.6} parent=5 // pred_check_branch
      %138 = sbr.rel (%p135) target = $region12
    $region11: #{bottleneck_forward.6} parent=5 // pred_region
      %s139 = ssub.s32 %s10, 1
      // Predicated region
      $region13: #{bottleneck_forward.6} parent=11 // pred_check
        %p140 = pneg %p57
      $region14: #{bottleneck_forward.6} parent=11 // pred_check_branch
        %142 = sbr.rel (%p140) target = $region16
      $region15: #{bottleneck_forward.6} parent=11 // pred_region
        _
      $region16: #{bottleneck_forward.6} parent=11 // pred_fallthru
        _
      // Predicated region
      $region17: #{bottleneck_forward.6} parent=11 // pred_check
        %p143 = pneg %p78
      $region18: #{bottleneck_forward.6} parent=11 // pred_check_branch
        %145 = sbr.rel (%p143) target = $region20
      $region19: #{bottleneck_forward.6} parent=11 // pred_region
        _
      $region20: #{bottleneck_forward.6} parent=11 // pred_fallthru
        _
      // Predicated region
      $region21: #{bottleneck_forward.6} parent=11 // pred_check
        %p146 = pneg %p99
      $region22: #{bottleneck_forward.6} parent=11 // pred_check_branch
        %148 = sbr.rel (%p146) target = $region24
      $region23: #{bottleneck_forward.6} parent=11 // pred_region
        _
      $region24: #{bottleneck_forward.6} parent=11 // pred_fallthru
        _
    $region12: #{bottleneck_forward.6} parent=5 // pred_fallthru
      _
    %p149 = scmp.lt.s32.totalorder %s10, 2
    // Predicated region
    $region25: #{bottleneck_forward.6} parent=5 // pred_check
      %p150 = pneg %p149
    $region26: #{bottleneck_forward.6} parent=5 // pred_check_branch
      %152 = sbr.rel (%p150) target = $region28
    $region27: #{bottleneck_forward.6} parent=5 // pred_region
      // Predicated region
      $region29: #{bottleneck_forward.6} parent=27 // pred_check
        %p153 = pneg %p30
      $region30: #{bottleneck_forward.6} parent=27 // pred_check_branch
        %155 = sbr.rel (%p153) target = $region32
      $region31: #{bottleneck_forward.6} parent=27 // pred_region
        %s156 = smul.u32 8, %s10
        %p157 = scmp.lt.s32.totalorder %s156, 15
        %s158 = scalar_select %p157, %s156, 15
        %s159 = smul.addr %s158, 8
        %s160 = scalar_lea.vmem %s0, %s159
        %s161 = smul.u32 8, %s10
      $region32: #{bottleneck_forward.6} parent=27 // pred_fallthru
        _
    $region28: #{bottleneck_forward.6} parent=5 // pred_fallthru
      _
    %p162 = scmp.le.s32.totalorder 1, %s10
    %p163 = scmp.lt.s32.totalorder %s10, 3
    %p164 = pnand %p162, %p163
    %p165 = pneg %p164
    // Predicated region
    $region33: #{bottleneck_forward.6} parent=5 // pred_check
      _
    $region34: #{bottleneck_forward.6} parent=5 // pred_check_branch
      %167 = sbr.rel (%p164) target = $region36
    $region35: #{bottleneck_forward.6} parent=5 // pred_region
      %s168 = ssub.s32 %s10, 1
      %s169 = smul.u32 8, %s15
      %p170 = scmp.lt.s32.totalorder %s169, 15
      %s171 = scalar_select %p170, %s169, 15
      %s172 = smul.addr %s171, 8
      %s173 = scalar_lea.vmem %s0, %s172
      %p174 = pneg %p36
      %p175 = pneg %p33
      %p176 = pneg %p57
      %p177 = pneg %p54
      %p178 = pneg %p78
      %p179 = pneg %p75
      %p180 = pneg %p99
      %p181 = pneg %p96
      %p182 = pneg %p125
      %p183 = pneg %p122
      %p184 = scmp.lt.s32.totalorder %s15, 1
      %s185 = scalar_select %p184, %s15, 1
      %s186 = smul.addr %s185, 2
      %s187 = scalar_lea.vmem %s4, %s186
      %s188 = smul.u32 8, %s15
      %p189 = scmp.lt.s32.totalorder %s188, 15
      %s190 = scalar_select %p189, %s188, 15
      %s191 = smul.addr %s190, 8
      %s192 = scalar_lea.vmem %s0, %s191
      %s193 = smul.u32 8, %s15
      %p194 = scmp.lt.s32.totalorder %s15, 1
      %s195 = scalar_select %p194, %s15, 1
      %s196 = smul.addr %s195, 2
      %s197 = scalar_lea.vmem %s4, %s196
      %v198 = vld [vmem:[%s192] sm:$0xff]
      %v199 = vld [vmem:[%s192 + $0x8] sm:$0xff]
      %v200 = vld [vmem:[%s192 + $0x10] sm:$0xff]
      %v201 = vld [vmem:[%s192 + $0x18] sm:$0xff]
      %v202 = vld [vmem:[%s192 + $0x20] sm:$0xff]
      %v203 = vld [vmem:[%s192 + $0x28] sm:$0xff]
      %v204 = vld [vmem:[%s192 + $0x30] sm:$0xff]
      %v205 = vld [vmem:[%s192 + $0x38] sm:$0xff]
      %v206 = vld [vmem:[%s1] sm:$0x1]
      %v208 = vlaneseq
      %v209 = vshrl.u32 %v208, 7
      %v210 = vsub.s32 0, %v209
      %v211 = vrot.slane %v206, %v210
      %v213 = vmul.f32 %v198, %v211
      %v214 = vmul.f32 %v199, %v211
      %v215 = vmul.f32 %v200, %v211
      %v216 = vmul.f32 %v201, %v211
      %v217 = vmul.f32 %v202, %v211
      %v218 = vmul.f32 %v203, %v211
      %v219 = vmul.f32 %v204, %v211
      %v220 = vmul.f32 %v205, %v211
      %v221 = vld [vmem:[%s2] sm:$0x1]
      %v223 = vlaneseq
      %v224 = vshrl.u32 %v223, 7
      %v225 = vsub.s32 0, %v224
      %v226 = vrot.slane %v221, %v225
      %v228 = vadd.f32 %v213, %v226
      %v229 = vadd.f32 %v214, %v226
      %v230 = vadd.f32 %v215, %v226
      %v231 = vadd.f32 %v216, %v226
      %v232 = vadd.f32 %v217, %v226
      %v233 = vadd.f32 %v218, %v226
      %v234 = vadd.f32 %v219, %v226
      %v235 = vadd.f32 %v220, %v226
      %v236 = vmax.f32 %v228, 0.0
      %v237 = vmax.f32 %v229, 0.0
      %v238 = vmax.f32 %v230, 0.0
      %v239 = vmax.f32 %v231, 0.0
      %v240 = vmax.f32 %v232, 0.0
      %v241 = vmax.f32 %v233, 0.0
      %v242 = vmax.f32 %v234, 0.0
      %v243 = vmax.f32 %v235, 0.0
      %v244 = vld [vmem:[%s3] sm:$0xff]
      %v245 = vld [vmem:[%s3 + $0x8] sm:$0xff]
      %v246 = vld [vmem:[%s3 + $0x10] sm:$0xff]
      %v247 = vld [vmem:[%s3 + $0x18] sm:$0xff]
      %vm248 = vcmask 261120
      %v250 = vsel %vm248, %v236, 0
      %v253 = vsel %vm248, %v237, 0
      %v256 = vsel %vm248, %v238, 0
      %v259 = vsel %vm248, %v239, 0
      %v262 = vsel %vm248, %v240, 0
      %v265 = vsel %vm248, %v241, 0
      %v268 = vsel %vm248, %v242, 0
      %v271 = vsel %vm248, %v243, 0
      %273 = vmatprep.subr.mxu0 0.0
      %274 = vmatpush1.msra.mxu0 %v244
      %275 = vmatprep.subr.mxu0 0.0
      %276 = vmatpush1.msra.mxu0 %v245
      %277 = vmatprep.subr.mxu0 0.0
      %278 = vmatpush1.msra.mxu0 %v246
      %279 = vmatprep.subr.mxu0 0.0
      %280 = vmatpush1.msra.mxu0 %v247
      %281 = vmatprep.subr.mxu0 0.0
      %282 = vmatpush1.msra.mxu0 0.0
      %283 = vmatprep.subr.mxu0 0.0
      %284 = vmatpush1.msra.mxu0 0.0
      %285 = vmatprep.subr.mxu0 0.0
      %286 = vmatpush1.msra.mxu0 0.0
      %287 = vmatprep.subr.mxu0 0.0
      %288 = vmatpush1.msra.mxu0 0.0
      %289 = vmatprep.subr.mxu0 0.0
      %290 = vmatpush1.msra.mxu0 0.0
      %291 = vmatprep.subr.mxu0 0.0
      %292 = vmatpush1.msra.mxu0 0.0
      %293 = vmatprep.subr.mxu0 0.0
      %294 = vmatpush1.msra.mxu0 0.0
      %295 = vmatprep.subr.mxu0 0.0
      %296 = vmatpush1.msra.mxu0 0.0
      %297 = vmatprep.subr.mxu0 0.0
      %298 = vmatpush1.msra.mxu0 0.0
      %299 = vmatprep.subr.mxu0 0.0
      %300 = vmatpush1.msra.mxu0 0.0
      %301 = vmatprep.subr.mxu0 0.0
      %302 = vmatpush1.msra.mxu0 0.0
      %303 = vmatprep.subr.mxu0 0.0
      %304 = vmatpush1.msra.mxu0 0.0
      %305 = vmatprep.subr.mxu0 0.0
      %306 = vmatpush1.msra.mxu0 0.0
      %307 = vmatprep.subr.mxu0 0.0
      %308 = vmatpush1.msra.mxu0 0.0
      %309 = vmatprep.subr.mxu0 0.0
      %310 = vmatpush1.msra.mxu0 0.0
      %311 = vmatprep.subr.mxu0 0.0
      %312 = vmatpush1.msra.mxu0 0.0
      %313 = vmatprep.subr.mxu0 0.0
      %314 = vmatpush1.msra.mxu0 0.0
      %315 = vmatprep.subr.mxu0 0.0
      %316 = vmatpush1.msra.mxu0 0.0
      %317 = vmatprep.subr.mxu0 0.0
      %318 = vmatpush1.msra.mxu0 0.0
      %319 = vmatprep.subr.mxu0 0.0
      %320 = vmatpush1.msra.mxu0 0.0
      %321 = vmatprep.subr.mxu0 0.0
      %322 = vmatpush1.msra.mxu0 0.0
      %323 = vmatprep.subr.mxu0 0.0
      %324 = vmatpush1.msra.mxu0 0.0
      %325 = vmatprep.subr.mxu0 0.0
      %326 = vmatpush1.msra.mxu0 0.0
      %327 = vmatprep.subr.mxu0 0.0
      %328 = vmatpush1.msra.mxu0 0.0
      %329 = vmatprep.subr.mxu0 0.0
      %330 = vmatpush1.msra.mxu0 0.0
      %331 = vmatprep.subr.mxu0 0.0
      %332 = vmatpush1.msra.mxu0 0.0
      %333 = vmatprep.subr.mxu0 0.0
      %334 = vmatpush1.msra.mxu0 0.0
      %335 = vmatprep.subr.mxu0 0.0
      %336 = vmatpush1.msra.mxu0 0.0
      %337 = vmatprep.mubr.f32.mxu0 0.0
      %338 = vmatmul.mubr.f32.gmra.mrb[0].mxu0 %v250
      %v339 = vpop.f32.mrb[0].mxu0
      %v340 = vadd.f32 0.0, %v339
      %v341 = vpop.f32.mrb[0].mxu0
      %342 = vmatprep.mubr.f32.mxu0 0.0
      %343 = vmatmul.mubr.f32.gmra.mrb[0].mxu0 %v253
      %v344 = vpop.f32.mrb[0].mxu0
      %v345 = vadd.f32 0.0, %v344
      %v346 = vpop.f32.mrb[0].mxu0
      %347 = vmatprep.mubr.f32.mxu0 0.0
      %348 = vmatmul.mubr.f32.gmra.mrb[0].mxu0 %v256
      %v349 = vpop.f32.mrb[0].mxu0
      %v350 = vadd.f32 0.0, %v349
      %v351 = vpop.f32.mrb[0].mxu0
      %352 = vmatprep.mubr.f32.mxu0 0.0
      %353 = vmatmul.mubr.f32.gmra.mrb[0].mxu0 %v259
      %v354 = vpop.f32.mrb[0].mxu0
      %v355 = vadd.f32 0.0, %v354
      %v356 = vpop.f32.mrb[0].mxu0
      %357 = vmatprep.mubr.f32.mxu0 0.0
      %358 = vmatmul.mubr.f32.gmra.mrb[0].mxu0 %v262
      %v359 = vpop.f32.mrb[0].mxu0
      %v360 = vadd.f32 0.0, %v359
      %v361 = vpop.f32.mrb[0].mxu0
      %362 = vmatprep.mubr.f32.mxu0 0.0
      %363 = vmatmul.mubr.f32.gmra.mrb[0].mxu0 %v265
      %v364 = vpop.f32.mrb[0].mxu0
      %v365 = vadd.f32 0.0, %v364
      %v366 = vpop.f32.mrb[0].mxu0
      %367 = vmatprep.mubr.f32.mxu0 0.0
      %368 = vmatmul.mubr.f32.gmra.mrb[0].mxu0 %v268
      %v369 = vpop.f32.mrb[0].mxu0
      %v370 = vadd.f32 0.0, %v369
      %v371 = vpop.f32.mrb[0].mxu0
      %372 = vmatprep.mubr.f32.mxu0 0.0
      %373 = vmatmul.mubr.f32.gmra.mrb[0].mxu0 %v271
      %v374 = vpop.f32.mrb[0].mxu0
      %v375 = vadd.f32 0.0, %v374
      %v376 = vpop.f32.mrb[0].mxu0
      %377 = vdwg.mxu0
      %vm378 = vcmask 523264
      %v380 = vsel %vm378, 1.0, 0
      %382 = vmatprep.subr.mxu0 0.0
      %383 = vmatpush1.msra.mxu0 %v340
      %384 = vmatprep.subr.mxu0 0.0
      %385 = vmatpush1.msra.mxu0 %v345
      %386 = vmatprep.subr.mxu0 0.0
      %387 = vmatpush1.msra.mxu0 %v350
      %388 = vmatprep.subr.mxu0 0.0
      %389 = vmatpush1.msra.mxu0 %v355
      %390 = vmatprep.subr.mxu0 0.0
      %391 = vmatpush1.msra.mxu0 %v360
      %392 = vmatprep.subr.mxu0 0.0
      %393 = vmatpush1.msra.mxu0 %v365
      %394 = vmatprep.subr.mxu0 0.0
      %395 = vmatpush1.msra.mxu0 %v370
      %396 = vmatprep.subr.mxu0 0.0
      %397 = vmatpush1.msra.mxu0 %v375
      %398 = vmatprep.subr.mxu0 0.0
      %399 = vmatpush1.msra.mxu0 0.0
      %400 = vmatprep.subr.mxu0 0.0
      %401 = vmatpush1.msra.mxu0 0.0
      %402 = vmatprep.subr.mxu0 0.0
      %403 = vmatpush1.msra.mxu0 0.0
      %404 = vmatprep.subr.mxu0 0.0
      %405 = vmatpush1.msra.mxu0 0.0
      %406 = vmatprep.subr.mxu0 0.0
      %407 = vmatpush1.msra.mxu0 0.0
      %408 = vmatprep.subr.mxu0 0.0
      %409 = vmatpush1.msra.mxu0 0.0
      %410 = vmatprep.subr.mxu0 0.0
      %411 = vmatpush1.msra.mxu0 0.0
      %412 = vmatprep.subr.mxu0 0.0
      %413 = vmatpush1.msra.mxu0 0.0
      %414 = vmatprep.subr.mxu0 0.0
      %415 = vmatpush1.msra.mxu0 0.0
      %416 = vmatprep.subr.mxu0 0.0
      %417 = vmatpush1.msra.mxu0 0.0
      %418 = vmatprep.subr.mxu0 0.0
      %419 = vmatpush1.msra.mxu0 0.0
      %420 = vmatprep.subr.mxu0 0.0
      %421 = vmatpush1.msra.mxu0 0.0
      %422 = vmatprep.subr.mxu0 0.0
      %423 = vmatpush1.msra.mxu0 0.0
      %424 = vmatprep.subr.mxu0 0.0
      %425 = vmatpush1.msra.mxu0 0.0
      %426 = vmatprep.subr.mxu0 0.0
      %427 = vmatpush1.msra.mxu0 0.0
      %428 = vmatprep.subr.mxu0 0.0
      %429 = vmatpush1.msra.mxu0 0.0
      %430 = vmatprep.subr.mxu0 0.0
      %431 = vmatpush1.msra.mxu0 0.0
      %432 = vmatprep.subr.mxu0 0.0
      %433 = vmatpush1.msra.mxu0 0.0
      %434 = vmatprep.subr.mxu0 0.0
      %435 = vmatpush1.msra.mxu0 0.0
      %436 = vmatprep.subr.mxu0 0.0
      %437 = vmatpush1.msra.mxu0 0.0
      %438 = vmatprep.subr.mxu0 0.0
      %439 = vmatpush1.msra.mxu0 0.0
      %440 = vmatprep.subr.mxu0 0.0
      %441 = vmatpush1.msra.mxu0 0.0
      %442 = vmatprep.subr.mxu0 0.0
      %443 = vmatpush1.msra.mxu0 0.0
      %444 = vmatprep.subr.mxu0 0.0
      %445 = vmatpush1.msra.mxu0 0.0
      %446 = vmatprep.mubr.f32.mxu0 0.0
      %447 = vmatmul.mubr.f32.gmra.mrb[0].mxu0 %v380
      %v448 = vpop.f32.mrb[0].mxu0
      %v449 = vadd.f32 0.0, %v448
      %v450 = vpop.f32.mrb[0].mxu0
      %451 = vdwg.mxu0
      %v452 = vmul.f32 %v340, %v340
      %v453 = vmul.f32 %v345, %v345
      %v454 = vmul.f32 %v350, %v350
      %v455 = vmul.f32 %v355, %v355
      %v456 = vmul.f32 %v360, %v360
      %v457 = vmul.f32 %v365, %v365
      %v458 = vmul.f32 %v370, %v370
      %v459 = vmul.f32 %v375, %v375
      %460 = vmatprep.subr.mxu0 0.0
      %461 = vmatpush1.msra.mxu0 %v452
      %462 = vmatprep.subr.mxu0 0.0
      %463 = vmatpush1.msra.mxu0 %v453
      %464 = vmatprep.subr.mxu0 0.0
      %465 = vmatpush1.msra.mxu0 %v454
      %466 = vmatprep.subr.mxu0 0.0
      %467 = vmatpush1.msra.mxu0 %v455
      %468 = vmatprep.subr.mxu0 0.0
      %469 = vmatpush1.msra.mxu0 %v456
      %470 = vmatprep.subr.mxu0 0.0
      %471 = vmatpush1.msra.mxu0 %v457
      %472 = vmatprep.subr.mxu0 0.0
      %473 = vmatpush1.msra.mxu0 %v458
      %474 = vmatprep.subr.mxu0 0.0
      %475 = vmatpush1.msra.mxu0 %v459
      %476 = vmatprep.subr.mxu0 0.0
      %477 = vmatpush1.msra.mxu0 0.0
      %478 = vmatprep.subr.mxu0 0.0
      %479 = vmatpush1.msra.mxu0 0.0
      %480 = vmatprep.subr.mxu0 0.0
      %481 = vmatpush1.msra.mxu0 0.0
      %482 = vmatprep.subr.mxu0 0.0
      %483 = vmatpush1.msra.mxu0 0.0
      %484 = vmatprep.subr.mxu0 0.0
      %485 = vmatpush1.msra.mxu0 0.0
      %486 = vmatprep.subr.mxu0 0.0
      %487 = vmatpush1.msra.mxu0 0.0
      %488 = vmatprep.subr.mxu0 0.0
      %489 = vmatpush1.msra.mxu0 0.0
      %490 = vmatprep.subr.mxu0 0.0
      %491 = vmatpush1.msra.mxu0 0.0
      %492 = vmatprep.subr.mxu0 0.0
      %493 = vmatpush1.msra.mxu0 0.0
      %494 = vmatprep.subr.mxu0 0.0
      %495 = vmatpush1.msra.mxu0 0.0
      %496 = vmatprep.subr.mxu0 0.0
      %497 = vmatpush1.msra.mxu0 0.0
      %498 = vmatprep.subr.mxu0 0.0
      %499 = vmatpush1.msra.mxu0 0.0
      %500 = vmatprep.subr.mxu0 0.0
      %501 = vmatpush1.msra.mxu0 0.0
      %502 = vmatprep.subr.mxu0 0.0
      %503 = vmatpush1.msra.mxu0 0.0
      %504 = vmatprep.subr.mxu0 0.0
      %505 = vmatpush1.msra.mxu0 0.0
      %506 = vmatprep.subr.mxu0 0.0
      %507 = vmatpush1.msra.mxu0 0.0
      %508 = vmatprep.subr.mxu0 0.0
      %509 = vmatpush1.msra.mxu0 0.0
      %510 = vmatprep.subr.mxu0 0.0
      %511 = vmatpush1.msra.mxu0 0.0
      %512 = vmatprep.subr.mxu0 0.0
      %513 = vmatpush1.msra.mxu0 0.0
      %514 = vmatprep.subr.mxu0 0.0
      %515 = vmatpush1.msra.mxu0 0.0
      %516 = vmatprep.subr.mxu0 0.0
      %517 = vmatpush1.msra.mxu0 0.0
      %518 = vmatprep.subr.mxu0 0.0
      %519 = vmatpush1.msra.mxu0 0.0
      %520 = vmatprep.subr.mxu0 0.0
      %521 = vmatpush1.msra.mxu0 0.0
      %522 = vmatprep.subr.mxu0 0.0
      %523 = vmatpush1.msra.mxu0 0.0
      %524 = vmatprep.mubr.f32.mxu0 0.0
      %525 = vmatmul.mubr.f32.gmra.mrb[0].mxu0 %v380
      %v526 = vpop.f32.mrb[0].mxu0
      %v527 = vadd.f32 0.0, %v526
      %v528 = vpop.f32.mrb[0].mxu0
      %529 = vdwg.mxu0
      %v532 = vcombine.low %v449, %v527
      %v534 = vunpack.c.l.s4 1966171168
      %v535 = vunpack.c.0.s8 %v534
      %v536 = vlaneseq
      %v537 = vshrl.u32 %v536, 7
      %v538 = vsub.s32 %v535, %v537
      %v539 = vrot.slane %v532, %v538
      %v541 = vunpack.c.l.s4 1966171168
      %v542 = vunpack.c.0.s8 %v541
      %v543 = vlaneseq
      %v544 = vshrl.u32 %v543, 7
      %v545 = vsub.s32 %v542, %v544
      %v546 = vrot.slane %v539, %v545
      %v548 = vlaneseq
      %vm549 = vcmp.ge.s32.totalorder %v548, 0
      %vm550 = vcmp.lt.s32.totalorder %v548, 256
      %vm551 = vmand %vm549, %vm550
      %552 = vst.msk [vmem:[%s197] sm:$0x3] %vm551, %v546
      %p553 = scmp.lt.s32.totalorder %s15, 1
      %s554 = scalar_select %p553, %s15, 1
      %s555 = smul.addr %s554, 2
      %s556 = scalar_lea.vmem %s4, %s555
      // Predicated region
      $region37: #{bottleneck_forward.6} parent=35 // pred_check
        %p557 = pneg %p122
      $region38: #{bottleneck_forward.6} parent=35 // pred_check_branch
        %559 = sbr.rel (%p557) target = $region40
      $region39: #{bottleneck_forward.6} parent=35 // pred_region
        _
      $region40: #{bottleneck_forward.6} parent=35 // pred_fallthru
        _
    $region36: #{bottleneck_forward.6} parent=5 // pred_fallthru
      _
    %p560 = scmp.le.s32.totalorder 2, %s10
    // Predicated region
    $region41: #{bottleneck_forward.6} parent=5 // pred_check
      %p561 = pneg %p560
    $region42: #{bottleneck_forward.6} parent=5 // pred_check_branch
      %563 = sbr.rel (%p561) target = $region44
    $region43: #{bottleneck_forward.6} parent=5 // pred_region
      %s564 = ssub.s32 %s10, 2
      // Predicated region
      $region45: #{bottleneck_forward.6} parent=43 // pred_check
        %p565 = pneg %p128
      $region46: #{bottleneck_forward.6} parent=43 // pred_check_branch
        %567 = sbr.rel (%p565) target = $region48
      $region47: #{bottleneck_forward.6} parent=43 // pred_region
        %p568 = scmp.lt.s32.totalorder %s16, 1
        %s569 = scalar_select %p568, %s16, 1
        %s570 = smul.addr %s569, 2
        %s571 = scalar_lea.vmem %s4, %s570
      $region48: #{bottleneck_forward.6} parent=43 // pred_fallthru
        _
    $region44: #{bottleneck_forward.6} parent=5 // pred_fallthru
      _
  $region6: #{bottleneck_forward.6} parent=0 // loop_footer
    %s14 = sadd.s32 1, %s10
  $region7: #{bottleneck_forward.6} parent=0 // loop_footer_branch
    %9 = sbr.rel target = $region3
  $region8: #{bottleneck_forward.6} parent=0 // loop_exit
    _

// kernel: bottleneck_forward.7
$region0: #{bottleneck_forward.7}
  #allocation0 [shape = 'u32[]', space=smem, size = 0x4, offset = 0x4, fixed_abs, tag = 'smem constant byte address 0x4 - core index']
  #allocation1 [shape = 'u32[144,128]{1,0:T(1,128)}', space=vmem, size = 0x12000, scoped, tag = 'internal scratch']
  %s0 = inlined_call_operand.vmem [shape: f32[128,32], index: 0, kind: input, shape index: {}]
  %s1 = inlined_call_operand.vmem [shape: f32[1,32], index: 1, kind: input, shape index: {}]
  %s2 = inlined_call_operand.vmem [shape: f32[1,32], index: 2, kind: input, shape index: {}]
  %s3 = inlined_call_operand.vmem [shape: f32[32,128], index: 3, kind: input, shape index: {}]
  %s4 = inlined_call_operand.vmem [shape: f32[1,128], index: 4, kind: input, shape index: {}]
  %s5 = inlined_call_operand.vmem [shape: f32[1,128], index: 5, kind: input, shape index: {}]
  %s6 = inlined_call_operand.vmem [shape: f32[128,128], index: 6, kind: input, shape index: {}]
  %s7 = inlined_call_operand.hbm [shape: f32[128,128], index: 7, kind: output, shape index: {}]
  %s8 = sld [smem:[#allocation0]]
  $region61: #{bottleneck_forward.7} parent=0
    _
  %s10 = ssub.s32 1, %s8
  %s11 = scalar_select 0, %s10, %s8
  $region1: #{bottleneck_forward.7} parent=0
    #allocation2 [shape = 'u8[65536]{0}', space=vmem, size = 0x10000, scoped, tag = 'output window, operand 0']
    #allocation3 [shape = 's32[2]{0}', space=sflag, size = 0x8, scoped, tag = 'scoped memory for bottleneck_forward.7']
    %12 = vsyncpa [#allocation3], 0
    %s13 = scalar_lea.sflag [#allocation3], 1
    %14 = vsyncpa %s13, 0
    loop: start=0, step=1, limit=4
    $region2: #{bottleneck_forward.7} parent=1 // loop_pre_header
      _
    $region3: #{bottleneck_forward.7} parent=1 // loop_header
      %s16 = sphi 0, %s20
      %p17 = scmp.ge.s32.totalorder %s16, 4
      %s26 = sphi 0, %s28
      %s29 = sphi 0, %s26
      %s30 = sphi 0, %s29
      %s46 = sphi 0, %s30
      %s50 = sphi 0, %s50
      %s52 = sphi 0, %s50
      %s53 = sphi 0, %s52
      %s67 = sphi 0, %s53
      %s71 = sphi 0, %s71
      %s73 = sphi 0, %s71
      %s74 = sphi 0, %s73
      %s88 = sphi 0, %s74
      %s92 = sphi 0, %s92
      %s94 = sphi 0, %s92
      %s95 = sphi 0, %s94
      %s109 = sphi 0, %s95
      %s113 = sphi 0, %s113
      %s115 = sphi 0, %s113
      %s116 = sphi 0, %s115
      %s130 = sphi 0, %s116
      %s134 = sphi 0, %s134
      %s136 = sphi 0, %s134
      %s137 = sphi 0, %s136
      %s151 = sphi 0, %s137
      %s157 = sphi 0, %s159
      %s160 = sphi 0, %s157
      %s161 = sphi 0, %s160
      %s177 = sphi 0, %s161
      %s183 = sphi 0, %s185
      %s186 = sphi 0, %s183
      %s187 = sphi 0, %s186
      %s203 = sphi 0, %s187
    $region4: #{bottleneck_forward.7} parent=1 // loop_header_branch
      %19 = sbr.rel (%p17) target = $region8
    $region5: #{bottleneck_forward.7} parent=1 // loop_body
      %s21 = ssub.s32 %s16, 1
      %s22 = ssub.s32 %s16, 2
      %s23 = sadd.s32 %s16, 1
      %s24 = ssub.s32 %s16, %s23
      %p25 = scmp.eq.s32.totalorder %s24, 0
      %s27 = sadd.s32 %s26, 1
      %s28 = scalar_select %p25, %s26, %s27
      %p31 = pneg %p25
      %p32 = scmp.eq.s32.totalorder %s16, 1
      %p33 = por %p31, %p32
      %p34 = scmp.ne.s32.totalorder %s26, %s29
      %p35 = scmp.eq.s32.totalorder %s16, 0
      %p36 = por %p34, %p35
      %p37 = scmp.ne.s32.totalorder %s26, %s29
      %p38 = scmp.eq.s32.totalorder %s21, 1
      %p39 = por %p37, %p38
      %p40 = scmp.ne.s32.totalorder %s29, %s30
      %p41 = scmp.eq.s32.totalorder %s21, 0
      %p42 = por %p40, %p41
      %p43 = scmp.ne.s32.totalorder %s29, %s30
      %p44 = scmp.eq.s32.totalorder %s22, 1
      %p45 = por %p43, %p44
      %p47 = scmp.ne.s32.totalorder %s30, %s46
      %p48 = scmp.eq.s32.totalorder %s22, 0
      %p49 = por %p47, %p48
      %s51 = sadd.s32 %s50, 1
      %p54 = scmp.eq.s32.totalorder %s16, 1
      %p55 = scmp.ne.s32.totalorder %s50, %s52
      %p56 = scmp.eq.s32.totalorder %s16, 0
      %p57 = por %p55, %p56
      %p58 = scmp.ne.s32.totalorder %s50, %s52
      %p59 = scmp.eq.s32.totalorder %s21, 1
      %p60 = por %p58, %p59
      %p61 = scmp.ne.s32.totalorder %s52, %s53
      %p62 = scmp.eq.s32.totalorder %s21, 0
      %p63 = por %p61, %p62
      %p64 = scmp.ne.s32.totalorder %s52, %s53
      %p65 = scmp.eq.s32.totalorder %s22, 1
      %p66 = por %p64, %p65
      %p68 = scmp.ne.s32.totalorder %s53, %s67
      %p69 = scmp.eq.s32.totalorder %s22, 0
      %p70 = por %p68, %p69
      %s72 = sadd.s32 %s71, 1
      %p75 = scmp.eq.s32.totalorder %s16, 1
      %p76 = scmp.ne.s32.totalorder %s71, %s73
      %p77 = scmp.eq.s32.totalorder %s16, 0
      %p78 = por %p76, %p77
      %p79 = scmp.ne.s32.totalorder %s71, %s73
      %p80 = scmp.eq.s32.totalorder %s21, 1
      %p81 = por %p79, %p80
      %p82 = scmp.ne.s32.totalorder %s73, %s74
      %p83 = scmp.eq.s32.totalorder %s21, 0
      %p84 = por %p82, %p83
      %p85 = scmp.ne.s32.totalorder %s73, %s74
      %p86 = scmp.eq.s32.totalorder %s22, 1
      %p87 = por %p85, %p86
      %p89 = scmp.ne.s32.totalorder %s74, %s88
      %p90 = scmp.eq.s32.totalorder %s22, 0
      %p91 = por %p89, %p90
      %s93 = sadd.s32 %s92, 1
      %p96 = scmp.eq.s32.totalorder %s16, 1
      %p97 = scmp.ne.s32.totalorder %s92, %s94
      %p98 = scmp.eq.s32.totalorder %s16, 0
      %p99 = por %p97, %p98
      %p100 = scmp.ne.s32.totalorder %s92, %s94
      %p101 = scmp.eq.s32.totalorder %s21, 1
      %p102 = por %p100, %p101
      %p103 = scmp.ne.s32.totalorder %s94, %s95
      %p104 = scmp.eq.s32.totalorder %s21, 0
      %p105 = por %p103, %p104
      %p106 = scmp.ne.s32.totalorder %s94, %s95
      %p107 = scmp.eq.s32.totalorder %s22, 1
      %p108 = por %p106, %p107
      %p110 = scmp.ne.s32.totalorder %s95, %s109
      %p111 = scmp.eq.s32.totalorder %s22, 0
      %p112 = por %p110, %p111
      %s114 = sadd.s32 %s113, 1
      %p117 = scmp.eq.s32.totalorder %s16, 1
      %p118 = scmp.ne.s32.totalorder %s113, %s115
      %p119 = scmp.eq.s32.totalorder %s16, 0
      %p120 = por %p118, %p119
      %p121 = scmp.ne.s32.totalorder %s113, %s115
      %p122 = scmp.eq.s32.totalorder %s21, 1
      %p123 = por %p121, %p122
      %p124 = scmp.ne.s32.totalorder %s115, %s116
      %p125 = scmp.eq.s32.totalorder %s21, 0
      %p126 = por %p124, %p125
      %p127 = scmp.ne.s32.totalorder %s115, %s116
      %p128 = scmp.eq.s32.totalorder %s22, 1
      %p129 = por %p127, %p128
      %p131 = scmp.ne.s32.totalorder %s116, %s130
      %p132 = scmp.eq.s32.totalorder %s22, 0
      %p133 = por %p131, %p132
      %s135 = sadd.s32 %s134, 1
      %p138 = scmp.eq.s32.totalorder %s16, 1
      %p139 = scmp.ne.s32.totalorder %s134, %s136
      %p140 = scmp.eq.s32.totalorder %s16, 0
      %p141 = por %p139, %p140
      %p142 = scmp.ne.s32.totalorder %s134, %s136
      %p143 = scmp.eq.s32.totalorder %s21, 1
      %p144 = por %p142, %p143
      %p145 = scmp.ne.s32.totalorder %s136, %s137
      %p146 = scmp.eq.s32.totalorder %s21, 0
      %p147 = por %p145, %p146
      %p148 = scmp.ne.s32.totalorder %s136, %s137
      %p149 = scmp.eq.s32.totalorder %s22, 1
      %p150 = por %p148, %p149
      %p152 = scmp.ne.s32.totalorder %s137, %s151
      %p153 = scmp.eq.s32.totalorder %s22, 0
      %p154 = por %p152, %p153
      %s155 = ssub.s32 %s16, %s23
      %p156 = scmp.eq.s32.totalorder %s155, 0
      %s158 = sadd.s32 %s157, 1
      %s159 = scalar_select %p156, %s157, %s158
      %p162 = pneg %p156
      %p163 = scmp.eq.s32.totalorder %s16, 1
      %p164 = por %p162, %p163
      %p165 = scmp.ne.s32.totalorder %s157, %s160
      %p166 = scmp.eq.s32.totalorder %s16, 0
      %p167 = por %p165, %p166
      %p168 = scmp.ne.s32.totalorder %s157, %s160
      %p169 = scmp.eq.s32.totalorder %s21, 1
      %p170 = por %p168, %p169
      %p171 = scmp.ne.s32.totalorder %s160, %s161
      %p172 = scmp.eq.s32.totalorder %s21, 0
      %p173 = por %p171, %p172
      %p174 = scmp.ne.s32.totalorder %s160, %s161
      %p175 = scmp.eq.s32.totalorder %s22, 1
      %p176 = por %p174, %p175
      %p178 = scmp.ne.s32.totalorder %s161, %s177
      %p179 = scmp.eq.s32.totalorder %s22, 0
      %p180 = por %p178, %p179
      %s181 = ssub.s32 %s16, %s23
      %p182 = scmp.eq.s32.totalorder %s181, 0
      %s184 = sadd.s32 %s183, 1
      %s185 = scalar_select %p182, %s183, %s184
      %p188 = pneg %p182
      %p189 = scmp.eq.s32.totalorder %s16, 1
      %p190 = por %p188, %p189
      %p191 = scmp.ne.s32.totalorder %s183, %s186
      %p192 = scmp.eq.s32.totalorder %s16, 0
      %p193 = por %p191, %p192
      %p194 = scmp.ne.s32.totalorder %s183, %s186
      %p195 = scmp.eq.s32.totalorder %s21, 1
      %p196 = por %p194, %p195
      %p197 = scmp.ne.s32.totalorder %s186, %s187
      %p198 = scmp.eq.s32.totalorder %s21, 0
      %p199 = por %p197, %p198
      %p200 = scmp.ne.s32.totalorder %s186, %s187
      %p201 = scmp.eq.s32.totalorder %s22, 1
      %p202 = por %p200, %p201
      %p204 = scmp.ne.s32.totalorder %s187, %s203
      %p205 = scmp.eq.s32.totalorder %s22, 0
      %p206 = por %p204, %p205
      %p207 = scmp.le.s32.totalorder 1, %s16
      %p208 = scmp.lt.s32.totalorder %s16, 3
      %p209 = pnand %p207, %p208
      %p210 = pneg %p209
      // Predicated region
      $region9: #{bottleneck_forward.7} parent=5 // pred_check
        _
      $region10: #{bottleneck_forward.7} parent=5 // pred_check_branch
        %212 = sbr.rel (%p209) target = $region12
      $region11: #{bottleneck_forward.7} parent=5 // pred_region
        %s213 = ssub.s32 %s16, 1
        // Predicated region
        $region13: #{bottleneck_forward.7} parent=11 // pred_check
          %p214 = pneg %p63
        $region14: #{bottleneck_forward.7} parent=11 // pred_check_branch
          %216 = sbr.rel (%p214) target = $region16
        $region15: #{bottleneck_forward.7} parent=11 // pred_region
          _
        $region16: #{bottleneck_forward.7} parent=11 // pred_fallthru
          _
        // Predicated region
        $region17: #{bottleneck_forward.7} parent=11 // pred_check
          %p217 = pneg %p84
        $region18: #{bottleneck_forward.7} parent=11 // pred_check_branch
          %219 = sbr.rel (%p217) target = $region20
        $region19: #{bottleneck_forward.7} parent=11 // pred_region
          _
        $region20: #{bottleneck_forward.7} parent=11 // pred_fallthru
          _
        // Predicated region
        $region21: #{bottleneck_forward.7} parent=11 // pred_check
          %p220 = pneg %p105
        $region22: #{bottleneck_forward.7} parent=11 // pred_check_branch
          %222 = sbr.rel (%p220) target = $region24
        $region23: #{bottleneck_forward.7} parent=11 // pred_region
          _
        $region24: #{bottleneck_forward.7} parent=11 // pred_fallthru
          _
        // Predicated region
        $region25: #{bottleneck_forward.7} parent=11 // pred_check
          %p223 = pneg %p126
        $region26: #{bottleneck_forward.7} parent=11 // pred_check_branch
          %225 = sbr.rel (%p223) target = $region28
        $region27: #{bottleneck_forward.7} parent=11 // pred_region
          _
        $region28: #{bottleneck_forward.7} parent=11 // pred_fallthru
          _
        // Predicated region
        $region29: #{bottleneck_forward.7} parent=11 // pred_check
          %p226 = pneg %p147
        $region30: #{bottleneck_forward.7} parent=11 // pred_check_branch
          %228 = sbr.rel (%p226) target = $region32
        $region31: #{bottleneck_forward.7} parent=11 // pred_region
          _
        $region32: #{bottleneck_forward.7} parent=11 // pred_fallthru
          _
      $region12: #{bottleneck_forward.7} parent=5 // pred_fallthru
        _
      %p229 = scmp.lt.s32.totalorder %s16, 2
      // Predicated region
      $region33: #{bottleneck_forward.7} parent=5 // pred_check
        %p230 = pneg %p229
      $region34: #{bottleneck_forward.7} parent=5 // pred_check_branch
        %232 = sbr.rel (%p230) target = $region36
      $region35: #{bottleneck_forward.7} parent=5 // pred_region
        // Predicated region
        $region37: #{bottleneck_forward.7} parent=35 // pred_check
          %p233 = pneg %p36
        $region38: #{bottleneck_forward.7} parent=35 // pred_check_branch
          %235 = sbr.rel (%p233) target = $region40
        $region39: #{bottleneck_forward.7} parent=35 // pred_region
          %s236 = smul.u32 8, %s16
          %p237 = scmp.lt.s32.totalorder %s236, 15
          %s238 = scalar_select %p237, %s236, 15
          %s239 = smul.addr %s238, 8
          %s240 = scalar_lea.vmem %s0, %s239
          %s241 = smul.u32 8, %s16
        $region40: #{bottleneck_forward.7} parent=35 // pred_fallthru
          _
        // Predicated region
        $region41: #{bottleneck_forward.7} parent=35 // pred_check
          %p242 = pneg %p167
        $region42: #{bottleneck_forward.7} parent=35 // pred_check_branch
          %244 = sbr.rel (%p242) target = $region44
        $region43: #{bottleneck_forward.7} parent=35 // pred_region
          %s245 = smul.u32 8, %s16
          %p246 = scmp.lt.s32.totalorder %s245, 15
          %s247 = scalar_select %p246, %s245, 15
          %s248 = smul.addr %s247, 8
          %s249 = scalar_lea.vmem %s6, %s248
          %s250 = smul.u32 8, %s16
        $region44: #{bottleneck_forward.7} parent=35 // pred_fallthru
          _
      $region36: #{bottleneck_forward.7} parent=5 // pred_fallthru
        _
      %p251 = scmp.le.s32.totalorder 1, %s16
      %p252 = scmp.lt.s32.totalorder %s16, 3
      %p253 = pnand %p251, %p252
      %p254 = pneg %p253
      // Predicated region
      $region45: #{bottleneck_forward.7} parent=5 // pred_check
        _
      $region46: #{bottleneck_forward.7} parent=5 // pred_check_branch
        %256 = sbr.rel (%p253) target = $region48
      $region47: #{bottleneck_forward.7} parent=5 // pred_region
        %s257 = ssub.s32 %s16, 1
        %s258 = smul.u32 8, %s21
        %p259 = scmp.lt.s32.totalorder %s258, 15
        %s260 = scalar_select %p259, %s258, 15
        %s261 = smul.addr %s260, 8
        %s262 = scalar_lea.vmem %s0, %s261
        %p263 = pneg %p42
        %p264 = pneg %p39
        %p265 = pneg %p63
        %p266 = pneg %p60
        %p267 = pneg %p84
        %p268 = pneg %p81
        %p269 = pneg %p105
        %p270 = pneg %p102
        %p271 = pneg %p126
        %p272 = pneg %p123
        %p273 = pneg %p147
        %p274 = pneg %p144
        %s275 = smul.u32 8, %s21
        %p276 = scmp.lt.s32.totalorder %s275, 15
        %s277 = scalar_select %p276, %s275, 15
        %s278 = smul.addr %s277, 8
        %s279 = scalar_lea.vmem %s6, %s278
        %p280 = pneg %p173
        %p281 = pneg %p170
        %p282 = pneg %p199
        %p283 = pneg %p196
        %s284 = sand.u32 %s186, 1
        %s285 = scalar_lea.sflag [#allocation3], %s284
        %s286 = sand.u32 %s186, 1
        %s287 = smul.addr %s286, 64
        %s288 = scalar_lea.vmem [#allocation2], %s287
        %s289 = smul.u32 8, %s21
        %p290 = scmp.lt.s32.totalorder %s289, 15
        %s291 = scalar_select %p290, %s289, 15
        %s292 = smul.addr %s291, 8
        %s293 = scalar_lea.vmem %s0, %s292
        %s294 = smul.u32 8, %s21
        %s295 = smul.u32 8, %s21
        %p296 = scmp.lt.s32.totalorder %s295, 15
        %s297 = scalar_select %p296, %s295, 15
        %s298 = smul.addr %s297, 8
        %s299 = scalar_lea.vmem %s6, %s298
        %s300 = smul.u32 8, %s21
        %s301 = smul.u32 8, %s21
        %v302 = vld [vmem:[%s293] sm:$0xff]
        %v303 = vld [vmem:[%s293 + $0x8] sm:$0xff]
        %v304 = vld [vmem:[%s293 + $0x10] sm:$0xff]
        %v305 = vld [vmem:[%s293 + $0x18] sm:$0xff]
        %v306 = vld [vmem:[%s293 + $0x20] sm:$0xff]
        %v307 = vld [vmem:[%s293 + $0x28] sm:$0xff]
        %v308 = vld [vmem:[%s293 + $0x30] sm:$0xff]
        %v309 = vld [vmem:[%s293 + $0x38] sm:$0xff]
        %v310 = vld [vmem:[%s1] sm:$0x1]
        %v312 = vlaneseq
        %v313 = vshrl.u32 %v312, 7
        %v314 = vsub.s32 0, %v313
        %v315 = vrot.slane %v310, %v314
        %v317 = vmul.f32 %v302, %v315
        %v318 = vmul.f32 %v303, %v315
        %v319 = vmul.f32 %v304, %v315
        %v320 = vmul.f32 %v305, %v315
        %v321 = vmul.f32 %v306, %v315
        %v322 = vmul.f32 %v307, %v315
        %v323 = vmul.f32 %v308, %v315
        %v324 = vmul.f32 %v309, %v315
        %v325 = vld [vmem:[%s2] sm:$0x1]
        %v327 = vlaneseq
        %v328 = vshrl.u32 %v327, 7
        %v329 = vsub.s32 0, %v328
        %v330 = vrot.slane %v325, %v329
        %v332 = vadd.f32 %v317, %v330
        %v333 = vadd.f32 %v318, %v330
        %v334 = vadd.f32 %v319, %v330
        %v335 = vadd.f32 %v320, %v330
        %v336 = vadd.f32 %v321, %v330
        %v337 = vadd.f32 %v322, %v330
        %v338 = vadd.f32 %v323, %v330
        %v339 = vadd.f32 %v324, %v330
        %v340 = vmax.f32 %v332, 0.0
        %v341 = vmax.f32 %v333, 0.0
        %v342 = vmax.f32 %v334, 0.0
        %v343 = vmax.f32 %v335, 0.0
        %v344 = vmax.f32 %v336, 0.0
        %v345 = vmax.f32 %v337, 0.0
        %v346 = vmax.f32 %v338, 0.0
        %v347 = vmax.f32 %v339, 0.0
        %v348 = vld [vmem:[%s3] sm:$0xff]
        %v349 = vld [vmem:[%s3 + $0x8] sm:$0xff]
        %v350 = vld [vmem:[%s3 + $0x10] sm:$0xff]
        %v351 = vld [vmem:[%s3 + $0x18] sm:$0xff]
        %vm352 = vcmask 261120
        %v354 = vsel %vm352, %v340, 0
        %v357 = vsel %vm352, %v341, 0
        %v360 = vsel %vm352, %v342, 0
        %v363 = vsel %vm352, %v343, 0
        %v366 = vsel %vm352, %v344, 0
        %v369 = vsel %vm352, %v345, 0
        %v372 = vsel %vm352, %v346, 0
        %v375 = vsel %vm352, %v347, 0
        %377 = vmatprep.subr.mxu0 0.0
        %378 = vmatpush1.msra.mxu0 %v348
        %379 = vmatprep.subr.mxu0 0.0
        %380 = vmatpush1.msra.mxu0 %v349
        %381 = vmatprep.subr.mxu0 0.0
        %382 = vmatpush1.msra.mxu0 %v350
        %383 = vmatprep.subr.mxu0 0.0
        %384 = vmatpush1.msra.mxu0 %v351
        %385 = vmatprep.subr.mxu0 0.0
        %386 = vmatpush1.msra.mxu0 0.0
        %387 = vmatprep.subr.mxu0 0.0
        %388 = vmatpush1.msra.mxu0 0.0
        %389 = vmatprep.subr.mxu0 0.0
        %390 = vmatpush1.msra.mxu0 0.0
        %391 = vmatprep.subr.mxu0 0.0
        %392 = vmatpush1.msra.mxu0 0.0
        %393 = vmatprep.subr.mxu0 0.0
        %394 = vmatpush1.msra.mxu0 0.0
        %395 = vmatprep.subr.mxu0 0.0
        %396 = vmatpush1.msra.mxu0 0.0
        %397 = vmatprep.subr.mxu0 0.0
        %398 = vmatpush1.msra.mxu0 0.0
        %399 = vmatprep.subr.mxu0 0.0
        %400 = vmatpush1.msra.mxu0 0.0
        %401 = vmatprep.subr.mxu0 0.0
        %402 = vmatpush1.msra.mxu0 0.0
        %403 = vmatprep.subr.mxu0 0.0
        %404 = vmatpush1.msra.mxu0 0.0
        %405 = vmatprep.subr.mxu0 0.0
        %406 = vmatpush1.msra.mxu0 0.0
        %407 = vmatprep.subr.mxu0 0.0
        %408 = vmatpush1.msra.mxu0 0.0
        %409 = vmatprep.subr.mxu0 0.0
        %410 = vmatpush1.msra.mxu0 0.0
        %411 = vmatprep.subr.mxu0 0.0
        %412 = vmatpush1.msra.mxu0 0.0
        %413 = vmatprep.subr.mxu0 0.0
        %414 = vmatpush1.msra.mxu0 0.0
        %415 = vmatprep.subr.mxu0 0.0
        %416 = vmatpush1.msra.mxu0 0.0
        %417 = vmatprep.subr.mxu0 0.0
        %418 = vmatpush1.msra.mxu0 0.0
        %419 = vmatprep.subr.mxu0 0.0
        %420 = vmatpush1.msra.mxu0 0.0
        %421 = vmatprep.subr.mxu0 0.0
        %422 = vmatpush1.msra.mxu0 0.0
        %423 = vmatprep.subr.mxu0 0.0
        %424 = vmatpush1.msra.mxu0 0.0
        %425 = vmatprep.subr.mxu0 0.0
        %426 = vmatpush1.msra.mxu0 0.0
        %427 = vmatprep.subr.mxu0 0.0
        %428 = vmatpush1.msra.mxu0 0.0
        %429 = vmatprep.subr.mxu0 0.0
        %430 = vmatpush1.msra.mxu0 0.0
        %431 = vmatprep.subr.mxu0 0.0
        %432 = vmatpush1.msra.mxu0 0.0
        %433 = vmatprep.subr.mxu0 0.0
        %434 = vmatpush1.msra.mxu0 0.0
        %435 = vmatprep.subr.mxu0 0.0
        %436 = vmatpush1.msra.mxu0 0.0
        %437 = vmatprep.subr.mxu0 0.0
        %438 = vmatpush1.msra.mxu0 0.0
        %439 = vmatprep.subr.mxu0 0.0
        %440 = vmatpush1.msra.mxu0 0.0
        %441 = vmatprep.mubr.f32.mxu0 0.0
        %442 = vmatmul.mubr.f32.gmra.mrb[0].mxu0 %v354
        %v443 = vpop.f32.mrb[0].mxu0
        %v444 = vadd.f32 0.0, %v443
        %v445 = vpop.f32.mrb[0].mxu0
        %446 = vmatprep.mubr.f32.mxu0 0.0
        %447 = vmatmul.mubr.f32.gmra.mrb[0].mxu0 %v357
        %v448 = vpop.f32.mrb[0].mxu0
        %v449 = vadd.f32 0.0, %v448
        %v450 = vpop.f32.mrb[0].mxu0
        %451 = vmatprep.mubr.f32.mxu0 0.0
        %452 = vmatmul.mubr.f32.gmra.mrb[0].mxu0 %v360
        %v453 = vpop.f32.mrb[0].mxu0
        %v454 = vadd.f32 0.0, %v453
        %v455 = vpop.f32.mrb[0].mxu0
        %456 = vmatprep.mubr.f32.mxu0 0.0
        %457 = vmatmul.mubr.f32.gmra.mrb[0].mxu0 %v363
        %v458 = vpop.f32.mrb[0].mxu0
        %v459 = vadd.f32 0.0, %v458
        %v460 = vpop.f32.mrb[0].mxu0
        %461 = vmatprep.mubr.f32.mxu0 0.0
        %462 = vmatmul.mubr.f32.gmra.mrb[0].mxu0 %v366
        %v463 = vpop.f32.mrb[0].mxu0
        %v464 = vadd.f32 0.0, %v463
        %v465 = vpop.f32.mrb[0].mxu0
        %466 = vmatprep.mubr.f32.mxu0 0.0
        %467 = vmatmul.mubr.f32.gmra.mrb[0].mxu0 %v369
        %v468 = vpop.f32.mrb[0].mxu0
        %v469 = vadd.f32 0.0, %v468
        %v470 = vpop.f32.mrb[0].mxu0
        %471 = vmatprep.mubr.f32.mxu0 0.0
        %472 = vmatmul.mubr.f32.gmra.mrb[0].mxu0 %v372
        %v473 = vpop.f32.mrb[0].mxu0
        %v474 = vadd.f32 0.0, %v473
        %v475 = vpop.f32.mrb[0].mxu0
        %476 = vmatprep.mubr.f32.mxu0 0.0
        %477 = vmatmul.mubr.f32.gmra.mrb[0].mxu0 %v375
        %v478 = vpop.f32.mrb[0].mxu0
        %v479 = vadd.f32 0.0, %v478
        %v480 = vpop.f32.mrb[0].mxu0
        %481 = vdwg.mxu0
        %v482 = vld [vmem:[%s4] sm:$0x1]
        %v484 = vlaneseq
        %v485 = vshrl.u32 %v484, 7
        %v486 = vsub.s32 0, %v485
        %v487 = vrot.slane %v482, %v486
        %v489 = vmul.f32 %v444, %v487
        %v490 = vmul.f32 %v449, %v487
        %v491 = vmul.f32 %v454, %v487
        %v492 = vmul.f32 %v459, %v487
        %v493 = vmul.f32 %v464, %v487
        %v494 = vmul.f32 %v469, %v487
        %v495 = vmul.f32 %v474, %v487
        %v496 = vmul.f32 %v479, %v487
        %v497 = vld [vmem:[%s5] sm:$0x1]
        %v499 = vlaneseq
        %v500 = vshrl.u32 %v499, 7
        %v501 = vsub.s32 0, %v500
        %v502 = vrot.slane %v497, %v501
        %v504 = vadd.f32 %v489, %v502
        %v505 = vadd.f32 %v490, %v502
        %v506 = vadd.f32 %v491, %v502
        %v507 = vadd.f32 %v492, %v502
        %v508 = vadd.f32 %v493, %v502
        %v509 = vadd.f32 %v494, %v502
        %v510 = vadd.f32 %v495, %v502
        %v511 = vadd.f32 %v496, %v502
        %v512 = vld [vmem:[%s299] sm:$0xff]
        %v513 = vld [vmem:[%s299 + $0x8] sm:$0xff]
        %v514 = vld [vmem:[%s299 + $0x10] sm:$0xff]
        %v515 = vld [vmem:[%s299 + $0x18] sm:$0xff]
        %v516 = vld [vmem:[%s299 + $0x20] sm:$0xff]
        %v517 = vld [vmem:[%s299 + $0x28] sm:$0xff]
        %v518 = vld [vmem:[%s299 + $0x30] sm:$0xff]
        %v519 = vld [vmem:[%s299 + $0x38] sm:$0xff]
        %v520 = vadd.f32 %v504, %v512
        %v521 = vadd.f32 %v505, %v513
        %v522 = vadd.f32 %v506, %v514
        %v523 = vadd.f32 %v507, %v515
        %v524 = vadd.f32 %v508, %v516
        %v525 = vadd.f32 %v509, %v517
        %v526 = vadd.f32 %v510, %v518
        %v527 = vadd.f32 %v511, %v519
        %v528 = vmax.f32 %v520, 0.0
        %v529 = vmax.f32 %v521, 0.0
        %v530 = vmax.f32 %v522, 0.0
        %v531 = vmax.f32 %v523, 0.0
        %v532 = vmax.f32 %v524, 0.0
        %v533 = vmax.f32 %v525, 0.0
        %v534 = vmax.f32 %v526, 0.0
        %v535 = vmax.f32 %v527, 0.0
        %536 = vst [vmem:[%s288] sm:$0xff] %v528
        %537 = vst [vmem:[%s288 + $0x8] sm:$0xff] %v529
        %538 = vst [vmem:[%s288 + $0x10] sm:$0xff] %v530
        %539 = vst [vmem:[%s288 + $0x18] sm:$0xff] %v531
        %540 = vst [vmem:[%s288 + $0x20] sm:$0xff] %v532
        %541 = vst [vmem:[%s288 + $0x28] sm:$0xff] %v533
        %542 = vst [vmem:[%s288 + $0x30] sm:$0xff] %v534
        %543 = vst [vmem:[%s288 + $0x38] sm:$0xff] %v535
        %s544 = sand.u32 %s186, 1
        %s545 = scalar_lea.sflag [#allocation3], %s544
        %s546 = sand.u32 %s186, 1
        %s547 = smul.addr %s546, 64
        %s548 = scalar_lea.vmem [#allocation2], %s547
        // Predicated region
        $region49: #{bottleneck_forward.7} parent=47 // pred_check
          %p549 = pneg %p196
        $region50: #{bottleneck_forward.7} parent=47 // pred_check_branch
          %551 = sbr.rel (%p549) target = $region52
        $region51: #{bottleneck_forward.7} parent=47 // pred_region
          %s552 = smul.u32 8, %s21
          %s554 = ssub.s32 1024, 1024
          %555 = vsyncadd %s545, %s554
          %s556 = smul.addr %s552, 128
          %s557 = scalar_lea.hbm %s7, %s556
          %s558 = sshll.u32 %s548, 4
          %s559 = int_to_ptr.vmem [resolvable:$true] %s558
          %564 = dma.vmem_to_hbm [thread:$0]  %s559, 1024, %s557, %s545, 128, 128, 8
        $region52: #{bottleneck_forward.7} parent=47 // pred_fallthru
          _
      $region48: #{bottleneck_forward.7} parent=5 // pred_fallthru
        _
      %p565 = scmp.le.s32.totalorder 2, %s16
      // Predicated region
      $region53: #{bottleneck_forward.7} parent=5 // pred_check
        %p566 = pneg %p565
      $region54: #{bottleneck_forward.7} parent=5 // pred_check_branch
        %568 = sbr.rel (%p566) target = $region56
      $region55: #{bottleneck_forward.7} parent=5 // pred_region
        %s569 = ssub.s32 %s16, 2
        // Predicated region
        $region57: #{bottleneck_forward.7} parent=55 // pred_check
          %p570 = pneg %p202
        $region58: #{bottleneck_forward.7} parent=55 // pred_check_branch
          %572 = sbr.rel (%p570) target = $region60
        $region59: #{bottleneck_forward.7} parent=55 // pred_region
          %s573 = sand.u32 %s187, 1
          %s574 = scalar_lea.sflag [#allocation3], %s573
          %s575 = sand.u32 %s187, 1
          %s576 = smul.addr %s575, 64
          %s577 = scalar_lea.vmem [#allocation2], %s576
          %578 = dma.done %s574, 1024
        $region60: #{bottleneck_forward.7} parent=55 // pred_fallthru
          _
      $region56: #{bottleneck_forward.7} parent=5 // pred_fallthru
        _
    $region6: #{bottleneck_forward.7} parent=1 // loop_footer
      %s20 = sadd.s32 1, %s16
    $region7: #{bottleneck_forward.7} parent=1 // loop_footer_branch
      %15 = sbr.rel target = $region3
    $region8: #{bottleneck_forward.7} parent=1 // loop_exit
      _
    %579 = vsyncpa [#allocation3], 1
    %s580 = scalar_lea.sflag [#allocation3], 1
    %581 = vsyncpa %s580, 1

// kernel: bottleneck_forward.5
$region0: #{bottleneck_forward.5}
  #allocation0 [shape = 'u32[]', space=smem, size = 0x4, offset = 0x4, fixed_abs, tag = 'smem constant byte address 0x4 - core index']
  #allocation1 [shape = 'u32[144,128]{1,0:T(1,128)}', space=vmem, size = 0x12000, scoped, tag = 'internal scratch']
  #allocation2 [shape = 'f32[88,96]{1,0:T(8,128)}', space=vmem, size = 0xb000, scoped, tag = 'scratch operand']
  %s0 = inlined_call_operand.vmem [shape: f32[128,32], index: 0, kind: input, shape index: {}]
  %s1 = inlined_call_operand.vmem [shape: f32[1,32], index: 1, kind: input, shape index: {}]
  %s2 = inlined_call_operand.vmem [shape: f32[1,32], index: 2, kind: input, shape index: {}]
  %s3 = inlined_call_operand.vmem [shape: f32[3,96,32], index: 3, kind: input, shape index: {}]
  %s4 = inlined_call_operand.vmem [shape: f32[128,32], index: 4, kind: output, shape index: {0}]
  %s5 = inlined_call_operand.vmem [shape: f32[2,1,64], index: 5, kind: output, shape index: {1}]
  %6 = xla_tuple %s4, %s5
  %s7 = sld [smem:[#allocation0]]
  $region57: #{bottleneck_forward.5} parent=0
    _
  %s9 = ssub.s32 1, %s7
  %s10 = scalar_select 0, %s9, %s7
  loop: start=0, step=1, limit=4
  $region2: #{bottleneck_forward.5} parent=0 // loop_pre_header
    _
  $region3: #{bottleneck_forward.5} parent=0 // loop_header
    %s12 = sphi 0, %s16
    %p13 = scmp.ge.s32.totalorder %s12, 4
    %s22 = sphi 0, %s24
    %s25 = sphi 0, %s22
    %s26 = sphi 0, %s25
    %s42 = sphi 0, %s26
    %s46 = sphi 0, %s46
    %s48 = sphi 0, %s46
    %s49 = sphi 0, %s48
    %s63 = sphi 0, %s49
    %s67 = sphi 0, %s67
    %s69 = sphi 0, %s67
    %s70 = sphi 0, %s69
    %s84 = sphi 0, %s70
    %s88 = sphi 0, %s88
    %s90 = sphi 0, %s88
    %s91 = sphi 0, %s90
    %s105 = sphi 0, %s91
    %s111 = sphi 0, %s113
    %s114 = sphi 0, %s111
    %s115 = sphi 0, %s114
    %s131 = sphi 0, %s115
    %s137 = sphi 0, %s139
    %s140 = sphi 0, %s137
    %s141 = sphi 0, %s140
    %s157 = sphi 0, %s141
  $region4: #{bottleneck_forward.5} parent=0 // loop_header_branch
    %15 = sbr.rel (%p13) target = $region8
  $region5: #{bottleneck_forward.5} parent=0 // loop_body
    %s17 = ssub.s32 %s12, 1
    %s18 = ssub.s32 %s12, 2
    %s19 = sadd.s32 %s12, 1
    %s20 = ssub.s32 %s12, %s19
    %p21 = scmp.eq.s32.totalorder %s20, 0
    %s23 = sadd.s32 %s22, 1
    %s24 = scalar_select %p21, %s22, %s23
    %p27 = pneg %p21
    %p28 = scmp.eq.s32.totalorder %s12, 1
    %p29 = por %p27, %p28
    %p30 = scmp.ne.s32.totalorder %s22, %s25
    %p31 = scmp.eq.s32.totalorder %s12, 0
    %p32 = por %p30, %p31
    %p33 = scmp.ne.s32.totalorder %s22, %s25
    %p34 = scmp.eq.s32.totalorder %s17, 1
    %p35 = por %p33, %p34
    %p36 = scmp.ne.s32.totalorder %s25, %s26
    %p37 = scmp.eq.s32.totalorder %s17, 0
    %p38 = por %p36, %p37
    %p39 = scmp.ne.s32.totalorder %s25, %s26
    %p40 = scmp.eq.s32.totalorder %s18, 1
    %p41 = por %p39, %p40
    %p43 = scmp.ne.s32.totalorder %s26, %s42
    %p44 = scmp.eq.s32.totalorder %s18, 0
    %p45 = por %p43, %p44
    %s47 = sadd.s32 %s46, 1
    %p50 = scmp.eq.s32.totalorder %s12, 1
    %p51 = scmp.ne.s32.totalorder %s46, %s48
    %p52 = scmp.eq.s32.totalorder %s12, 0
    %p53 = por %p51, %p52
    %p54 = scmp.ne.s32.totalorder %s46, %s48
    %p55 = scmp.eq.s32.totalorder %s17, 1
    %p56 = por %p54, %p55
    %p57 = scmp.ne.s32.totalorder %s48, %s49
    %p58 = scmp.eq.s32.totalorder %s17, 0
    %p59 = por %p57, %p58
    %p60 = scmp.ne.s32.totalorder %s48, %s49
    %p61 = scmp.eq.s32.totalorder %s18, 1
    %p62 = por %p60, %p61
    %p64 = scmp.ne.s32.totalorder %s49, %s63
    %p65 = scmp.eq.s32.totalorder %s18, 0
    %p66 = por %p64, %p65
    %s68 = sadd.s32 %s67, 1
    %p71 = scmp.eq.s32.totalorder %s12, 1
    %p72 = scmp.ne.s32.totalorder %s67, %s69
    %p73 = scmp.eq.s32.totalorder %s12, 0
    %p74 = por %p72, %p73
    %p75 = scmp.ne.s32.totalorder %s67, %s69
    %p76 = scmp.eq.s32.totalorder %s17, 1
    %p77 = por %p75, %p76
    %p78 = scmp.ne.s32.totalorder %s69, %s70
    %p79 = scmp.eq.s32.totalorder %s17, 0
    %p80 = por %p78, %p79
    %p81 = scmp.ne.s32.totalorder %s69, %s70
    %p82 = scmp.eq.s32.totalorder %s18, 1
    %p83 = por %p81, %p82
    %p85 = scmp.ne.s32.totalorder %s70, %s84
    %p86 = scmp.eq.s32.totalorder %s18, 0
    %p87 = por %p85, %p86
    %s89 = sadd.s32 %s88, 1
    %p92 = scmp.eq.s32.totalorder %s12, 1
    %p93 = scmp.ne.s32.totalorder %s88, %s90
    %p94 = scmp.eq.s32.totalorder %s12, 0
    %p95 = por %p93, %p94
    %p96 = scmp.ne.s32.totalorder %s88, %s90
    %p97 = scmp.eq.s32.totalorder %s17, 1
    %p98 = por %p96, %p97
    %p99 = scmp.ne.s32.totalorder %s90, %s91
    %p100 = scmp.eq.s32.totalorder %s17, 0
    %p101 = por %p99, %p100
    %p102 = scmp.ne.s32.totalorder %s90, %s91
    %p103 = scmp.eq.s32.totalorder %s18, 1
    %p104 = por %p102, %p103
    %p106 = scmp.ne.s32.totalorder %s91, %s105
    %p107 = scmp.eq.s32.totalorder %s18, 0
    %p108 = por %p106, %p107
    %s109 = ssub.s32 %s12, %s19
    %p110 = scmp.eq.s32.totalorder %s109, 0
    %s112 = sadd.s32 %s111, 1
    %s113 = scalar_select %p110, %s111, %s112
    %p116 = pneg %p110
    %p117 = scmp.eq.s32.totalorder %s12, 1
    %p118 = por %p116, %p117
    %p119 = scmp.ne.s32.totalorder %s111, %s114
    %p120 = scmp.eq.s32.totalorder %s12, 0
    %p121 = por %p119, %p120
    %p122 = scmp.ne.s32.totalorder %s111, %s114
    %p123 = scmp.eq.s32.totalorder %s17, 1
    %p124 = por %p122, %p123
    %p125 = scmp.ne.s32.totalorder %s114, %s115
    %p126 = scmp.eq.s32.totalorder %s17, 0
    %p127 = por %p125, %p126
    %p128 = scmp.ne.s32.totalorder %s114, %s115
    %p129 = scmp.eq.s32.totalorder %s18, 1
    %p130 = por %p128, %p129
    %p132 = scmp.ne.s32.totalorder %s115, %s131
    %p133 = scmp.eq.s32.totalorder %s18, 0
    %p134 = por %p132, %p133
    %s135 = ssub.s32 %s12, %s19
    %p136 = scmp.eq.s32.totalorder %s135, 0
    %s138 = sadd.s32 %s137, 1
    %s139 = scalar_select %p136, %s137, %s138
    %p142 = pneg %p136
    %p143 = scmp.eq.s32.totalorder %s12, 1
    %p144 = por %p142, %p143
    %p145 = scmp.ne.s32.totalorder %s137, %s140
    %p146 = scmp.eq.s32.totalorder %s12, 0
    %p147 = por %p145, %p146
    %p148 = scmp.ne.s32.totalorder %s137, %s140
    %p149 = scmp.eq.s32.totalorder %s17, 1
    %p150 = por %p148, %p149
    %p151 = scmp.ne.s32.totalorder %s140, %s141
    %p152 = scmp.eq.s32.totalorder %s17, 0
    %p153 = por %p151, %p152
    %p154 = scmp.ne.s32.totalorder %s140, %s141
    %p155 = scmp.eq.s32.totalorder %s18, 1
    %p156 = por %p154, %p155
    %p158 = scmp.ne.s32.totalorder %s141, %s157
    %p159 = scmp.eq.s32.totalorder %s18, 0
    %p160 = por %p158, %p159
    %p161 = scmp.le.s32.totalorder 1, %s12
    %p162 = scmp.lt.s32.totalorder %s12, 3
    %p163 = pnand %p161, %p162
    %p164 = pneg %p163
    // Predicated region
    $region9: #{bottleneck_forward.5} parent=5 // pred_check
      _
    $region10: #{bottleneck_forward.5} parent=5 // pred_check_branch
      %166 = sbr.rel (%p163) target = $region12
    $region11: #{bottleneck_forward.5} parent=5 // pred_region
      %s167 = ssub.s32 %s12, 1
      // Predicated region
      $region13: #{bottleneck_forward.5} parent=11 // pred_check
        %p168 = pneg %p59
      $region14: #{bottleneck_forward.5} parent=11 // pred_check_branch
        %170 = sbr.rel (%p168) target = $region16
      $region15: #{bottleneck_forward.5} parent=11 // pred_region
        _
      $region16: #{bottleneck_forward.5} parent=11 // pred_fallthru
        _
      // Predicated region
      $region17: #{bottleneck_forward.5} parent=11 // pred_check
        %p171 = pneg %p80
      $region18: #{bottleneck_forward.5} parent=11 // pred_check_branch
        %173 = sbr.rel (%p171) target = $region20
      $region19: #{bottleneck_forward.5} parent=11 // pred_region
        _
      $region20: #{bottleneck_forward.5} parent=11 // pred_fallthru
        _
      // Predicated region
      $region21: #{bottleneck_forward.5} parent=11 // pred_check
        %p174 = pneg %p101
      $region22: #{bottleneck_forward.5} parent=11 // pred_check_branch
        %176 = sbr.rel (%p174) target = $region24
      $region23: #{bottleneck_forward.5} parent=11 // pred_region
        _
      $region24: #{bottleneck_forward.5} parent=11 // pred_fallthru
        _
    $region12: #{bottleneck_forward.5} parent=5 // pred_fallthru
      _
    %p177 = scmp.lt.s32.totalorder %s12, 2
    // Predicated region
    $region25: #{bottleneck_forward.5} parent=5 // pred_check
      %p178 = pneg %p177
    $region26: #{bottleneck_forward.5} parent=5 // pred_check_branch
      %180 = sbr.rel (%p178) target = $region28
    $region27: #{bottleneck_forward.5} parent=5 // pred_region
      // Predicated region
      $region29: #{bottleneck_forward.5} parent=27 // pred_check
        %p181 = pneg %p32
      $region30: #{bottleneck_forward.5} parent=27 // pred_check_branch
        %183 = sbr.rel (%p181) target = $region32
      $region31: #{bottleneck_forward.5} parent=27 // pred_region
        %s184 = smul.u32 8, %s12
        %p185 = scmp.lt.s32.totalorder %s184, 15
        %s186 = scalar_select %p185, %s184, 15
        %s187 = smul.addr %s186, 8
        %s188 = scalar_lea.vmem %s0, %s187
        %s189 = smul.u32 8, %s12
      $region32: #{bottleneck_forward.5} parent=27 // pred_fallthru
        _
    $region28: #{bottleneck_forward.5} parent=5 // pred_fallthru
      _
    %p190 = scmp.le.s32.totalorder 1, %s12
    %p191 = scmp.lt.s32.totalorder %s12, 3
    %p192 = pnand %p190, %p191
    %p193 = pneg %p192
    // Predicated region
    $region33: #{bottleneck_forward.5} parent=5 // pred_check
      _
    $region34: #{bottleneck_forward.5} parent=5 // pred_check_branch
      %195 = sbr.rel (%p192) target = $region36
    $region35: #{bottleneck_forward.5} parent=5 // pred_region
      %s196 = ssub.s32 %s12, 1
      %s197 = smul.u32 8, %s17
      %p198 = scmp.lt.s32.totalorder %s197, 15
      %s199 = scalar_select %p198, %s197, 15
      %s200 = smul.addr %s199, 8
      %s201 = scalar_lea.vmem %s0, %s200
      %p202 = pneg %p38
      %p203 = pneg %p35
      %p204 = pneg %p59
      %p205 = pneg %p56
      %p206 = pneg %p80
      %p207 = pneg %p77
      %p208 = pneg %p101
      %p209 = pneg %p98
      %p210 = pneg %p127
      %p211 = pneg %p124
      %s212 = smul.u32 8, %s17
      %p213 = scmp.lt.s32.totalorder %s212, 15
      %s214 = scalar_select %p213, %s212, 15
      %s215 = smul.addr %s214, 8
      %s216 = scalar_lea.vmem %s4, %s215
      %p217 = pneg %p153
      %p218 = pneg %p150
      %p219 = scmp.lt.s32.totalorder %s17, 1
      %s220 = scalar_select %p219, %s17, 1
      %s221 = scalar_lea.vmem %s5, %s220
      %s222 = smul.u32 8, %s17
      %p223 = scmp.lt.s32.totalorder %s222, 15
      %s224 = scalar_select %p223, %s222, 15
      %s225 = smul.addr %s224, 8
      %s226 = scalar_lea.vmem %s0, %s225
      %s227 = smul.u32 8, %s17
      %s228 = smul.u32 8, %s17
      %p229 = scmp.lt.s32.totalorder %s228, 15
      %s230 = scalar_select %p229, %s228, 15
      %s231 = smul.addr %s230, 8
      %s232 = scalar_lea.vmem %s4, %s231
      %s233 = smul.u32 8, %s17
      %p234 = scmp.lt.s32.totalorder %s17, 1
      %s235 = scalar_select %p234, %s17, 1
      %s236 = scalar_lea.vmem %s5, %s235
      %v237 = vld [vmem:[%s226] sm:$0xff]
      %v238 = vld [vmem:[%s226 + $0x8] sm:$0xff]
      %v239 = vld [vmem:[%s226 + $0x10] sm:$0xff]
      %v240 = vld [vmem:[%s226 + $0x18] sm:$0xff]
      %v241 = vld [vmem:[%s226 + $0x20] sm:$0xff]
      %v242 = vld [vmem:[%s226 + $0x28] sm:$0xff]
      %v243 = vld [vmem:[%s226 + $0x30] sm:$0xff]
      %v244 = vld [vmem:[%s226 + $0x38] sm:$0xff]
      %v245 = vld [vmem:[%s1] sm:$0x1]
      %v247 = vlaneseq
      %v248 = vshrl.u32 %v247, 7
      %v249 = vsub.s32 0, %v248
      %v250 = vrot.slane %v245, %v249
      %v252 = vmul.f32 %v237, %v250
      %v253 = vmul.f32 %v238, %v250
      %v254 = vmul.f32 %v239, %v250
      %v255 = vmul.f32 %v240, %v250
      %v256 = vmul.f32 %v241, %v250
      %v257 = vmul.f32 %v242, %v250
      %v258 = vmul.f32 %v243, %v250
      %v259 = vmul.f32 %v244, %v250
      %v260 = vld [vmem:[%s2] sm:$0x1]
      %v262 = vlaneseq
      %v263 = vshrl.u32 %v262, 7
      %v264 = vsub.s32 0, %v263
      %v265 = vrot.slane %v260, %v264
      %v267 = vadd.f32 %v252, %v265
      %v268 = vadd.f32 %v253, %v265
      %v269 = vadd.f32 %v254, %v265
      %v270 = vadd.f32 %v255, %v265
      %v271 = vadd.f32 %v256, %v265
      %v272 = vadd.f32 %v257, %v265
      %v273 = vadd.f32 %v258, %v265
      %v274 = vadd.f32 %v259, %v265
      %v275 = vmax.f32 %v267, 0.0
      %v276 = vmax.f32 %v268, 0.0
      %v277 = vmax.f32 %v269, 0.0
      %v278 = vmax.f32 %v270, 0.0
      %v279 = vmax.f32 %v271, 0.0
      %v280 = vmax.f32 %v272, 0.0
      %v281 = vmax.f32 %v273, 0.0
      %v282 = vmax.f32 %v274, 0.0
      %v283 = vlaneseq
      %v284 = vshrl.u32 %v283, 7
      %v285 = vadd.s32 %v284, 8
      %v286 = vadd.s32 %v284, 16
      %v287 = vadd.s32 %v284, 24
      %v288 = vadd.s32 %v284, 32
      %v289 = vadd.s32 %v284, 40
      %v290 = vadd.s32 %v284, 48
      %v291 = vadd.s32 %v284, 56
      %vm292 = vcmp.lt.s32.totalorder %v284, 0
      %v293 = vsub.s32 0, %v284
      %v294 = vsel %vm292, %v293, %v284
      %v295 = vshrl.u32 %v294, 3
      %v296 = vand.u32 %v294, 7
      %v297 = vsub.s32 0, %v296
      %v298 = vsel %vm292, %v297, %v296
      %vm299 = vcmp.lt.s32.totalorder %v285, 0
      %v300 = vsub.s32 0, %v285
      %v301 = vsel %vm299, %v300, %v285
      %v302 = vshrl.u32 %v301, 3
      %v303 = vand.u32 %v301, 7
      %v304 = vsub.s32 0, %v303
      %v305 = vsel %vm299, %v304, %v303
      %vm306 = vcmp.lt.s32.totalorder %v286, 0
      %v307 = vsub.s32 0, %v286
      %v308 = vsel %vm306, %v307, %v286
      %v309 = vshrl.u32 %v308, 3
      %v310 = vand.u32 %v308, 7
      %v311 = vsub.s32 0, %v310
      %v312 = vsel %vm306, %v311, %v310
      %vm313 = vcmp.lt.s32.totalorder %v287, 0
      %v314 = vsub.s32 0, %v287
      %v315 = vsel %vm313, %v314, %v287
      %v316 = vshrl.u32 %v315, 3
      %v317 = vand.u32 %v315, 7
      %v318 = vsub.s32 0, %v317
      %v319 = vsel %vm313, %v318, %v317
      %vm320 = vcmp.lt.s32.totalorder %v288, 0
      %v321 = vsub.s32 0, %v288
      %v322 = vsel %vm320, %v321, %v288
      %v323 = vshrl.u32 %v322, 3
      %v324 = vand.u32 %v322, 7
      %v325 = vsub.s32 0, %v324
      %v326 = vsel %vm320, %v325, %v324
      %vm327 = vcmp.lt.s32.totalorder %v289, 0
      %v328 = vsub.s32 0, %v289
      %v329 = vsel %vm327, %v328, %v289
      %v330 = vshrl.u32 %v329, 3
      %v331 = vand.u32 %v329, 7
      %v332 = vsub.s32 0, %v331
      %v333 = vsel %vm327, %v332, %v331
      %vm334 = vcmp.lt.s32.totalorder %v290, 0
      %v335 = vsub.s32 0, %v290
      %v336 = vsel %vm334, %v335, %v290
      %v337 = vshrl.u32 %v336, 3
      %v338 = vand.u32 %v336, 7
      %v339 = vsub.s32 0, %v338
      %v340 = vsel %vm334, %v339, %v338
      %vm341 = vcmp.lt.s32.totalorder %v291, 0
      %v342 = vsub.s32 0, %v291
      %v343 = vsel %vm341, %v342, %v291
      %v344 = vshrl.u32 %v343, 3
      %v345 = vand.u32 %v343, 7
      %v346 = vsub.s32 0, %v345
      %v347 = vsel %vm341, %v346, %v345
      %vm348 = vcmp.ne.s32.totalorder %v298, 0
      %vm349 = vcmp.ne.s32.totalorder %v305, 0
      %vm350 = vcmp.ne.s32.totalorder %v312, 0
      %vm351 = vcmp.ne.s32.totalorder %v319, 0
      %vm352 = vcmp.ne.s32.totalorder %v326, 0
      %vm353 = vcmp.ne.s32.totalorder %v333, 0
      %vm354 = vcmp.ne.s32.totalorder %v340, 0
      %vm355 = vcmp.ne.s32.totalorder %v347, 0
      %vm356 = vcmp.lt.s32.totalorder %v298, 0
      %vm357 = vcmp.lt.s32.totalorder %v305, 0
      %vm358 = vcmp.lt.s32.totalorder %v312, 0
      %vm359 = vcmp.lt.s32.totalorder %v319, 0
      %vm360 = vcmp.lt.s32.totalorder %v326, 0
      %vm361 = vcmp.lt.s32.totalorder %v333, 0
      %vm362 = vcmp.lt.s32.totalorder %v340, 0
      %vm363 = vcmp.lt.s32.totalorder %v347, 0
      %vm364 = vmand %vm356, %vm348
      %vm365 = vmand %vm357, %vm349
      %vm366 = vmand %vm358, %vm350
      %vm367 = vmand %vm359, %vm351
      %vm368 = vmand %vm360, %vm352
      %vm369 = vmand %vm361, %vm353
      %vm370 = vmand %vm362, %vm354
      %vm371 = vmand %vm363, %vm355
      %v372 = vadd.s32 %v298, 8
      %v373 = vadd.s32 %v305, 8
      %v374 = vadd.s32 %v312, 8
      %v375 = vadd.s32 %v319, 8
      %v376 = vadd.s32 %v326, 8
      %v377 = vadd.s32 %v333, 8
      %v378 = vadd.s32 %v340, 8
      %v379 = vadd.s32 %v347, 8
      %v380 = vsel %vm364, %v372, %v298
      %v381 = vsel %vm365, %v373, %v305
      %v382 = vsel %vm366, %v374, %v312
      %v383 = vsel %vm367, %v375, %v319
      %v384 = vsel %vm368, %v376, %v326
      %v385 = vsel %vm369, %v377, %v333
      %v386 = vsel %vm370, %v378, %v340
      %v387 = vsel %vm371, %v379, %v347
      %vm388 = vcmp.eq.s32.totalorder %v380, 7
      %vm389 = vcmp.eq.s32.totalorder %v381, 7
      %vm390 = vcmp.eq.s32.totalorder %v382, 7
      %vm391 = vcmp.eq.s32.totalorder %v383, 7
      %vm392 = vcmp.eq.s32.totalorder %v384, 7
      %vm393 = vcmp.eq.s32.totalorder %v385, 7
      %vm394 = vcmp.eq.s32.totalorder %v386, 7
      %vm395 = vcmp.eq.s32.totalorder %v387, 7
      %v396 = vsel %vm388, 1, 0
      %v397 = vsel %vm389, 1, 0
      %v398 = vsel %vm390, 1, 0
      %v399 = vsel %vm391, 1, 0
      %v400 = vsel %vm392, 1, 0
      %v401 = vsel %vm393, 1, 0
      %v402 = vsel %vm394, 1, 0
      %v403 = vsel %vm395, 1, 0
      %vm404 = vcmp.eq.s32.totalorder %v396, 1
      %vm405 = vcmp.eq.s32.totalorder %v397, 1
      %vm406 = vcmp.eq.s32.totalorder %v398, 1
      %vm407 = vcmp.eq.s32.totalorder %v399, 1
      %vm408 = vcmp.eq.s32.totalorder %v400, 1
      %vm409 = vcmp.eq.s32.totalorder %v401, 1
      %vm410 = vcmp.eq.s32.totalorder %v402, 1
      %vm411 = vcmp.eq.s32.totalorder %v403, 1
      %v412 = vsel %vm404, 0.0, %v275
      %v413 = vsel %vm405, 0.0, %v276
      %v414 = vsel %vm406, 0.0, %v277
      %v415 = vsel %vm407, 0.0, %v278
      %v416 = vsel %vm408, 0.0, %v279
      %v417 = vsel %vm409, 0.0, %v280
      %v418 = vsel %vm410, 0.0, %v281
      %v419 = vsel %vm411, 0.0, %v282
      %vm420 = vcmp.eq.s32.totalorder %v380, 0
      %vm421 = vcmp.eq.s32.totalorder %v381, 0
      %vm422 = vcmp.eq.s32.totalorder %v382, 0
      %vm423 = vcmp.eq.s32.totalorder %v383, 0
      %vm424 = vcmp.eq.s32.totalorder %v384, 0
      %vm425 = vcmp.eq.s32.totalorder %v385, 0
      %vm426 = vcmp.eq.s32.totalorder %v386, 0
      %vm427 = vcmp.eq.s32.totalorder %v387, 0
      %v428 = vsel %vm420, 1, 0
      %v429 = vsel %vm421, 1, 0
      %v430 = vsel %vm422, 1, 0
      %v431 = vsel %vm423, 1, 0
      %v432 = vsel %vm424, 1, 0
      %v433 = vsel %vm425, 1, 0
      %v434 = vsel %vm426, 1, 0
      %v435 = vsel %vm427, 1, 0
      %vm436 = vcmp.eq.s32.totalorder %v428, 1
      %vm437 = vcmp.eq.s32.totalorder %v429, 1
      %vm438 = vcmp.eq.s32.totalorder %v430, 1
      %vm439 = vcmp.eq.s32.totalorder %v431, 1
      %vm440 = vcmp.eq.s32.totalorder %v432, 1
      %vm441 = vcmp.eq.s32.totalorder %v433, 1
      %vm442 = vcmp.eq.s32.totalorder %v434, 1
      %vm443 = vcmp.eq.s32.totalorder %v435, 1
      %v444 = vsel %vm436, 0.0, %v275
      %v445 = vsel %vm437, 0.0, %v276
      %v446 = vsel %vm438, 0.0, %v277
      %v447 = vsel %vm439, 0.0, %v278
      %v448 = vsel %vm440, 0.0, %v279
      %v449 = vsel %vm441, 0.0, %v280
      %v450 = vsel %vm442, 0.0, %v281
      %v451 = vsel %vm443, 0.0, %v282
      %vm460 = vcmask 1040384
      %v461 = vrot.slane %v412, 7
      %v462 = vrot.slane %v413, 7
      %v463 = vsel %vm460, %v461, %v462
      %v464 = vrot.slane %v414, 7
      %v465 = vsel %vm460, %v462, %v464
      %v466 = vrot.slane %v415, 7
      %v467 = vsel %vm460, %v464, %v466
      %v468 = vrot.slane %v416, 7
      %v469 = vsel %vm460, %v466, %v468
      %v470 = vrot.slane %v417, 7
      %v471 = vsel %vm460, %v468, %v470
      %v472 = vrot.slane %v418, 7
      %v473 = vsel %vm460, %v470, %v472
      %v474 = vrot.slane %v419, 7
      %v475 = vsel %vm460, %v472, %v474
      %v484 = vsel %vm460, 0.0, %v461
      %vm493 = vcmask 1046528
      %v494 = vrot.slane %v444, 1
      %v495 = vrot.slane %v445, 1
      %v496 = vsel %vm493, %v494, %v495
      %v497 = vrot.slane %v446, 1
      %v498 = vsel %vm493, %v495, %v497
      %v499 = vrot.slane %v447, 1
      %v500 = vsel %vm493, %v497, %v499
      %v501 = vrot.slane %v448, 1
      %v502 = vsel %vm493, %v499, %v501
      %v503 = vrot.slane %v449, 1
      %v504 = vsel %vm493, %v501, %v503
      %v505 = vrot.slane %v450, 1
      %v506 = vsel %vm493, %v503, %v505
      %v507 = vrot.slane %v451, 1
      %v508 = vsel %vm493, %v505, %v507
      %v510 = vsel %vm493, %v507, 0.0
      %vm511 = vcmask 785408
      %512 = vst.msk [vmem:[#allocation2] sm:$0xff] %vm511, 0.0
      %513 = vst.msk [vmem:[#allocation2 + $0x8] sm:$0xff] %vm511, 0.0
      %514 = vst.msk [vmem:[#allocation2 + $0x50] sm:$0xff] %vm511, 0.0
      %vm515 = vcmask 261120
      %516 = vst.msk [vmem:[#allocation2 + $0x10] sm:$0xff] %vm515, %v484
      %517 = vst.msk [vmem:[#allocation2 + $0x18] sm:$0xff] %vm515, %v463
      %518 = vst.msk [vmem:[#allocation2 + $0x20] sm:$0xff] %vm515, %v465
      %519 = vst.msk [vmem:[#allocation2 + $0x28] sm:$0xff] %vm515, %v467
      %520 = vst.msk [vmem:[#allocation2 + $0x30] sm:$0xff] %vm515, %v469
      %521 = vst.msk [vmem:[#allocation2 + $0x38] sm:$0xff] %vm515, %v471
      %522 = vst.msk [vmem:[#allocation2 + $0x40] sm:$0xff] %vm515, %v473
      %523 = vst.msk [vmem:[#allocation2 + $0x48] sm:$0xff] %vm515, %v475
      %532 = vrot.lane.b32.xlu0 %v275, 32
      %v533 = vpop.permute.xlu0 %532
      %534 = vrot.lane.b32.xlu0 %v276, 32
      %v535 = vpop.permute.xlu0 %534
      %536 = vrot.lane.b32.xlu0 %v277, 32
      %v537 = vpop.permute.xlu0 %536
      %538 = vrot.lane.b32.xlu0 %v278, 32
      %v539 = vpop.permute.xlu0 %538
      %540 = vrot.lane.b32.xlu0 %v279, 32
      %v541 = vpop.permute.xlu0 %540
      %542 = vrot.lane.b32.xlu0 %v280, 32
      %v543 = vpop.permute.xlu0 %542
      %544 = vrot.lane.b32.xlu0 %v281, 32
      %v545 = vpop.permute.xlu0 %544
      %546 = vrot.lane.b32.xlu0 %v282, 32
      %v547 = vpop.permute.xlu0 %546
      %vm556 = vcmask 523520
      %557 = vst.msk [vmem:[#allocation2 + $0x10] sm:$0xff] %vm556, %v533
      %558 = vst.msk [vmem:[#allocation2 + $0x18] sm:$0xff] %vm556, %v535
      %559 = vst.msk [vmem:[#allocation2 + $0x20] sm:$0xff] %vm556, %v537
      %560 = vst.msk [vmem:[#allocation2 + $0x28] sm:$0xff] %vm556, %v539
      %561 = vst.msk [vmem:[#allocation2 + $0x30] sm:$0xff] %vm556, %v541
      %562 = vst.msk [vmem:[#allocation2 + $0x38] sm:$0xff] %vm556, %v543
      %563 = vst.msk [vmem:[#allocation2 + $0x40] sm:$0xff] %vm556, %v545
      %564 = vst.msk [vmem:[#allocation2 + $0x48] sm:$0xff] %vm556, %v547
      %566 = vrot.lane.b32.xlu0 %v496, 64
      %v567 = vpop.permute.xlu0 %566
      %568 = vrot.lane.b32.xlu0 %v498, 64
      %v569 = vpop.permute.xlu0 %568
      %570 = vrot.lane.b32.xlu0 %v500, 64
      %v571 = vpop.permute.xlu0 %570
      %572 = vrot.lane.b32.xlu0 %v502, 64
      %v573 = vpop.permute.xlu0 %572
      %574 = vrot.lane.b32.xlu0 %v504, 64
      %v575 = vpop.permute.xlu0 %574
      %576 = vrot.lane.b32.xlu0 %v506, 64
      %v577 = vpop.permute.xlu0 %576
      %578 = vrot.lane.b32.xlu0 %v508, 64
      %v579 = vpop.permute.xlu0 %578
      %580 = vrot.lane.b32.xlu0 %v510, 64
      %v581 = vpop.permute.xlu0 %580
      %vm590 = vcmask 785920
      %591 = vst.msk [vmem:[#allocation2 + $0x10] sm:$0xff] %vm590, %v567
      %592 = vst.msk [vmem:[#allocation2 + $0x18] sm:$0xff] %vm590, %v569
      %593 = vst.msk [vmem:[#allocation2 + $0x20] sm:$0xff] %vm590, %v571
      %594 = vst.msk [vmem:[#allocation2 + $0x28] sm:$0xff] %vm590, %v573
      %595 = vst.msk [vmem:[#allocation2 + $0x30] sm:$0xff] %vm590, %v575
      %596 = vst.msk [vmem:[#allocation2 + $0x38] sm:$0xff] %vm590, %v577
      %597 = vst.msk [vmem:[#allocation2 + $0x40] sm:$0xff] %vm590, %v579
      %598 = vst.msk [vmem:[#allocation2 + $0x48] sm:$0xff] %vm590, %v581
      %v599 = vld [vmem:[#allocation2 + $0x8] sm:$0xff]
      %v600 = vld [vmem:[#allocation2 + $0x10] sm:$0xff]
      %v601 = vld [vmem:[#allocation2 + $0x18] sm:$0xff]
      %v602 = vld [vmem:[#allocation2 + $0x20] sm:$0xff]
      %v603 = vld [vmem:[#allocation2 + $0x28] sm:$0xff]
      %v604 = vld [vmem:[#allocation2 + $0x30] sm:$0xff]
      %v605 = vld [vmem:[#allocation2 + $0x38] sm:$0xff]
      %v606 = vld [vmem:[#allocation2 + $0x40] sm:$0xff]
      %v607 = vld [vmem:[%s3] sm:$0xff]
      %v608 = vld [vmem:[%s3 + $0x8] sm:$0xff]
      %v609 = vld [vmem:[%s3 + $0x10] sm:$0xff]
      %v610 = vld [vmem:[%s3 + $0x18] sm:$0xff]
      %v611 = vld [vmem:[%s3 + $0x20] sm:$0xff]
      %v612 = vld [vmem:[%s3 + $0x28] sm:$0xff]
      %v613 = vld [vmem:[%s3 + $0x30] sm:$0xff]
      %v614 = vld [vmem:[%s3 + $0x38] sm:$0xff]
      %v615 = vld [vmem:[%s3 + $0x40] sm:$0xff]
      %v616 = vld [vmem:[%s3 + $0x48] sm:$0xff]
      %v617 = vld [vmem:[%s3 + $0x50] sm:$0xff]
      %v618 = vld [vmem:[%s3 + $0x58] sm:$0xff]
      %v619 = vld [vmem:[#allocation2 + $0x48] sm:$0xff]
      %s620 = scalar_lea.vmem %s3, 96
      %v621 = vld [vmem:[%s620] sm:$0xff]
      %v622 = vld [vmem:[%s620 + $0x8] sm:$0xff]
      %v623 = vld [vmem:[%s620 + $0x10] sm:$0xff]
      %v624 = vld [vmem:[%s620 + $0x18] sm:$0xff]
      %v625 = vld [vmem:[%s620 + $0x20] sm:$0xff]
      %v626 = vld [vmem:[%s620 + $0x28] sm:$0xff]
      %v627 = vld [vmem:[%s620 + $0x30] sm:$0xff]
      %v628 = vld [vmem:[%s620 + $0x38] sm:$0xff]
      %v629 = vld [vmem:[%s620 + $0x40] sm:$0xff]
      %v630 = vld [vmem:[%s620 + $0x48] sm:$0xff]
      %v631 = vld [vmem:[%s620 + $0x50] sm:$0xff]
      %v632 = vld [vmem:[%s620 + $0x58] sm:$0xff]
      %v634 = vsel %vm511, %v600, 0
      %v637 = vsel %vm511, %v601, 0
      %v640 = vsel %vm511, %v602, 0
      %v643 = vsel %vm511, %v603, 0
      %v646 = vsel %vm511, %v604, 0
      %v649 = vsel %vm511, %v605, 0
      %v652 = vsel %vm511, %v606, 0
      %v655 = vsel %vm511, %v619, 0
      %657 = vmatprep.subr.mxu0 0.0
      %658 = vmatpush1.msra.mxu0 %v621
      %659 = vmatprep.subr.mxu0 0.0
      %660 = vmatpush1.msra.mxu0 %v622
      %661 = vmatprep.subr.mxu0 0.0
      %662 = vmatpush1.msra.mxu0 %v623
      %663 = vmatprep.subr.mxu0 0.0
      %664 = vmatpush1.msra.mxu0 %v624
      %665 = vmatprep.subr.mxu0 0.0
      %666 = vmatpush1.msra.mxu0 %v625
      %667 = vmatprep.subr.mxu0 0.0
      %668 = vmatpush1.msra.mxu0 %v626
      %669 = vmatprep.subr.mxu0 0.0
      %670 = vmatpush1.msra.mxu0 %v627
      %671 = vmatprep.subr.mxu0 0.0
      %672 = vmatpush1.msra.mxu0 %v628
      %673 = vmatprep.subr.mxu0 0.0
      %674 = vmatpush1.msra.mxu0 %v629
      %675 = vmatprep.subr.mxu0 0.0
      %676 = vmatpush1.msra.mxu0 %v630
      %677 = vmatprep.subr.mxu0 0.0
      %678 = vmatpush1.msra.mxu0 %v631
      %679 = vmatprep.subr.mxu0 0.0
      %680 = vmatpush1.msra.mxu0 %v632
      %681 = vmatprep.subr.mxu0 0.0
      %682 = vmatpush1.msra.mxu0 0.0
      %683 = vmatprep.subr.mxu0 0.0
      %684 = vmatpush1.msra.mxu0 0.0
      %685 = vmatprep.subr.mxu0 0.0
      %686 = vmatpush1.msra.mxu0 0.0
      %687 = vmatprep.subr.mxu0 0.0
      %688 = vmatpush1.msra.mxu0 0.0
      %689 = vmatprep.subr.mxu0 0.0
      %690 = vmatpush1.msra.mxu0 0.0
      %691 = vmatprep.subr.mxu0 0.0
      %692 = vmatpush1.msra.mxu0 0.0
      %693 = vmatprep.subr.mxu0 0.0
      %694 = vmatpush1.msra.mxu0 0.0
      %695 = vmatprep.subr.mxu0 0.0
      %696 = vmatpush1.msra.mxu0 0.0
      %697 = vmatprep.subr.mxu0 0.0
      %698 = vmatpush1.msra.mxu0 0.0
      %699 = vmatprep.subr.mxu0 0.0
      %700 = vmatpush1.msra.mxu0 0.0
      %701 = vmatprep.subr.mxu0 0.0
      %702 = vmatpush1.msra.mxu0 0.0
      %703 = vmatprep.subr.mxu0 0.0
      %704 = vmatpush1.msra.mxu0 0.0
      %705 = vmatprep.subr.mxu0 0.0
      %706 = vmatpush1.msra.mxu0 0.0
      %707 = vmatprep.subr.mxu0 0.0
      %708 = vmatpush1.msra.mxu0 0.0
      %709 = vmatprep.subr.mxu0 0.0
      %710 = vmatpush1.msra.mxu0 0.0
      %711 = vmatprep.subr.mxu0 0.0
      %712 = vmatpush1.msra.mxu0 0.0
      %713 = vmatprep.subr.mxu0 0.0
      %714 = vmatpush1.msra.mxu0 0.0
      %715 = vmatprep.subr.mxu0 0.0
      %716 = vmatpush1.msra.mxu0 0.0
      %717 = vmatprep.subr.mxu0 0.0
      %718 = vmatpush1.msra.mxu0 0.0
      %719 = vmatprep.subr.mxu0 0.0
      %720 = vmatpush1.msra.mxu0 0.0
      %721 = vmatprep.mubr.f32.mxu0 0.0
      %722 = vmatmul.mubr.f32.gmra.mrb[0].mxu0 %v634
      %v723 = vpop.f32.mrb[0].mxu0
      %v724 = vadd.f32 0.0, %v723
      %v725 = vpop.f32.mrb[0].mxu0
      %726 = vmatprep.mubr.f32.mxu0 0.0
      %727 = vmatmul.mubr.f32.gmra.mrb[0].mxu0 %v637
      %v728 = vpop.f32.mrb[0].mxu0
      %v729 = vadd.f32 0.0, %v728
      %v730 = vpop.f32.mrb[0].mxu0
      %731 = vmatprep.mubr.f32.mxu0 0.0
      %732 = vmatmul.mubr.f32.gmra.mrb[0].mxu0 %v640
      %v733 = vpop.f32.mrb[0].mxu0
      %v734 = vadd.f32 0.0, %v733
      %v735 = vpop.f32.mrb[0].mxu0
      %736 = vmatprep.mubr.f32.mxu0 0.0
      %737 = vmatmul.mubr.f32.gmra.mrb[0].mxu0 %v643
      %v738 = vpop.f32.mrb[0].mxu0
      %v739 = vadd.f32 0.0, %v738
      %v740 = vpop.f32.mrb[0].mxu0
      %741 = vmatprep.mubr.f32.mxu0 0.0
      %742 = vmatmul.mubr.f32.gmra.mrb[0].mxu0 %v646
      %v743 = vpop.f32.mrb[0].mxu0
      %v744 = vadd.f32 0.0, %v743
      %v745 = vpop.f32.mrb[0].mxu0
      %746 = vmatprep.mubr.f32.mxu0 0.0
      %747 = vmatmul.mubr.f32.gmra.mrb[0].mxu0 %v649
      %v748 = vpop.f32.mrb[0].mxu0
      %v749 = vadd.f32 0.0, %v748
      %v750 = vpop.f32.mrb[0].mxu0
      %751 = vmatprep.mubr.f32.mxu0 0.0
      %752 = vmatmul.mubr.f32.gmra.mrb[0].mxu0 %v652
      %v753 = vpop.f32.mrb[0].mxu0
      %v754 = vadd.f32 0.0, %v753
      %v755 = vpop.f32.mrb[0].mxu0
      %756 = vmatprep.mubr.f32.mxu0 0.0
      %757 = vmatmul.mubr.f32.gmra.mrb[0].mxu0 %v655
      %v758 = vpop.f32.mrb[0].mxu0
      %v759 = vadd.f32 0.0, %v758
      %v760 = vpop.f32.mrb[0].mxu0
      %761 = vdwg.mxu0
      %v763 = vsel %vm511, %v599, 0
      %765 = vmatprep.subr.mxu0 0.0
      %766 = vmatpush1.msra.mxu0 %v607
      %767 = vmatprep.subr.mxu0 0.0
      %768 = vmatpush1.msra.mxu0 %v608
      %769 = vmatprep.subr.mxu0 0.0
      %770 = vmatpush1.msra.mxu0 %v609
      %771 = vmatprep.subr.mxu0 0.0
      %772 = vmatpush1.msra.mxu0 %v610
      %773 = vmatprep.subr.mxu0 0.0
      %774 = vmatpush1.msra.mxu0 %v611
      %775 = vmatprep.subr.mxu0 0.0
      %776 = vmatpush1.msra.mxu0 %v612
      %777 = vmatprep.subr.mxu0 0.0
      %778 = vmatpush1.msra.mxu0 %v613
      %779 = vmatprep.subr.mxu0 0.0
      %780 = vmatpush1.msra.mxu0 %v614
      %781 = vmatprep.subr.mxu0 0.0
      %782 = vmatpush1.msra.mxu0 %v615
      %783 = vmatprep.subr.mxu0 0.0
      %784 = vmatpush1.msra.mxu0 %v616
      %785 = vmatprep.subr.mxu0 0.0
      %786 = vmatpush1.msra.mxu0 %v617
      %787 = vmatprep.subr.mxu0 0.0
      %788 = vmatpush1.msra.mxu0 %v618
      %789 = vmatprep.subr.mxu0 0.0
      %790 = vmatpush1.msra.mxu0 0.0
      %791 = vmatprep.subr.mxu0 0.0
      %792 = vmatpush1.msra.mxu0 0.0
      %793 = vmatprep.subr.mxu0 0.0
      %794 = vmatpush1.msra.mxu0 0.0
      %795 = vmatprep.subr.mxu0 0.0
      %796 = vmatpush1.msra.mxu0 0.0
      %797 = vmatprep.subr.mxu0 0.0
      %798 = vmatpush1.msra.mxu0 0.0
      %799 = vmatprep.subr.mxu0 0.0
      %800 = vmatpush1.msra.mxu0 0.0
      %801 = vmatprep.subr.mxu0 0.0
      %802 = vmatpush1.msra.mxu0 0.0
      %803 = vmatprep.subr.mxu0 0.0
      %804 = vmatpush1.msra.mxu0 0.0
      %805 = vmatprep.subr.mxu0 0.0
      %806 = vmatpush1.msra.mxu0 0.0
      %807 = vmatprep.subr.mxu0 0.0
      %808 = vmatpush1.msra.mxu0 0.0
      %809 = vmatprep.subr.mxu0 0.0
      %810 = vmatpush1.msra.mxu0 0.0
      %811 = vmatprep.subr.mxu0 0.0
      %812 = vmatpush1.msra.mxu0 0.0
      %813 = vmatprep.subr.mxu0 0.0
      %814 = vmatpush1.msra.mxu0 0.0
      %815 = vmatprep.subr.mxu0 0.0
      %816 = vmatpush1.msra.mxu0 0.0
      %817 = vmatprep.subr.mxu0 0.0
      %818 = vmatpush1.msra.mxu0 0.0
      %819 = vmatprep.subr.mxu0 0.0
      %820 = vmatpush1.msra.mxu0 0.0
      %821 = vmatprep.subr.mxu0 0.0
      %822 = vmatpush1.msra.mxu0 0.0
      %823 = vmatprep.subr.mxu0 0.0
      %824 = vmatpush1.msra.mxu0 0.0
      %825 = vmatprep.subr.mxu0 0.0
      %826 = vmatpush1.msra.mxu0 0.0
      %827 = vmatprep.subr.mxu0 0.0
      %828 = vmatpush1.msra.mxu0 0.0
      %829 = vmatprep.mubr.f32.mxu0 0.0
      %830 = vmatmul.mubr.f32.gmra.mrb[0].mxu0 %v763
      %v831 = vpop.f32.mrb[0].mxu0
      %v832 = vadd.f32 %v724, %v831
      %v833 = vpop.f32.mrb[0].mxu0
      %834 = vmatprep.mubr.f32.mxu0 0.0
      %835 = vmatmul.mubr.f32.gmra.mrb[0].mxu0 %v634
      %v836 = vpop.f32.mrb[0].mxu0
      %v837 = vadd.f32 %v729, %v836
      %v838 = vpop.f32.mrb[0].mxu0
      %839 = vmatprep.mubr.f32.mxu0 0.0
      %840 = vmatmul.mubr.f32.gmra.mrb[0].mxu0 %v637
      %v841 = vpop.f32.mrb[0].mxu0
      %v842 = vadd.f32 %v734, %v841
      %v843 = vpop.f32.mrb[0].mxu0
      %844 = vmatprep.mubr.f32.mxu0 0.0
      %845 = vmatmul.mubr.f32.gmra.mrb[0].mxu0 %v640
      %v846 = vpop.f32.mrb[0].mxu0
      %v847 = vadd.f32 %v739, %v846
      %v848 = vpop.f32.mrb[0].mxu0
      %849 = vmatprep.mubr.f32.mxu0 0.0
      %850 = vmatmul.mubr.f32.gmra.mrb[0].mxu0 %v643
      %v851 = vpop.f32.mrb[0].mxu0
      %v852 = vadd.f32 %v744, %v851
      %v853 = vpop.f32.mrb[0].mxu0
      %854 = vmatprep.mubr.f32.mxu0 0.0
      %855 = vmatmul.mubr.f32.gmra.mrb[0].mxu0 %v646
      %v856 = vpop.f32.mrb[0].mxu0
      %v857 = vadd.f32 %v749, %v856
      %v858 = vpop.f32.mrb[0].mxu0
      %859 = vmatprep.mubr.f32.mxu0 0.0
      %860 = vmatmul.mubr.f32.gmra.mrb[0].mxu0 %v649
      %v861 = vpop.f32.mrb[0].mxu0
      %v862 = vadd.f32 %v754, %v861
      %v863 = vpop.f32.mrb[0].mxu0
      %864 = vmatprep.mubr.f32.mxu0 0.0
      %865 = vmatmul.mubr.f32.gmra.mrb[0].mxu0 %v652
      %v866 = vpop.f32.mrb[0].mxu0
      %v867 = vadd.f32 %v759, %v866
      %v868 = vpop.f32.mrb[0].mxu0
      %869 = vdwg.mxu0
      %v870 = vld [vmem:[#allocation2 + $0x18] sm:$0xff]
      %v871 = vld [vmem:[#allocation2 + $0x20] sm:$0xff]
      %v872 = vld [vmem:[#allocation2 + $0x28] sm:$0xff]
      %v873 = vld [vmem:[#allocation2 + $0x30] sm:$0xff]
      %v874 = vld [vmem:[#allocation2 + $0x38] sm:$0xff]
      %v875 = vld [vmem:[#allocation2 + $0x40] sm:$0xff]
      %v876 = vld [vmem:[#allocation2 + $0x48] sm:$0xff]
      %v877 = vld [vmem:[#allocation2 + $0x50] sm:$0xff]
      %s878 = scalar_lea.vmem %s3, 192
      %v879 = vld [vmem:[%s878] sm:$0xff]
      %v880 = vld [vmem:[%s878 + $0x8] sm:$0xff]
      %v881 = vld [vmem:[%s878 + $0x10] sm:$0xff]
      %v882 = vld [vmem:[%s878 + $0x18] sm:$0xff]
      %v883 = vld [vmem:[%s878 + $0x20] sm:$0xff]
      %v884 = vld [vmem:[%s878 + $0x28] sm:$0xff]
      %v885 = vld [vmem:[%s878 + $0x30] sm:$0xff]
      %v886 = vld [vmem:[%s878 + $0x38] sm:$0xff]
      %v887 = vld [vmem:[%s878 + $0x40] sm:$0xff]
      %v888 = vld [vmem:[%s878 + $0x48] sm:$0xff]
      %v889 = vld [vmem:[%s878 + $0x50] sm:$0xff]
      %v890 = vld [vmem:[%s878 + $0x58] sm:$0xff]
      %v892 = vsel %vm511, %v870, 0
      %v895 = vsel %vm511, %v871, 0
      %v898 = vsel %vm511, %v872, 0
      %v901 = vsel %vm511, %v873, 0
      %v904 = vsel %vm511, %v874, 0
      %v907 = vsel %vm511, %v875, 0
      %v910 = vsel %vm511, %v876, 0
      %v913 = vsel %vm511, %v877, 0
      %915 = vmatprep.subr.mxu0 0.0
      %916 = vmatpush1.msra.mxu0 %v879
      %917 = vmatprep.subr.mxu0 0.0
      %918 = vmatpush1.msra.mxu0 %v880
      %919 = vmatprep.subr.mxu0 0.0
      %920 = vmatpush1.msra.mxu0 %v881
      %921 = vmatprep.subr.mxu0 0.0
      %922 = vmatpush1.msra.mxu0 %v882
      %923 = vmatprep.subr.mxu0 0.0
      %924 = vmatpush1.msra.mxu0 %v883
      %925 = vmatprep.subr.mxu0 0.0
      %926 = vmatpush1.msra.mxu0 %v884
      %927 = vmatprep.subr.mxu0 0.0
      %928 = vmatpush1.msra.mxu0 %v885
      %929 = vmatprep.subr.mxu0 0.0
      %930 = vmatpush1.msra.mxu0 %v886
      %931 = vmatprep.subr.mxu0 0.0
      %932 = vmatpush1.msra.mxu0 %v887
      %933 = vmatprep.subr.mxu0 0.0
      %934 = vmatpush1.msra.mxu0 %v888
      %935 = vmatprep.subr.mxu0 0.0
      %936 = vmatpush1.msra.mxu0 %v889
      %937 = vmatprep.subr.mxu0 0.0
      %938 = vmatpush1.msra.mxu0 %v890
      %939 = vmatprep.subr.mxu0 0.0
      %940 = vmatpush1.msra.mxu0 0.0
      %941 = vmatprep.subr.mxu0 0.0
      %942 = vmatpush1.msra.mxu0 0.0
      %943 = vmatprep.subr.mxu0 0.0
      %944 = vmatpush1.msra.mxu0 0.0
      %945 = vmatprep.subr.mxu0 0.0
      %946 = vmatpush1.msra.mxu0 0.0
      %947 = vmatprep.subr.mxu0 0.0
      %948 = vmatpush1.msra.mxu0 0.0
      %949 = vmatprep.subr.mxu0 0.0
      %950 = vmatpush1.msra.mxu0 0.0
      %951 = vmatprep.subr.mxu0 0.0
      %952 = vmatpush1.msra.mxu0 0.0
      %953 = vmatprep.subr.mxu0 0.0
      %954 = vmatpush1.msra.mxu0 0.0
      %955 = vmatprep.subr.mxu0 0.0
      %956 = vmatpush1.msra.mxu0 0.0
      %957 = vmatprep.subr.mxu0 0.0
      %958 = vmatpush1.msra.mxu0 0.0
      %959 = vmatprep.subr.mxu0 0.0
      %960 = vmatpush1.msra.mxu0 0.0
      %961 = vmatprep.subr.mxu0 0.0
      %962 = vmatpush1.msra.mxu0 0.0
      %963 = vmatprep.subr.mxu0 0.0
      %964 = vmatpush1.msra.mxu0 0.0
      %965 = vmatprep.subr.mxu0 0.0
      %966 = vmatpush1.msra.mxu0 0.0
      %967 = vmatprep.subr.mxu0 0.0
      %968 = vmatpush1.msra.mxu0 0.0
      %969 = vmatprep.subr.mxu0 0.0
      %970 = vmatpush1.msra.mxu0 0.0
      %971 = vmatprep.subr.mxu0 0.0
      %972 = vmatpush1.msra.mxu0 0.0
      %973 = vmatprep.subr.mxu0 0.0
      %974 = vmatpush1.msra.mxu0 0.0
      %975 = vmatprep.subr.mxu0 0.0
      %976 = vmatpush1.msra.mxu0 0.0
      %977 = vmatprep.subr.mxu0 0.0
      %978 = vmatpush1.msra.mxu0 0.0
      %979 = vmatprep.mubr.f32.mxu0 0.0
      %980 = vmatmul.mubr.f32.gmra.mrb[0].mxu0 %v892
      %v981 = vpop.f32.mrb[0].mxu0
      %v982 = vadd.f32 0.0, %v981
      %v983 = vpop.f32.mrb[0].mxu0
      %984 = vmatprep.mubr.f32.mxu0 0.0
      %985 = vmatmul.mubr.f32.gmra.mrb[0].mxu0 %v895
      %v986 = vpop.f32.mrb[0].mxu0
      %v987 = vadd.f32 0.0, %v986
      %v988 = vpop.f32.mrb[0].mxu0
      %989 = vmatprep.mubr.f32.mxu0 0.0
      %990 = vmatmul.mubr.f32.gmra.mrb[0].mxu0 %v898
      %v991 = vpop.f32.mrb[0].mxu0
      %v992 = vadd.f32 0.0, %v991
      %v993 = vpop.f32.mrb[0].mxu0
      %994 = vmatprep.mubr.f32.mxu0 0.0
      %995 = vmatmul.mubr.f32.gmra.mrb[0].mxu0 %v901
      %v996 = vpop.f32.mrb[0].mxu0
      %v997 = vadd.f32 0.0, %v996
      %v998 = vpop.f32.mrb[0].mxu0
      %999 = vmatprep.mubr.f32.mxu0 0.0
      %1000 = vmatmul.mubr.f32.gmra.mrb[0].mxu0 %v904
      %v1001 = vpop.f32.mrb[0].mxu0
      %v1002 = vadd.f32 0.0, %v1001
      %v1003 = vpop.f32.mrb[0].mxu0
      %1004 = vmatprep.mubr.f32.mxu0 0.0
      %1005 = vmatmul.mubr.f32.gmra.mrb[0].mxu0 %v907
      %v1006 = vpop.f32.mrb[0].mxu0
      %v1007 = vadd.f32 0.0, %v1006
      %v1008 = vpop.f32.mrb[0].mxu0
      %1009 = vmatprep.mubr.f32.mxu0 0.0
      %1010 = vmatmul.mubr.f32.gmra.mrb[0].mxu0 %v910
      %v1011 = vpop.f32.mrb[0].mxu0
      %v1012 = vadd.f32 0.0, %v1011
      %v1013 = vpop.f32.mrb[0].mxu0
      %1014 = vmatprep.mubr.f32.mxu0 0.0
      %1015 = vmatmul.mubr.f32.gmra.mrb[0].mxu0 %v913
      %v1016 = vpop.f32.mrb[0].mxu0
      %v1017 = vadd.f32 0.0, %v1016
      %v1018 = vpop.f32.mrb[0].mxu0
      %1019 = vdwg.mxu0
      %v1020 = vadd.f32 %v832, %v982
      %v1021 = vadd.f32 %v837, %v987
      %v1022 = vadd.f32 %v842, %v992
      %v1023 = vadd.f32 %v847, %v997
      %v1024 = vadd.f32 %v852, %v1002
      %v1025 = vadd.f32 %v857, %v1007
      %v1026 = vadd.f32 %v862, %v1012
      %v1027 = vadd.f32 %v867, %v1017
      %vm1028 = vcmask 523264
      %v1030 = vsel %vm1028, 1.0, 0
      %1032 = vmatprep.subr.mxu0 0.0
      %1033 = vmatpush1.msra.mxu0 %v1020
      %1034 = vmatprep.subr.mxu0 0.0
      %1035 = vmatpush1.msra.mxu0 %v1021
      %1036 = vmatprep.subr.mxu0 0.0
      %1037 = vmatpush1.msra.mxu0 %v1022
      %1038 = vmatprep.subr.mxu0 0.0
      %1039 = vmatpush1.msra.mxu0 %v1023
      %1040 = vmatprep.subr.mxu0 0.0
      %1041 = vmatpush1.msra.mxu0 %v1024
      %1042 = vmatprep.subr.mxu0 0.0
      %1043 = vmatpush1.msra.mxu0 %v1025
      %1044 = vmatprep.subr.mxu0 0.0
      %1045 = vmatpush1.msra.mxu0 %v1026
      %1046 = vmatprep.subr.mxu0 0.0
      %1047 = vmatpush1.msra.mxu0 %v1027
      %1048 = vmatprep.subr.mxu0 0.0
      %1049 = vmatpush1.msra.mxu0 0.0
      %1050 = vmatprep.subr.mxu0 0.0
      %1051 = vmatpush1.msra.mxu0 0.0
      %1052 = vmatprep.subr.mxu0 0.0
      %1053 = vmatpush1.msra.mxu0 0.0
      %1054 = vmatprep.subr.mxu0 0.0
      %1055 = vmatpush1.msra.mxu0 0.0
      %1056 = vmatprep.subr.mxu0 0.0
      %1057 = vmatpush1.msra.mxu0 0.0
      %1058 = vmatprep.subr.mxu0 0.0
      %1059 = vmatpush1.msra.mxu0 0.0
      %1060 = vmatprep.subr.mxu0 0.0
      %1061 = vmatpush1.msra.mxu0 0.0
      %1062 = vmatprep.subr.mxu0 0.0
      %1063 = vmatpush1.msra.mxu0 0.0
      %1064 = vmatprep.subr.mxu0 0.0
      %1065 = vmatpush1.msra.mxu0 0.0
      %1066 = vmatprep.subr.mxu0 0.0
      %1067 = vmatpush1.msra.mxu0 0.0
      %1068 = vmatprep.subr.mxu0 0.0
      %1069 = vmatpush1.msra.mxu0 0.0
      %1070 = vmatprep.subr.mxu0 0.0
      %1071 = vmatpush1.msra.mxu0 0.0
      %1072 = vmatprep.subr.mxu0 0.0
      %1073 = vmatpush1.msra.mxu0 0.0
      %1074 = vmatprep.subr.mxu0 0.0
      %1075 = vmatpush1.msra.mxu0 0.0
      %1076 = vmatprep.subr.mxu0 0.0
      %1077 = vmatpush1.msra.mxu0 0.0
      %1078 = vmatprep.subr.mxu0 0.0
      %1079 = vmatpush1.msra.mxu0 0.0
      %1080 = vmatprep.subr.mxu0 0.0
      %1081 = vmatpush1.msra.mxu0 0.0
      %1082 = vmatprep.subr.mxu0 0.0
      %1083 = vmatpush1.msra.mxu0 0.0
      %1084 = vmatprep.subr.mxu0 0.0
      %1085 = vmatpush1.msra.mxu0 0.0
      %1086 = vmatprep.subr.mxu0 0.0
      %1087 = vmatpush1.msra.mxu0 0.0
      %1088 = vmatprep.subr.mxu0 0.0
      %1089 = vmatpush1.msra.mxu0 0.0
      %1090 = vmatprep.subr.mxu0 0.0
      %1091 = vmatpush1.msra.mxu0 0.0
      %1092 = vmatprep.subr.mxu0 0.0
      %1093 = vmatpush1.msra.mxu0 0.0
      %1094 = vmatprep.subr.mxu0 0.0
      %1095 = vmatpush1.msra.mxu0 0.0
      %1096 = vmatprep.mubr.f32.mxu0 0.0
      %1097 = vmatmul.mubr.f32.gmra.mrb[0].mxu0 %v1030
      %v1098 = vpop.f32.mrb[0].mxu0
      %v1099 = vadd.f32 0.0, %v1098
      %v1100 = vpop.f32.mrb[0].mxu0
      %1101 = vdwg.mxu0
      %v1102 = vmul.f32 %v1020, %v1020
      %v1103 = vmul.f32 %v1021, %v1021
      %v1104 = vmul.f32 %v1022, %v1022
      %v1105 = vmul.f32 %v1023, %v1023
      %v1106 = vmul.f32 %v1024, %v1024
      %v1107 = vmul.f32 %v1025, %v1025
      %v1108 = vmul.f32 %v1026, %v1026
      %v1109 = vmul.f32 %v1027, %v1027
      %1110 = vmatprep.subr.mxu0 0.0
      %1111 = vmatpush1.msra.mxu0 %v1102
      %1112 = vmatprep.subr.mxu0 0.0
      %1113 = vmatpush1.msra.mxu0 %v1103
      %1114 = vmatprep.subr.mxu0 0.0
      %1115 = vmatpush1.msra.mxu0 %v1104
      %1116 = vmatprep.subr.mxu0 0.0
      %1117 = vmatpush1.msra.mxu0 %v1105
      %1118 = vmatprep.subr.mxu0 0.0
      %1119 = vmatpush1.msra.mxu0 %v1106
      %1120 = vmatprep.subr.mxu0 0.0
      %1121 = vmatpush1.msra.mxu0 %v1107
      %1122 = vmatprep.subr.mxu0 0.0
      %1123 = vmatpush1.msra.mxu0 %v1108
      %1124 = vmatprep.subr.mxu0 0.0
      %1125 = vmatpush1.msra.mxu0 %v1109
      %1126 = vmatprep.subr.mxu0 0.0
      %1127 = vmatpush1.msra.mxu0 0.0
      %1128 = vmatprep.subr.mxu0 0.0
      %1129 = vmatpush1.msra.mxu0 0.0
      %1130 = vmatprep.subr.mxu0 0.0
      %1131 = vmatpush1.msra.mxu0 0.0
      %1132 = vmatprep.subr.mxu0 0.0
      %1133 = vmatpush1.msra.mxu0 0.0
      %1134 = vmatprep.subr.mxu0 0.0
      %1135 = vmatpush1.msra.mxu0 0.0
      %1136 = vmatprep.subr.mxu0 0.0
      %1137 = vmatpush1.msra.mxu0 0.0
      %1138 = vmatprep.subr.mxu0 0.0
      %1139 = vmatpush1.msra.mxu0 0.0
      %1140 = vmatprep.subr.mxu0 0.0
      %1141 = vmatpush1.msra.mxu0 0.0
      %1142 = vmatprep.subr.mxu0 0.0
      %1143 = vmatpush1.msra.mxu0 0.0
      %1144 = vmatprep.subr.mxu0 0.0
      %1145 = vmatpush1.msra.mxu0 0.0
      %1146 = vmatprep.subr.mxu0 0.0
      %1147 = vmatpush1.msra.mxu0 0.0
      %1148 = vmatprep.subr.mxu0 0.0
      %1149 = vmatpush1.msra.mxu0 0.0
      %1150 = vmatprep.subr.mxu0 0.0
      %1151 = vmatpush1.msra.mxu0 0.0
      %1152 = vmatprep.subr.mxu0 0.0
      %1153 = vmatpush1.msra.mxu0 0.0
      %1154 = vmatprep.subr.mxu0 0.0
      %1155 = vmatpush1.msra.mxu0 0.0
      %1156 = vmatprep.subr.mxu0 0.0
      %1157 = vmatpush1.msra.mxu0 0.0
      %1158 = vmatprep.subr.mxu0 0.0
      %1159 = vmatpush1.msra.mxu0 0.0
      %1160 = vmatprep.subr.mxu0 0.0
      %1161 = vmatpush1.msra.mxu0 0.0
      %1162 = vmatprep.subr.mxu0 0.0
      %1163 = vmatpush1.msra.mxu0 0.0
      %1164 = vmatprep.subr.mxu0 0.0
      %1165 = vmatpush1.msra.mxu0 0.0
      %1166 = vmatprep.subr.mxu0 0.0
      %1167 = vmatpush1.msra.mxu0 0.0
      %1168 = vmatprep.subr.mxu0 0.0
      %1169 = vmatpush1.msra.mxu0 0.0
      %1170 = vmatprep.subr.mxu0 0.0
      %1171 = vmatpush1.msra.mxu0 0.0
      %1172 = vmatprep.subr.mxu0 0.0
      %1173 = vmatpush1.msra.mxu0 0.0
      %1174 = vmatprep.mubr.f32.mxu0 0.0
      %1175 = vmatmul.mubr.f32.gmra.mrb[0].mxu0 %v1030
      %v1176 = vpop.f32.mrb[0].mxu0
      %v1177 = vadd.f32 0.0, %v1176
      %v1178 = vpop.f32.mrb[0].mxu0
      %1179 = vdwg.mxu0
      %1181 = vrot.lane.b32.xlu0 %v1177, 32
      %v1182 = vpop.permute.xlu0 %1181
      %v1184 = vsel %vm515, %v1099, %v1182
      %vm1185 = vcmask 516096
      %1186 = vst.msk [vmem:[%s236] sm:$0x1] %vm1185, %v1184
      %1187 = vst.msk [vmem:[%s232] sm:$0xff] %vm515, %v1020
      %1188 = vst.msk [vmem:[%s232 + $0x8] sm:$0xff] %vm515, %v1021
      %1189 = vst.msk [vmem:[%s232 + $0x10] sm:$0xff] %vm515, %v1022
      %1190 = vst.msk [vmem:[%s232 + $0x18] sm:$0xff] %vm515, %v1023
      %1191 = vst.msk [vmem:[%s232 + $0x20] sm:$0xff] %vm515, %v1024
      %1192 = vst.msk [vmem:[%s232 + $0x28] sm:$0xff] %vm515, %v1025
      %1193 = vst.msk [vmem:[%s232 + $0x30] sm:$0xff] %vm515, %v1026
      %1194 = vst.msk [vmem:[%s232 + $0x38] sm:$0xff] %vm515, %v1027
      %s1195 = smul.u32 8, %s17
      %p1196 = scmp.lt.s32.totalorder %s1195, 15
      %s1197 = scalar_select %p1196, %s1195, 15
      %s1198 = smul.addr %s1197, 8
      %s1199 = scalar_lea.vmem %s4, %s1198
      %p1200 = scmp.lt.s32.totalorder %s17, 1
      %s1201 = scalar_select %p1200, %s17, 1
      %s1202 = scalar_lea.vmem %s5, %s1201
      // Predicated region
      $region37: #{bottleneck_forward.5} parent=35 // pred_check
        %p1203 = pneg %p124
      $region38: #{bottleneck_forward.5} parent=35 // pred_check_branch
        %1205 = sbr.rel (%p1203) target = $region40
      $region39: #{bottleneck_forward.5} parent=35 // pred_region
        %s1206 = smul.u32 8, %s17
      $region40: #{bottleneck_forward.5} parent=35 // pred_fallthru
        _
      // Predicated region
      $region41: #{bottleneck_forward.5} parent=35 // pred_check
        %p1207 = pneg %p150
      $region42: #{bottleneck_forward.5} parent=35 // pred_check_branch
        %1209 = sbr.rel (%p1207) target = $region44
      $region43: #{bottleneck_forward.5} parent=35 // pred_region
        _
      $region44: #{bottleneck_forward.5} parent=35 // pred_fallthru
        _
    $region36: #{bottleneck_forward.5} parent=5 // pred_fallthru
      _
    %p1210 = scmp.le.s32.totalorder 2, %s12
    // Predicated region
    $region45: #{bottleneck_forward.5} parent=5 // pred_check
      %p1211 = pneg %p1210
    $region46: #{bottleneck_forward.5} parent=5 // pred_check_branch
      %1213 = sbr.rel (%p1211) target = $region48
    $region47: #{bottleneck_forward.5} parent=5 // pred_region
      %s1214 = ssub.s32 %s12, 2
      // Predicated region
      $region49: #{bottleneck_forward.5} parent=47 // pred_check
        %p1215 = pneg %p130
      $region50: #{bottleneck_forward.5} parent=47 // pred_check_branch
        %1217 = sbr.rel (%p1215) target = $region52
      $region51: #{bottleneck_forward.5} parent=47 // pred_region
        %s1218 = smul.u32 8, %s18
        %p1219 = scmp.lt.s32.totalorder %s1218, 15
        %s1220 = scalar_select %p1219, %s1218, 15
        %s1221 = smul.addr %s1220, 8
        %s1222 = scalar_lea.vmem %s4, %s1221
      $region52: #{bottleneck_forward.5} parent=47 // pred_fallthru
        _
      // Predicated region
      $region53: #{bottleneck_forward.5} parent=47 // pred_check
        %p1223 = pneg %p156
      $region54: #{bottleneck_forward.5} parent=47 // pred_check_branch
        %1225 = sbr.rel (%p1223) target = $region56
      $region55: #{bottleneck_forward.5} parent=47 // pred_region
        %p1226 = scmp.lt.s32.totalorder %s18, 1
        %s1227 = scalar_select %p1226, %s18, 1
        %s1228 = scalar_lea.vmem %s5, %s1227
      $region56: #{bottleneck_forward.5} parent=47 // pred_fallthru
        _
    $region48: #{bottleneck_forward.5} parent=5 // pred_fallthru
      _
  $region6: #{bottleneck_forward.5} parent=0 // loop_footer
    %s16 = sadd.s32 1, %s12
  $region7: #{bottleneck_forward.5} parent=0 // loop_footer_branch
    %11 = sbr.rel target = $region3
  $region8: #{bottleneck_forward.5} parent=0 // loop_exit
    _

</llo_original>
